<compile_context>
chip_gen: v7x
topology: tpu7x:2x2x1
jax: 0.10.0
libtpu: 0.0.40
codegen_flags: <defaults>
</compile_context>

<pallas_src>
import functools

import jax
import jax.numpy as jnp
from jax.experimental import pallas as pl
from jax.experimental.pallas import tpu as pltpu


# Branch order used everywhere (stage-1 input, kernel size):
#   comb_iter_0_left (x_right, 5x5), comb_iter_0_right (x_left, 3x3),
#   comb_iter_1_left (x_left, 5x5),  comb_iter_1_right (x_left, 3x3),
#   comb_iter_4_left (x_right, 3x3)
_BRANCH_KS = (5, 3, 5, 3, 3)
_BRANCH_ON_RIGHT = (True, False, False, False, True)
_BRANCH_NAMES = ('b0l', 'b0r', 'b1l', 'b1r', 'b4l')


# ----------------------------------------------------------------------------
# Kernel
# ----------------------------------------------------------------------------
def _make_first_cell_kernel(H, W, nf):
    WN = W * nf

    def tree_sum(terms):
        """Pairwise (tree) sum -> log-depth dependency chain."""
        while len(terms) > 1:
            nxt = [terms[i] + terms[i + 1] for i in range(0, len(terms) - 1, 2)]
            if len(terms) % 2:
                nxt.append(terms[-1])
            terms = nxt
        return terms[0]

    def pad_plane(a, p):
        """Zero-pad an (H, W*nf) plane by p rows / p*(nf lanes) on each side."""
        zc = jnp.zeros((H, p * nf), jnp.float32)
        rows = jnp.concatenate([zc, a, zc], axis=1)
        zr = jnp.zeros((p, WN + 2 * p * nf), jnp.float32)
        return jnp.concatenate([zr, rows, zr], axis=0)

    def kernel(x_ref, inv_ref, w1_ref, b1_ref, wp1_ref, bp1_ref, wp2_ref, bp2_ref,
               *rest):
        dw1_refs = rest[0:5]       # stage-1 depthwise taps, (k*k, W*nf) each
        dw2_refs = rest[5:10]      # stage-2 depthwise taps
        o_ref = rest[10]           # (1, H, 6*W*nf)

        def dw_conv(a, dwt_ref, k):
            """Depthwise k x k conv, stride 1, 'same' zero padding, plane layout."""
            p = (k - 1) // 2
            ap = pad_plane(a, p)
            terms = []
            for ki in range(k):
                for kj in range(k):
                    tap = ap[ki:ki + H, kj * nf:kj * nf + WN]
                    t = ki * k + kj
                    terms.append(tap * dwt_ref[t:t + 1, :])
            return tree_sum(terms)

        def avgpool3(a):
            """3x3 avg pool, stride 1, pad 1, count_include_pad=False."""
            ap = pad_plane(a, 1)
            terms = [ap[ki:ki + H, kj * nf:kj * nf + WN]
                     for ki in range(3) for kj in range(3)]
            return tree_sum(terms) * inv_ref[...]

        # --- conv_1x1 + path_1/path_2 + final_path_bn: one block-diag matmul ----
        # input lanes: w*24 + [x channels (16) | parity-gathered x_prev channels (8)]
        # output lanes: [x_right plane (W*nf) | x_left plane (W*nf)]
        xin = jnp.maximum(x_ref[0], 0.0)
        xrl = jnp.dot(xin, w1_ref[...],
                      preferred_element_type=jnp.float32) + b1_ref[...]
        x_right = xrl[:, :WN]
        x_left = xrl[:, WN:]
        xr_relu = jnp.maximum(x_right, 0.0)     # BranchSeparables input ReLUs, shared
        xl_relu = jnp.maximum(x_left, 0.0)

        # --- stage 1: five depthwise convs + ONE fused pointwise matmul (+BN,+ReLU)
        d1 = [dw_conv(xr_relu if right else xl_relu, dw1_refs[i], _BRANCH_KS[i])
              for i, right in enumerate(_BRANCH_ON_RIGHT)]
        z1 = jnp.concatenate(d1, axis=1)                           # (H, 5*W*nf)
        z1 = jnp.dot(z1, wp1_ref[...],
                     preferred_element_type=jnp.float32) + bp1_ref[...]
        z1 = jnp.maximum(z1, 0.0)

        # --- stage 2: five depthwise convs + ONE fused pointwise matmul (+BN) ----
        d2 = [dw_conv(z1[:, i * WN:(i + 1) * WN], dw2_refs[i], _BRANCH_KS[i])
              for i in range(5)]
        z2 = jnp.concatenate(d2, axis=1)
        y = jnp.dot(z2, wp2_ref[...],
                    preferred_element_type=jnp.float32) + bp2_ref[...]
        br = [y[:, i * WN:(i + 1) * WN] for i in range(5)]

        # --- avg-pool branches (on the non-ReLU'd x_right / x_left) --------------
        pool_r = avgpool3(x_right)
        pool_l = avgpool3(x_left)

        # --- comb_iter adds + 6-way channel concat, one lane-dense store ---------
        out = jnp.concatenate(
            [x_left,                      # slot 0
             br[0] + br[1],               # comb_iter_0
             br[2] + br[3],               # comb_iter_1
             pool_r + x_left,             # comb_iter_2
             2.0 * pool_l,                # comb_iter_3 (left pool == right pool)
             br[4] + x_right],            # comb_iter_4
            axis=1)                       # (H, 6*W*nf) = (8, 384)
        o_ref[0] = out

    return kernel


# ----------------------------------------------------------------------------
# Parameters (deterministic synthetic init) + trace-time BN folding
# ----------------------------------------------------------------------------
def _fuse_bn(gamma, beta, mean, var, eps=1e-3):
    scale = gamma / jnp.sqrt(var + eps)
    bias = beta - mean * scale
    return scale, bias


def init_params(key, in_ch_left, out_ch_left, in_ch_right, out_ch_right):
    nf = out_ch_right
    kit = iter(jax.random.split(key, 128))      # 71 keys consumed; headroom

    def nrm(shape, s=0.2):
        return s * jax.random.normal(next(kit), shape, jnp.float32)

    def bn(c):
        gamma = 1.0 + 0.1 * jax.random.normal(next(kit), (c,), jnp.float32)
        beta = 0.1 * jax.random.normal(next(kit), (c,), jnp.float32)
        mean = 0.05 * jax.random.normal(next(kit), (c,), jnp.float32)
        var = 0.5 + jax.random.uniform(next(kit), (c,), jnp.float32)
        return _fuse_bn(gamma, beta, mean, var)

    def branch(k):
        s1, b1 = bn(nf)
        s2, b2 = bn(nf)
        return dict(dw1=nrm((k, k, nf)), pw1=nrm((nf, nf)), bn1_s=s1, bn1_b=b1,
                    dw2=nrm((k, k, nf)), pw2=nrm((nf, nf)), bn2_s=s2, bn2_b=b2)

    c1s, c1b = bn(nf)
    fs, fb = bn(2 * out_ch_left)
    return dict(
        conv1x1_w=nrm((in_ch_right, nf)), conv1x1_bn_s=c1s, conv1x1_bn_b=c1b,
        path1_w=nrm((in_ch_left, out_ch_left)),
        path2_w=nrm((in_ch_left, out_ch_left)),
        final_bn_s=fs, final_bn_b=fb,
        b0l=branch(5), b0r=branch(3), b1l=branch(5), b1r=branch(3), b4l=branch(3),
    )


def _prep_weights(params, in_ch_left, out_ch_left, in_ch_right, W):
    """Fold BN scales into 1x1 weights and build block-diag / lane-tiled arrays."""
    nf = params['conv1x1_w'].shape[1]
    cin_tot = in_ch_right + 2 * in_ch_left
    WN = W * nf

    # conv_1x1 (BN scale folded) and the two path convs + final_path_bn (block-diag).
    wr = params['conv1x1_w'] * params['conv1x1_bn_s'][None, :]          # (Cin_r, nf)
    s = params['final_bn_s']
    wl = jnp.zeros((2 * in_ch_left, nf), jnp.float32)
    wl = wl.at[:in_ch_left, :out_ch_left].set(params['path1_w'] * s[None, :out_ch_left])
    wl = wl.at[in_ch_left:, out_ch_left:].set(params['path2_w'] * s[None, out_ch_left:])

    # Fused first matmul: input lane w*cin_tot + ci  ->  output lanes
    # [x_right plane | x_left plane] in (H, W*nf) packing.
    w1 = jnp.zeros((W * cin_tot, 2 * WN), jnp.float32)
    for w in range(W):
        w1 = w1.at[w * cin_tot:w * cin_tot + in_ch_right,
                   w * nf:(w + 1) * nf].set(wr)
        w1 = w1.at[w * cin_tot + in_ch_right:(w + 1) * cin_tot,
                   WN + w * nf:WN + (w + 1) * nf].set(wl)
    b1 = jnp.concatenate([jnp.tile(params['conv1x1_bn_b'], W),
                          jnp.tile(params['final_bn_b'], W)]).reshape(1, 2 * WN)

    def stage_pw(stage):
        """Block-diagonal fused pointwise weight/bias for one branch stage."""
        wbd = jnp.zeros((5 * WN, 5 * WN), jnp.float32)
        biases = []
        for i, name in enumerate(_BRANCH_NAMES):
            p = params[name]
            pw = p[f'pw{stage}'] * p[f'bn{stage}_s'][None, :]
            for w in range(W):
                r = i * WN + w * nf
                wbd = wbd.at[r:r + nf, r:r + nf].set(pw)
            biases.append(jnp.tile(p[f'bn{stage}_b'], W))
        return wbd, jnp.concatenate(biases).reshape(1, 5 * WN)

    wp1, bp1 = stage_pw(1)
    wp2, bp2 = stage_pw(2)

    def dw_taps(dw):
        """(k,k,nf) depthwise weights -> (k*k, W*nf) lane-tiled tap vectors."""
        k = dw.shape[0]
        return jnp.tile(dw.reshape(k * k, nf), (1, W))

    dw1 = [dw_taps(params[n]['dw1']) for n in _BRANCH_NAMES]
    dw2 = [dw_taps(params[n]['dw2']) for n in _BRANCH_NAMES]
    return [w1, b1, wp1, bp1, wp2, bp2] + dw1 + dw2


# ----------------------------------------------------------------------------
# Forward wrapper
# ----------------------------------------------------------------------------
def first_cell_forward(x_nchw, x_prev_nchw, params):
    B, in_ch_right, H, W = x_nchw.shape
    in_ch_left = x_prev_nchw.shape[1]
    nf = params['conv1x1_w'].shape[1]
    out_ch_left = params['path1_w'].shape[1]
    assert 2 * out_ch_left == nf       # FirstCell invariant
    WN = W * nf
    cin_tot = in_ch_right + 2 * in_ch_left

    x = jnp.transpose(x_nchw, (0, 2, 3, 1)).astype(jnp.float32)          # NHWC
    xp = jnp.transpose(x_prev_nchw, (0, 2, 3, 1)).astype(jnp.float32)    # NHWC 2Hx2W
    # path_1: AvgPool2d(1, s=2) = even-parity subsample of relu(x_prev);
    # path_2: ZeroPad2d((0,1,0,1)) -> crop[1:,1:] -> AvgPool2d(1, s=2) = odd parity.
    # Pure gathers (ReLU commutes with them), channel-concatenated with x so the
    # kernel does conv_1x1 + both path convs + final_path_bn as ONE matmul.
    xp12 = jnp.concatenate([xp[:, ::2, ::2, :], xp[:, 1::2, 1::2, :]], axis=-1)
    x_cat = jnp.concatenate([x, xp12], axis=-1).reshape(B, H, W * cin_tot)

    # Reciprocal valid-tap count for the 3x3/pad-1 pools (count_include_pad=False),
    # broadcast over channel lanes (position-only, trace time).
    rc = 3.0 - (jnp.arange(H) == 0).astype(jnp.float32) \
             - (jnp.arange(H) == H - 1).astype(jnp.float32)
    cc = 3.0 - (jnp.arange(W) == 0).astype(jnp.float32) \
             - (jnp.arange(W) == W - 1).astype(jnp.float32)
    inv = jnp.repeat(1.0 / (rc[:, None] * cc[None, :]), nf, axis=1)      # (H, W*nf)

    weights = _prep_weights(params, in_ch_left, out_ch_left, in_ch_right, W)
    arrays = [x_cat, inv] + weights

    in_specs = [pl.BlockSpec((1, H, W * cin_tot), lambda b: (b, 0, 0))]
    in_specs += [pl.BlockSpec(a.shape, lambda b, nd=a.ndim: (0,) * nd)
                 for a in arrays[1:]]
    out_spec = pl.BlockSpec((1, H, 6 * WN), lambda b: (b, 0, 0))

    out = pl.pallas_call(
        _make_first_cell_kernel(H, W, nf),
        grid=(B,),
        in_specs=in_specs,
        out_specs=out_spec,
        out_shape=jax.ShapeDtypeStruct((B, H, 6 * WN), jnp.float32),
        compiler_params=pltpu.CompilerParams(
            dimension_semantics=("parallel",)),
    )(*arrays)

    # (B, H, 6*W*nf) with lane = slot*W*nf + w*nf + c  ->  NCHW (B, 6*nf, H, W)
    out = out.reshape(B, H, 6, W, nf)
    return jnp.transpose(out, (0, 2, 4, 1, 3)).reshape(B, 6 * nf, H, W)


# ----------------------------------------------------------------------------
# Pure-JAX reference (same fused-BN parameters) for a sanity check
# ----------------------------------------------------------------------------
def _reference_forward(x_nchw, xp_nchw, params):
    x = x_nchw.astype(jnp.float32)
    xp = xp_nchw.astype(jnp.float32)

    def bn(y, s, b):
        return y * s[None, :, None, None] + b[None, :, None, None]

    def conv1x1(y, w):
        return jnp.einsum('bchw,cd->bdhw', y, w)

    def dwconv(y, dw):
        k = dw.shape[0]
        p = (k - 1) // 2
        Hy, Wy = y.shape[2], y.shape[3]
        yp = jnp.pad(y, ((0, 0), (0, 0), (p, p), (p, p)))
        out = jnp.zeros_like(y)
        for ki in range(k):
            for kj in range(k):
                out = out + yp[:, :, ki:ki + Hy, kj:kj + Wy] \
                    * dw[ki, kj, :][None, :, None, None]
        return out

    def avgpool3(y):
        Hy, Wy = y.shape[2], y.shape[3]
        yp = jnp.pad(y, ((0, 0), (0, 0), (1, 1), (1, 1)))
        s = jnp.zeros_like(y)
        for ki in range(3):
            for kj in range(3):
                s = s + yp[:, :, ki:ki + Hy, kj:kj + Wy]
        rc = 3.0 - (jnp.arange(Hy) == 0) - (jnp.arange(Hy) == Hy - 1)
        cc = 3.0 - (jnp.arange(Wy) == 0) - (jnp.arange(Wy) == Wy - 1)
        return s / (rc[:, None] * cc[None, :])[None, None, :, :]

    def branch(y, p):
        y = jnp.maximum(y, 0.0)
        y = bn(conv1x1(dwconv(y, p['dw1']), p['pw1']), p['bn1_s'], p['bn1_b'])
        y = jnp.maximum(y, 0.0)
        y = bn(conv1x1(dwconv(y, p['dw2']), p['pw2']), p['bn2_s'], p['bn2_b'])
        return y

    x_right = bn(conv1x1(jnp.maximum(x, 0.0), params['conv1x1_w']),
                 params['conv1x1_bn_s'], params['conv1x1_bn_b'])
    xr = jnp.maximum(xp, 0.0)
    p1 = conv1x1(xr[:, :, ::2, ::2], params['path1_w'])
    p2 = conv1x1(xr[:, :, 1::2, 1::2], params['path2_w'])
    x_left = bn(jnp.concatenate([p1, p2], axis=1),
                params['final_bn_s'], params['final_bn_b'])

    ci0 = branch(x_right, params['b0l']) + branch(x_left, params['b0r'])
    ci1 = branch(x_left, params['b1l']) + branch(x_left, params['b1r'])
    ci2 = avgpool3(x_right) + x_left
    ci3 = 2.0 * avgpool3(x_left)
    ci4 = branch(x_right, params['b4l']) + x_right
    return jnp.concatenate([x_left, ci0, ci1, ci2, ci3, ci4], axis=1)


# ----------------------------------------------------------------------------
if __name__ == "__main__":
    key = jax.random.PRNGKey(0)
    k1, k2, k3 = jax.random.split(key, 3)

    # NASNet FirstCell hookup: x is the current (low-res) feature map,
    # x_prev the previous one at 2x spatial resolution.
    in_ch_left, out_ch_left = 4, 4            # x_prev channels / per-path 1x1 output
    out_ch_right = 2 * out_ch_left            # = 8
    in_ch_right = 2 * out_ch_right            # = 16
    B, H, W = 2, 8, 8

    x = jax.random.normal(k1, (B, in_ch_right, H, W), jnp.float32)
    x_prev = jax.random.normal(k2, (B, in_ch_left, 2 * H, 2 * W), jnp.float32)
    params = init_params(k3, in_ch_left, out_ch_left, in_ch_right, out_ch_right)

    fwd = jax.jit(functools.partial(first_cell_forward, params=params))
    out = fwd(x, x_prev)
    jax.block_until_ready(out)

    assert out.shape == (B, 6 * out_ch_right, H, W), out.shape
    assert out.dtype == jnp.float32

    ref = jax.jit(functools.partial(_reference_forward, params=params))(x, x_prev)
    jax.block_until_ready(ref)
    err = float(jnp.max(jnp.abs(out - ref)) / (jnp.max(jnp.abs(ref)) + 1e-6))
    assert err < 2e-2, f"mismatch vs pure-JAX reference: rel err {err}"

    print("KERNEL_OK")
</pallas_src>

<mosaic_0001>
module attributes {stable_mosaic.version = 11 : i64} {
  func.func @kernel(%arg0: i32, %arg1: memref<1x8x192xf32, #tpu.memory_space<vmem>>, %arg2: memref<8x64xf32, #tpu.memory_space<vmem>>, %arg3: memref<192x128xf32, #tpu.memory_space<vmem>>, %arg4: memref<1x128xf32, #tpu.memory_space<vmem>>, %arg5: memref<320x320xf32, #tpu.memory_space<vmem>>, %arg6: memref<1x320xf32, #tpu.memory_space<vmem>>, %arg7: memref<320x320xf32, #tpu.memory_space<vmem>>, %arg8: memref<1x320xf32, #tpu.memory_space<vmem>>, %arg9: memref<25x64xf32, #tpu.memory_space<vmem>>, %arg10: memref<9x64xf32, #tpu.memory_space<vmem>>, %arg11: memref<25x64xf32, #tpu.memory_space<vmem>>, %arg12: memref<9x64xf32, #tpu.memory_space<vmem>>, %arg13: memref<9x64xf32, #tpu.memory_space<vmem>>, %arg14: memref<25x64xf32, #tpu.memory_space<vmem>>, %arg15: memref<9x64xf32, #tpu.memory_space<vmem>>, %arg16: memref<25x64xf32, #tpu.memory_space<vmem>>, %arg17: memref<9x64xf32, #tpu.memory_space<vmem>>, %arg18: memref<9x64xf32, #tpu.memory_space<vmem>>, %arg19: memref<1x8x384xf32, #tpu.memory_space<vmem>>) attributes {dimension_semantics = [#tpu.dimension_semantics<parallel>], iteration_bounds = array<i64: 2>, scalar_prefetch = 0 : i64, scratch_operands = 0 : i64, tpu.core_type = #tpu.core_type<tc>, window_params = [{transform_indices = @transform_0, window_bounds = array<i64: 1, 8, 192>}, {pipeline_mode = #tpu.pipeline_mode<synchronous>, transform_indices = @transform_1, window_bounds = array<i64: 8, 64>}, {pipeline_mode = #tpu.pipeline_mode<synchronous>, transform_indices = @transform_2, window_bounds = array<i64: 192, 128>}, {pipeline_mode = #tpu.pipeline_mode<synchronous>, transform_indices = @transform_3, window_bounds = array<i64: 1, 128>}, {pipeline_mode = #tpu.pipeline_mode<synchronous>, transform_indices = @transform_4, window_bounds = array<i64: 320, 320>}, {pipeline_mode = #tpu.pipeline_mode<synchronous>, transform_indices = @transform_5, window_bounds = array<i64: 1, 320>}, {pipeline_mode = #tpu.pipeline_mode<synchronous>, transform_indices = @transform_6, window_bounds = array<i64: 320, 320>}, {pipeline_mode = #tpu.pipeline_mode<synchronous>, transform_indices = @transform_7, window_bounds = array<i64: 1, 320>}, {pipeline_mode = #tpu.pipeline_mode<synchronous>, transform_indices = @transform_8, window_bounds = array<i64: 25, 64>}, {pipeline_mode = #tpu.pipeline_mode<synchronous>, transform_indices = @transform_9, window_bounds = array<i64: 9, 64>}, {pipeline_mode = #tpu.pipeline_mode<synchronous>, transform_indices = @transform_10, window_bounds = array<i64: 25, 64>}, {pipeline_mode = #tpu.pipeline_mode<synchronous>, transform_indices = @transform_11, window_bounds = array<i64: 9, 64>}, {pipeline_mode = #tpu.pipeline_mode<synchronous>, transform_indices = @transform_12, window_bounds = array<i64: 9, 64>}, {pipeline_mode = #tpu.pipeline_mode<synchronous>, transform_indices = @transform_13, window_bounds = array<i64: 25, 64>}, {pipeline_mode = #tpu.pipeline_mode<synchronous>, transform_indices = @transform_14, window_bounds = array<i64: 9, 64>}, {pipeline_mode = #tpu.pipeline_mode<synchronous>, transform_indices = @transform_15, window_bounds = array<i64: 25, 64>}, {pipeline_mode = #tpu.pipeline_mode<synchronous>, transform_indices = @transform_16, window_bounds = array<i64: 9, 64>}, {pipeline_mode = #tpu.pipeline_mode<synchronous>, transform_indices = @transform_17, window_bounds = array<i64: 9, 64>}, {transform_indices = @transform_18, window_bounds = array<i64: 1, 8, 384>}]} {
    %c0 = arith.constant 0 : index
    %c0_0 = arith.constant 0 : index
    %c0_1 = arith.constant 0 : index
    %0 = vector.load %arg1[%c0, %c0_0, %c0_1] : memref<1x8x192xf32, #tpu.memory_space<vmem>>, vector<1x8x192xf32>
    %1 = vector.shape_cast %0 : vector<1x8x192xf32> to vector<8x192xf32>
    %cst = arith.constant 0.000000e+00 : f32
    %2 = vector.broadcast %cst : f32 to vector<8x192xf32>
    %3 = arith.maximumf %1, %2 : vector<8x192xf32>
    %c0_2 = arith.constant 0 : index
    %c0_3 = arith.constant 0 : index
    %4 = vector.load %arg3[%c0_2, %c0_3] : memref<192x128xf32, #tpu.memory_space<vmem>>, vector<192x128xf32>
    %cst_4 = arith.constant dense<0.000000e+00> : vector<8x128xf32>
    %5 = tpu.matmul %3, %4, %cst_4 {dimension_numbers = #tpu.dot_dimension_numbers<[1], [0], [0], [1], [0, 0, 1, 1], [], []>} : vector<8x192xf32>, vector<192x128xf32>, vector<8x128xf32> -> vector<8x128xf32>
    %c0_5 = arith.constant 0 : index
    %c0_6 = arith.constant 0 : index
    %6 = vector.load %arg4[%c0_5, %c0_6] : memref<1x128xf32, #tpu.memory_space<vmem>>, vector<1x128xf32>
    %7 = vector.broadcast %6 : vector<1x128xf32> to vector<8x128xf32>
    %8 = arith.addf %5, %7 : vector<8x128xf32>
    %9 = vector.extract_strided_slice %8 {offsets = [0, 0], sizes = [8, 64], strides = [1, 1]} : vector<8x128xf32> to vector<8x64xf32>
    %10 = vector.extract_strided_slice %8 {offsets = [0, 64], sizes = [8, 64], strides = [1, 1]} : vector<8x128xf32> to vector<8x64xf32>
    %cst_7 = arith.constant 0.000000e+00 : f32
    %11 = vector.broadcast %cst_7 : f32 to vector<8x64xf32>
    %12 = arith.maximumf %9, %11 : vector<8x64xf32>
    %cst_8 = arith.constant 0.000000e+00 : f32
    %13 = vector.broadcast %cst_8 : f32 to vector<8x64xf32>
    %14 = arith.maximumf %10, %13 : vector<8x64xf32>
    %cst_9 = arith.constant 0.000000e+00 : f32
    %15 = vector.broadcast %cst_9 : f32 to vector<8x16xf32>
    %16 = tpu.concatenate %15, %12, %15 in 1 : vector<8x16xf32>, vector<8x64xf32>, vector<8x16xf32> -> vector<8x96xf32>
    %cst_10 = arith.constant 0.000000e+00 : f32
    %17 = vector.broadcast %cst_10 : f32 to vector<2x96xf32>
    %18 = tpu.concatenate %17, %16, %17 in 0 : vector<2x96xf32>, vector<8x96xf32>, vector<2x96xf32> -> vector<12x96xf32>
    %19 = vector.extract_strided_slice %18 {offsets = [0, 0], sizes = [8, 64], strides = [1, 1]} : vector<12x96xf32> to vector<8x64xf32>
    %c0_11 = arith.constant 0 : index
    %c0_12 = arith.constant 0 : index
    %20 = vector.load %arg9[%c0_11, %c0_12] : memref<25x64xf32, #tpu.memory_space<vmem>>, vector<1x64xf32>
    %21 = vector.broadcast %20 : vector<1x64xf32> to vector<8x64xf32>
    %22 = arith.mulf %19, %21 : vector<8x64xf32>
    %23 = vector.extract_strided_slice %18 {offsets = [0, 8], sizes = [8, 64], strides = [1, 1]} : vector<12x96xf32> to vector<8x64xf32>
    %c1 = arith.constant 1 : index
    %c0_13 = arith.constant 0 : index
    %24 = vector.load %arg9[%c1, %c0_13] : memref<25x64xf32, #tpu.memory_space<vmem>>, vector<1x64xf32>
    %25 = vector.broadcast %24 : vector<1x64xf32> to vector<8x64xf32>
    %26 = arith.mulf %23, %25 : vector<8x64xf32>
    %27 = vector.extract_strided_slice %18 {offsets = [0, 16], sizes = [8, 64], strides = [1, 1]} : vector<12x96xf32> to vector<8x64xf32>
    %c2 = arith.constant 2 : index
    %c0_14 = arith.constant 0 : index
    %28 = vector.load %arg9[%c2, %c0_14] : memref<25x64xf32, #tpu.memory_space<vmem>>, vector<1x64xf32>
    %29 = vector.broadcast %28 : vector<1x64xf32> to vector<8x64xf32>
    %30 = arith.mulf %27, %29 : vector<8x64xf32>
    %31 = vector.extract_strided_slice %18 {offsets = [0, 24], sizes = [8, 64], strides = [1, 1]} : vector<12x96xf32> to vector<8x64xf32>
    %c3 = arith.constant 3 : index
    %c0_15 = arith.constant 0 : index
    %32 = vector.load %arg9[%c3, %c0_15] : memref<25x64xf32, #tpu.memory_space<vmem>>, vector<1x64xf32>
    %33 = vector.broadcast %32 : vector<1x64xf32> to vector<8x64xf32>
    %34 = arith.mulf %31, %33 : vector<8x64xf32>
    %35 = vector.extract_strided_slice %18 {offsets = [0, 32], sizes = [8, 64], strides = [1, 1]} : vector<12x96xf32> to vector<8x64xf32>
    %c4 = arith.constant 4 : index
    %c0_16 = arith.constant 0 : index
    %36 = vector.load %arg9[%c4, %c0_16] : memref<25x64xf32, #tpu.memory_space<vmem>>, vector<1x64xf32>
    %37 = vector.broadcast %36 : vector<1x64xf32> to vector<8x64xf32>
    %38 = arith.mulf %35, %37 : vector<8x64xf32>
    %39 = vector.extract_strided_slice %18 {offsets = [1, 0], sizes = [8, 64], strides = [1, 1]} : vector<12x96xf32> to vector<8x64xf32>
    %c5 = arith.constant 5 : index
    %c0_17 = arith.constant 0 : index
    %40 = vector.load %arg9[%c5, %c0_17] : memref<25x64xf32, #tpu.memory_space<vmem>>, vector<1x64xf32>
    %41 = vector.broadcast %40 : vector<1x64xf32> to vector<8x64xf32>
    %42 = arith.mulf %39, %41 : vector<8x64xf32>
    %43 = vector.extract_strided_slice %18 {offsets = [1, 8], sizes = [8, 64], strides = [1, 1]} : vector<12x96xf32> to vector<8x64xf32>
    %c6 = arith.constant 6 : index
    %c0_18 = arith.constant 0 : index
    %44 = vector.load %arg9[%c6, %c0_18] : memref<25x64xf32, #tpu.memory_space<vmem>>, vector<1x64xf32>
    %45 = vector.broadcast %44 : vector<1x64xf32> to vector<8x64xf32>
    %46 = arith.mulf %43, %45 : vector<8x64xf32>
    %47 = vector.extract_strided_slice %18 {offsets = [1, 16], sizes = [8, 64], strides = [1, 1]} : vector<12x96xf32> to vector<8x64xf32>
    %c7 = arith.constant 7 : index
    %c0_19 = arith.constant 0 : index
    %48 = vector.load %arg9[%c7, %c0_19] : memref<25x64xf32, #tpu.memory_space<vmem>>, vector<1x64xf32>
    %49 = vector.broadcast %48 : vector<1x64xf32> to vector<8x64xf32>
    %50 = arith.mulf %47, %49 : vector<8x64xf32>
    %51 = vector.extract_strided_slice %18 {offsets = [1, 24], sizes = [8, 64], strides = [1, 1]} : vector<12x96xf32> to vector<8x64xf32>
    %c8 = arith.constant 8 : index
    %c0_20 = arith.constant 0 : index
    %52 = vector.load %arg9[%c8, %c0_20] : memref<25x64xf32, #tpu.memory_space<vmem>>, vector<1x64xf32>
    %53 = vector.broadcast %52 : vector<1x64xf32> to vector<8x64xf32>
    %54 = arith.mulf %51, %53 : vector<8x64xf32>
    %55 = vector.extract_strided_slice %18 {offsets = [1, 32], sizes = [8, 64], strides = [1, 1]} : vector<12x96xf32> to vector<8x64xf32>
    %c9 = arith.constant 9 : index
    %c0_21 = arith.constant 0 : index
    %56 = vector.load %arg9[%c9, %c0_21] : memref<25x64xf32, #tpu.memory_space<vmem>>, vector<1x64xf32>
    %57 = vector.broadcast %56 : vector<1x64xf32> to vector<8x64xf32>
    %58 = arith.mulf %55, %57 : vector<8x64xf32>
    %59 = vector.extract_strided_slice %18 {offsets = [2, 0], sizes = [8, 64], strides = [1, 1]} : vector<12x96xf32> to vector<8x64xf32>
    %c10 = arith.constant 10 : index
    %c0_22 = arith.constant 0 : index
    %60 = vector.load %arg9[%c10, %c0_22] : memref<25x64xf32, #tpu.memory_space<vmem>>, vector<1x64xf32>
    %61 = vector.broadcast %60 : vector<1x64xf32> to vector<8x64xf32>
    %62 = arith.mulf %59, %61 : vector<8x64xf32>
    %63 = vector.extract_strided_slice %18 {offsets = [2, 8], sizes = [8, 64], strides = [1, 1]} : vector<12x96xf32> to vector<8x64xf32>
    %c11 = arith.constant 11 : index
    %c0_23 = arith.constant 0 : index
    %64 = vector.load %arg9[%c11, %c0_23] : memref<25x64xf32, #tpu.memory_space<vmem>>, vector<1x64xf32>
    %65 = vector.broadcast %64 : vector<1x64xf32> to vector<8x64xf32>
    %66 = arith.mulf %63, %65 : vector<8x64xf32>
    %67 = vector.extract_strided_slice %18 {offsets = [2, 16], sizes = [8, 64], strides = [1, 1]} : vector<12x96xf32> to vector<8x64xf32>
    %c12 = arith.constant 12 : index
    %c0_24 = arith.constant 0 : index
    %68 = vector.load %arg9[%c12, %c0_24] : memref<25x64xf32, #tpu.memory_space<vmem>>, vector<1x64xf32>
    %69 = vector.broadcast %68 : vector<1x64xf32> to vector<8x64xf32>
    %70 = arith.mulf %67, %69 : vector<8x64xf32>
    %71 = vector.extract_strided_slice %18 {offsets = [2, 24], sizes = [8, 64], strides = [1, 1]} : vector<12x96xf32> to vector<8x64xf32>
    %c13 = arith.constant 13 : index
    %c0_25 = arith.constant 0 : index
    %72 = vector.load %arg9[%c13, %c0_25] : memref<25x64xf32, #tpu.memory_space<vmem>>, vector<1x64xf32>
    %73 = vector.broadcast %72 : vector<1x64xf32> to vector<8x64xf32>
    %74 = arith.mulf %71, %73 : vector<8x64xf32>
    %75 = vector.extract_strided_slice %18 {offsets = [2, 32], sizes = [8, 64], strides = [1, 1]} : vector<12x96xf32> to vector<8x64xf32>
    %c14 = arith.constant 14 : index
    %c0_26 = arith.constant 0 : index
    %76 = vector.load %arg9[%c14, %c0_26] : memref<25x64xf32, #tpu.memory_space<vmem>>, vector<1x64xf32>
    %77 = vector.broadcast %76 : vector<1x64xf32> to vector<8x64xf32>
    %78 = arith.mulf %75, %77 : vector<8x64xf32>
    %79 = vector.extract_strided_slice %18 {offsets = [3, 0], sizes = [8, 64], strides = [1, 1]} : vector<12x96xf32> to vector<8x64xf32>
    %c15 = arith.constant 15 : index
    %c0_27 = arith.constant 0 : index
    %80 = vector.load %arg9[%c15, %c0_27] : memref<25x64xf32, #tpu.memory_space<vmem>>, vector<1x64xf32>
    %81 = vector.broadcast %80 : vector<1x64xf32> to vector<8x64xf32>
    %82 = arith.mulf %79, %81 : vector<8x64xf32>
    %83 = vector.extract_strided_slice %18 {offsets = [3, 8], sizes = [8, 64], strides = [1, 1]} : vector<12x96xf32> to vector<8x64xf32>
    %c16 = arith.constant 16 : index
    %c0_28 = arith.constant 0 : index
    %84 = vector.load %arg9[%c16, %c0_28] : memref<25x64xf32, #tpu.memory_space<vmem>>, vector<1x64xf32>
    %85 = vector.broadcast %84 : vector<1x64xf32> to vector<8x64xf32>
    %86 = arith.mulf %83, %85 : vector<8x64xf32>
    %87 = vector.extract_strided_slice %18 {offsets = [3, 16], sizes = [8, 64], strides = [1, 1]} : vector<12x96xf32> to vector<8x64xf32>
    %c17 = arith.constant 17 : index
    %c0_29 = arith.constant 0 : index
    %88 = vector.load %arg9[%c17, %c0_29] : memref<25x64xf32, #tpu.memory_space<vmem>>, vector<1x64xf32>
    %89 = vector.broadcast %88 : vector<1x64xf32> to vector<8x64xf32>
    %90 = arith.mulf %87, %89 : vector<8x64xf32>
    %91 = vector.extract_strided_slice %18 {offsets = [3, 24], sizes = [8, 64], strides = [1, 1]} : vector<12x96xf32> to vector<8x64xf32>
    %c18 = arith.constant 18 : index
    %c0_30 = arith.constant 0 : index
    %92 = vector.load %arg9[%c18, %c0_30] : memref<25x64xf32, #tpu.memory_space<vmem>>, vector<1x64xf32>
    %93 = vector.broadcast %92 : vector<1x64xf32> to vector<8x64xf32>
    %94 = arith.mulf %91, %93 : vector<8x64xf32>
    %95 = vector.extract_strided_slice %18 {offsets = [3, 32], sizes = [8, 64], strides = [1, 1]} : vector<12x96xf32> to vector<8x64xf32>
    %c19 = arith.constant 19 : index
    %c0_31 = arith.constant 0 : index
    %96 = vector.load %arg9[%c19, %c0_31] : memref<25x64xf32, #tpu.memory_space<vmem>>, vector<1x64xf32>
    %97 = vector.broadcast %96 : vector<1x64xf32> to vector<8x64xf32>
    %98 = arith.mulf %95, %97 : vector<8x64xf32>
    %99 = vector.extract_strided_slice %18 {offsets = [4, 0], sizes = [8, 64], strides = [1, 1]} : vector<12x96xf32> to vector<8x64xf32>
    %c20 = arith.constant 20 : index
    %c0_32 = arith.constant 0 : index
    %100 = vector.load %arg9[%c20, %c0_32] : memref<25x64xf32, #tpu.memory_space<vmem>>, vector<1x64xf32>
    %101 = vector.broadcast %100 : vector<1x64xf32> to vector<8x64xf32>
    %102 = arith.mulf %99, %101 : vector<8x64xf32>
    %103 = vector.extract_strided_slice %18 {offsets = [4, 8], sizes = [8, 64], strides = [1, 1]} : vector<12x96xf32> to vector<8x64xf32>
    %c21 = arith.constant 21 : index
    %c0_33 = arith.constant 0 : index
    %104 = vector.load %arg9[%c21, %c0_33] : memref<25x64xf32, #tpu.memory_space<vmem>>, vector<1x64xf32>
    %105 = vector.broadcast %104 : vector<1x64xf32> to vector<8x64xf32>
    %106 = arith.mulf %103, %105 : vector<8x64xf32>
    %107 = vector.extract_strided_slice %18 {offsets = [4, 16], sizes = [8, 64], strides = [1, 1]} : vector<12x96xf32> to vector<8x64xf32>
    %c22 = arith.constant 22 : index
    %c0_34 = arith.constant 0 : index
    %108 = vector.load %arg9[%c22, %c0_34] : memref<25x64xf32, #tpu.memory_space<vmem>>, vector<1x64xf32>
    %109 = vector.broadcast %108 : vector<1x64xf32> to vector<8x64xf32>
    %110 = arith.mulf %107, %109 : vector<8x64xf32>
    %111 = vector.extract_strided_slice %18 {offsets = [4, 24], sizes = [8, 64], strides = [1, 1]} : vector<12x96xf32> to vector<8x64xf32>
    %c23 = arith.constant 23 : index
    %c0_35 = arith.constant 0 : index
    %112 = vector.load %arg9[%c23, %c0_35] : memref<25x64xf32, #tpu.memory_space<vmem>>, vector<1x64xf32>
    %113 = vector.broadcast %112 : vector<1x64xf32> to vector<8x64xf32>
    %114 = arith.mulf %111, %113 : vector<8x64xf32>
    %115 = vector.extract_strided_slice %18 {offsets = [4, 32], sizes = [8, 64], strides = [1, 1]} : vector<12x96xf32> to vector<8x64xf32>
    %c24 = arith.constant 24 : index
    %c0_36 = arith.constant 0 : index
    %116 = vector.load %arg9[%c24, %c0_36] : memref<25x64xf32, #tpu.memory_space<vmem>>, vector<1x64xf32>
    %117 = vector.broadcast %116 : vector<1x64xf32> to vector<8x64xf32>
    %118 = arith.mulf %115, %117 : vector<8x64xf32>
    %119 = arith.addf %22, %26 : vector<8x64xf32>
    %120 = arith.addf %30, %34 : vector<8x64xf32>
    %121 = arith.addf %38, %42 : vector<8x64xf32>
    %122 = arith.addf %46, %50 : vector<8x64xf32>
    %123 = arith.addf %54, %58 : vector<8x64xf32>
    %124 = arith.addf %62, %66 : vector<8x64xf32>
    %125 = arith.addf %70, %74 : vector<8x64xf32>
    %126 = arith.addf %78, %82 : vector<8x64xf32>
    %127 = arith.addf %86, %90 : vector<8x64xf32>
    %128 = arith.addf %94, %98 : vector<8x64xf32>
    %129 = arith.addf %102, %106 : vector<8x64xf32>
    %130 = arith.addf %110, %114 : vector<8x64xf32>
    %131 = arith.addf %119, %120 : vector<8x64xf32>
    %132 = arith.addf %121, %122 : vector<8x64xf32>
    %133 = arith.addf %123, %124 : vector<8x64xf32>
    %134 = arith.addf %125, %126 : vector<8x64xf32>
    %135 = arith.addf %127, %128 : vector<8x64xf32>
    %136 = arith.addf %129, %130 : vector<8x64xf32>
    %137 = arith.addf %131, %132 : vector<8x64xf32>
    %138 = arith.addf %133, %134 : vector<8x64xf32>
    %139 = arith.addf %135, %136 : vector<8x64xf32>
    %140 = arith.addf %137, %138 : vector<8x64xf32>
    %141 = arith.addf %139, %118 : vector<8x64xf32>
    %142 = arith.addf %140, %141 : vector<8x64xf32>
    %cst_37 = arith.constant 0.000000e+00 : f32
    %143 = vector.broadcast %cst_37 : f32 to vector<8x8xf32>
    %144 = tpu.concatenate %143, %14, %143 in 1 : vector<8x8xf32>, vector<8x64xf32>, vector<8x8xf32> -> vector<8x80xf32>
    %cst_38 = arith.constant 0.000000e+00 : f32
    %145 = vector.broadcast %cst_38 : f32 to vector<1x80xf32>
    %146 = tpu.concatenate %145, %144, %145 in 0 : vector<1x80xf32>, vector<8x80xf32>, vector<1x80xf32> -> vector<10x80xf32>
    %147 = vector.extract_strided_slice %146 {offsets = [0, 0], sizes = [8, 64], strides = [1, 1]} : vector<10x80xf32> to vector<8x64xf32>
    %c0_39 = arith.constant 0 : index
    %c0_40 = arith.constant 0 : index
    %148 = vector.load %arg10[%c0_39, %c0_40] : memref<9x64xf32, #tpu.memory_space<vmem>>, vector<1x64xf32>
    %149 = vector.broadcast %148 : vector<1x64xf32> to vector<8x64xf32>
    %150 = arith.mulf %147, %149 : vector<8x64xf32>
    %151 = vector.extract_strided_slice %146 {offsets = [0, 8], sizes = [8, 64], strides = [1, 1]} : vector<10x80xf32> to vector<8x64xf32>
    %c1_41 = arith.constant 1 : index
    %c0_42 = arith.constant 0 : index
    %152 = vector.load %arg10[%c1_41, %c0_42] : memref<9x64xf32, #tpu.memory_space<vmem>>, vector<1x64xf32>
    %153 = vector.broadcast %152 : vector<1x64xf32> to vector<8x64xf32>
    %154 = arith.mulf %151, %153 : vector<8x64xf32>
    %155 = vector.extract_strided_slice %146 {offsets = [0, 16], sizes = [8, 64], strides = [1, 1]} : vector<10x80xf32> to vector<8x64xf32>
    %c2_43 = arith.constant 2 : index
    %c0_44 = arith.constant 0 : index
    %156 = vector.load %arg10[%c2_43, %c0_44] : memref<9x64xf32, #tpu.memory_space<vmem>>, vector<1x64xf32>
    %157 = vector.broadcast %156 : vector<1x64xf32> to vector<8x64xf32>
    %158 = arith.mulf %155, %157 : vector<8x64xf32>
    %159 = vector.extract_strided_slice %146 {offsets = [1, 0], sizes = [8, 64], strides = [1, 1]} : vector<10x80xf32> to vector<8x64xf32>
    %c3_45 = arith.constant 3 : index
    %c0_46 = arith.constant 0 : index
    %160 = vector.load %arg10[%c3_45, %c0_46] : memref<9x64xf32, #tpu.memory_space<vmem>>, vector<1x64xf32>
    %161 = vector.broadcast %160 : vector<1x64xf32> to vector<8x64xf32>
    %162 = arith.mulf %159, %161 : vector<8x64xf32>
    %163 = vector.extract_strided_slice %146 {offsets = [1, 8], sizes = [8, 64], strides = [1, 1]} : vector<10x80xf32> to vector<8x64xf32>
    %c4_47 = arith.constant 4 : index
    %c0_48 = arith.constant 0 : index
    %164 = vector.load %arg10[%c4_47, %c0_48] : memref<9x64xf32, #tpu.memory_space<vmem>>, vector<1x64xf32>
    %165 = vector.broadcast %164 : vector<1x64xf32> to vector<8x64xf32>
    %166 = arith.mulf %163, %165 : vector<8x64xf32>
    %167 = vector.extract_strided_slice %146 {offsets = [1, 16], sizes = [8, 64], strides = [1, 1]} : vector<10x80xf32> to vector<8x64xf32>
    %c5_49 = arith.constant 5 : index
    %c0_50 = arith.constant 0 : index
    %168 = vector.load %arg10[%c5_49, %c0_50] : memref<9x64xf32, #tpu.memory_space<vmem>>, vector<1x64xf32>
    %169 = vector.broadcast %168 : vector<1x64xf32> to vector<8x64xf32>
    %170 = arith.mulf %167, %169 : vector<8x64xf32>
    %171 = vector.extract_strided_slice %146 {offsets = [2, 0], sizes = [8, 64], strides = [1, 1]} : vector<10x80xf32> to vector<8x64xf32>
    %c6_51 = arith.constant 6 : index
    %c0_52 = arith.constant 0 : index
    %172 = vector.load %arg10[%c6_51, %c0_52] : memref<9x64xf32, #tpu.memory_space<vmem>>, vector<1x64xf32>
    %173 = vector.broadcast %172 : vector<1x64xf32> to vector<8x64xf32>
    %174 = arith.mulf %171, %173 : vector<8x64xf32>
    %175 = vector.extract_strided_slice %146 {offsets = [2, 8], sizes = [8, 64], strides = [1, 1]} : vector<10x80xf32> to vector<8x64xf32>
    %c7_53 = arith.constant 7 : index
    %c0_54 = arith.constant 0 : index
    %176 = vector.load %arg10[%c7_53, %c0_54] : memref<9x64xf32, #tpu.memory_space<vmem>>, vector<1x64xf32>
    %177 = vector.broadcast %176 : vector<1x64xf32> to vector<8x64xf32>
    %178 = arith.mulf %175, %177 : vector<8x64xf32>
    %179 = vector.extract_strided_slice %146 {offsets = [2, 16], sizes = [8, 64], strides = [1, 1]} : vector<10x80xf32> to vector<8x64xf32>
    %c8_55 = arith.constant 8 : index
    %c0_56 = arith.constant 0 : index
    %180 = vector.load %arg10[%c8_55, %c0_56] : memref<9x64xf32, #tpu.memory_space<vmem>>, vector<1x64xf32>
    %181 = vector.broadcast %180 : vector<1x64xf32> to vector<8x64xf32>
    %182 = arith.mulf %179, %181 : vector<8x64xf32>
    %183 = arith.addf %150, %154 : vector<8x64xf32>
    %184 = arith.addf %158, %162 : vector<8x64xf32>
    %185 = arith.addf %166, %170 : vector<8x64xf32>
    %186 = arith.addf %174, %178 : vector<8x64xf32>
    %187 = arith.addf %183, %184 : vector<8x64xf32>
    %188 = arith.addf %185, %186 : vector<8x64xf32>
    %189 = arith.addf %187, %188 : vector<8x64xf32>
    %190 = arith.addf %189, %182 : vector<8x64xf32>
    %cst_57 = arith.constant 0.000000e+00 : f32
    %191 = vector.broadcast %cst_57 : f32 to vector<8x16xf32>
    %192 = tpu.concatenate %191, %14, %191 in 1 : vector<8x16xf32>, vector<8x64xf32>, vector<8x16xf32> -> vector<8x96xf32>
    %cst_58 = arith.constant 0.000000e+00 : f32
    %193 = vector.broadcast %cst_58 : f32 to vector<2x96xf32>
    %194 = tpu.concatenate %193, %192, %193 in 0 : vector<2x96xf32>, vector<8x96xf32>, vector<2x96xf32> -> vector<12x96xf32>
    %195 = vector.extract_strided_slice %194 {offsets = [0, 0], sizes = [8, 64], strides = [1, 1]} : vector<12x96xf32> to vector<8x64xf32>
    %c0_59 = arith.constant 0 : index
    %c0_60 = arith.constant 0 : index
    %196 = vector.load %arg11[%c0_59, %c0_60] : memref<25x64xf32, #tpu.memory_space<vmem>>, vector<1x64xf32>
    %197 = vector.broadcast %196 : vector<1x64xf32> to vector<8x64xf32>
    %198 = arith.mulf %195, %197 : vector<8x64xf32>
    %199 = vector.extract_strided_slice %194 {offsets = [0, 8], sizes = [8, 64], strides = [1, 1]} : vector<12x96xf32> to vector<8x64xf32>
    %c1_61 = arith.constant 1 : index
    %c0_62 = arith.constant 0 : index
    %200 = vector.load %arg11[%c1_61, %c0_62] : memref<25x64xf32, #tpu.memory_space<vmem>>, vector<1x64xf32>
    %201 = vector.broadcast %200 : vector<1x64xf32> to vector<8x64xf32>
    %202 = arith.mulf %199, %201 : vector<8x64xf32>
    %203 = vector.extract_strided_slice %194 {offsets = [0, 16], sizes = [8, 64], strides = [1, 1]} : vector<12x96xf32> to vector<8x64xf32>
    %c2_63 = arith.constant 2 : index
    %c0_64 = arith.constant 0 : index
    %204 = vector.load %arg11[%c2_63, %c0_64] : memref<25x64xf32, #tpu.memory_space<vmem>>, vector<1x64xf32>
    %205 = vector.broadcast %204 : vector<1x64xf32> to vector<8x64xf32>
    %206 = arith.mulf %203, %205 : vector<8x64xf32>
    %207 = vector.extract_strided_slice %194 {offsets = [0, 24], sizes = [8, 64], strides = [1, 1]} : vector<12x96xf32> to vector<8x64xf32>
    %c3_65 = arith.constant 3 : index
    %c0_66 = arith.constant 0 : index
    %208 = vector.load %arg11[%c3_65, %c0_66] : memref<25x64xf32, #tpu.memory_space<vmem>>, vector<1x64xf32>
    %209 = vector.broadcast %208 : vector<1x64xf32> to vector<8x64xf32>
    %210 = arith.mulf %207, %209 : vector<8x64xf32>
    %211 = vector.extract_strided_slice %194 {offsets = [0, 32], sizes = [8, 64], strides = [1, 1]} : vector<12x96xf32> to vector<8x64xf32>
    %c4_67 = arith.constant 4 : index
    %c0_68 = arith.constant 0 : index
    %212 = vector.load %arg11[%c4_67, %c0_68] : memref<25x64xf32, #tpu.memory_space<vmem>>, vector<1x64xf32>
    %213 = vector.broadcast %212 : vector<1x64xf32> to vector<8x64xf32>
    %214 = arith.mulf %211, %213 : vector<8x64xf32>
    %215 = vector.extract_strided_slice %194 {offsets = [1, 0], sizes = [8, 64], strides = [1, 1]} : vector<12x96xf32> to vector<8x64xf32>
    %c5_69 = arith.constant 5 : index
    %c0_70 = arith.constant 0 : index
    %216 = vector.load %arg11[%c5_69, %c0_70] : memref<25x64xf32, #tpu.memory_space<vmem>>, vector<1x64xf32>
    %217 = vector.broadcast %216 : vector<1x64xf32> to vector<8x64xf32>
    %218 = arith.mulf %215, %217 : vector<8x64xf32>
    %219 = vector.extract_strided_slice %194 {offsets = [1, 8], sizes = [8, 64], strides = [1, 1]} : vector<12x96xf32> to vector<8x64xf32>
    %c6_71 = arith.constant 6 : index
    %c0_72 = arith.constant 0 : index
    %220 = vector.load %arg11[%c6_71, %c0_72] : memref<25x64xf32, #tpu.memory_space<vmem>>, vector<1x64xf32>
    %221 = vector.broadcast %220 : vector<1x64xf32> to vector<8x64xf32>
    %222 = arith.mulf %219, %221 : vector<8x64xf32>
    %223 = vector.extract_strided_slice %194 {offsets = [1, 16], sizes = [8, 64], strides = [1, 1]} : vector<12x96xf32> to vector<8x64xf32>
    %c7_73 = arith.constant 7 : index
    %c0_74 = arith.constant 0 : index
    %224 = vector.load %arg11[%c7_73, %c0_74] : memref<25x64xf32, #tpu.memory_space<vmem>>, vector<1x64xf32>
    %225 = vector.broadcast %224 : vector<1x64xf32> to vector<8x64xf32>
    %226 = arith.mulf %223, %225 : vector<8x64xf32>
    %227 = vector.extract_strided_slice %194 {offsets = [1, 24], sizes = [8, 64], strides = [1, 1]} : vector<12x96xf32> to vector<8x64xf32>
    %c8_75 = arith.constant 8 : index
    %c0_76 = arith.constant 0 : index
    %228 = vector.load %arg11[%c8_75, %c0_76] : memref<25x64xf32, #tpu.memory_space<vmem>>, vector<1x64xf32>
    %229 = vector.broadcast %228 : vector<1x64xf32> to vector<8x64xf32>
    %230 = arith.mulf %227, %229 : vector<8x64xf32>
    %231 = vector.extract_strided_slice %194 {offsets = [1, 32], sizes = [8, 64], strides = [1, 1]} : vector<12x96xf32> to vector<8x64xf32>
    %c9_77 = arith.constant 9 : index
    %c0_78 = arith.constant 0 : index
    %232 = vector.load %arg11[%c9_77, %c0_78] : memref<25x64xf32, #tpu.memory_space<vmem>>, vector<1x64xf32>
    %233 = vector.broadcast %232 : vector<1x64xf32> to vector<8x64xf32>
    %234 = arith.mulf %231, %233 : vector<8x64xf32>
    %235 = vector.extract_strided_slice %194 {offsets = [2, 0], sizes = [8, 64], strides = [1, 1]} : vector<12x96xf32> to vector<8x64xf32>
    %c10_79 = arith.constant 10 : index
    %c0_80 = arith.constant 0 : index
    %236 = vector.load %arg11[%c10_79, %c0_80] : memref<25x64xf32, #tpu.memory_space<vmem>>, vector<1x64xf32>
    %237 = vector.broadcast %236 : vector<1x64xf32> to vector<8x64xf32>
    %238 = arith.mulf %235, %237 : vector<8x64xf32>
    %239 = vector.extract_strided_slice %194 {offsets = [2, 8], sizes = [8, 64], strides = [1, 1]} : vector<12x96xf32> to vector<8x64xf32>
    %c11_81 = arith.constant 11 : index
    %c0_82 = arith.constant 0 : index
    %240 = vector.load %arg11[%c11_81, %c0_82] : memref<25x64xf32, #tpu.memory_space<vmem>>, vector<1x64xf32>
    %241 = vector.broadcast %240 : vector<1x64xf32> to vector<8x64xf32>
    %242 = arith.mulf %239, %241 : vector<8x64xf32>
    %243 = vector.extract_strided_slice %194 {offsets = [2, 16], sizes = [8, 64], strides = [1, 1]} : vector<12x96xf32> to vector<8x64xf32>
    %c12_83 = arith.constant 12 : index
    %c0_84 = arith.constant 0 : index
    %244 = vector.load %arg11[%c12_83, %c0_84] : memref<25x64xf32, #tpu.memory_space<vmem>>, vector<1x64xf32>
    %245 = vector.broadcast %244 : vector<1x64xf32> to vector<8x64xf32>
    %246 = arith.mulf %243, %245 : vector<8x64xf32>
    %247 = vector.extract_strided_slice %194 {offsets = [2, 24], sizes = [8, 64], strides = [1, 1]} : vector<12x96xf32> to vector<8x64xf32>
    %c13_85 = arith.constant 13 : index
    %c0_86 = arith.constant 0 : index
    %248 = vector.load %arg11[%c13_85, %c0_86] : memref<25x64xf32, #tpu.memory_space<vmem>>, vector<1x64xf32>
    %249 = vector.broadcast %248 : vector<1x64xf32> to vector<8x64xf32>
    %250 = arith.mulf %247, %249 : vector<8x64xf32>
    %251 = vector.extract_strided_slice %194 {offsets = [2, 32], sizes = [8, 64], strides = [1, 1]} : vector<12x96xf32> to vector<8x64xf32>
    %c14_87 = arith.constant 14 : index
    %c0_88 = arith.constant 0 : index
    %252 = vector.load %arg11[%c14_87, %c0_88] : memref<25x64xf32, #tpu.memory_space<vmem>>, vector<1x64xf32>
    %253 = vector.broadcast %252 : vector<1x64xf32> to vector<8x64xf32>
    %254 = arith.mulf %251, %253 : vector<8x64xf32>
    %255 = vector.extract_strided_slice %194 {offsets = [3, 0], sizes = [8, 64], strides = [1, 1]} : vector<12x96xf32> to vector<8x64xf32>
    %c15_89 = arith.constant 15 : index
    %c0_90 = arith.constant 0 : index
    %256 = vector.load %arg11[%c15_89, %c0_90] : memref<25x64xf32, #tpu.memory_space<vmem>>, vector<1x64xf32>
    %257 = vector.broadcast %256 : vector<1x64xf32> to vector<8x64xf32>
    %258 = arith.mulf %255, %257 : vector<8x64xf32>
    %259 = vector.extract_strided_slice %194 {offsets = [3, 8], sizes = [8, 64], strides = [1, 1]} : vector<12x96xf32> to vector<8x64xf32>
    %c16_91 = arith.constant 16 : index
    %c0_92 = arith.constant 0 : index
    %260 = vector.load %arg11[%c16_91, %c0_92] : memref<25x64xf32, #tpu.memory_space<vmem>>, vector<1x64xf32>
    %261 = vector.broadcast %260 : vector<1x64xf32> to vector<8x64xf32>
    %262 = arith.mulf %259, %261 : vector<8x64xf32>
    %263 = vector.extract_strided_slice %194 {offsets = [3, 16], sizes = [8, 64], strides = [1, 1]} : vector<12x96xf32> to vector<8x64xf32>
    %c17_93 = arith.constant 17 : index
    %c0_94 = arith.constant 0 : index
    %264 = vector.load %arg11[%c17_93, %c0_94] : memref<25x64xf32, #tpu.memory_space<vmem>>, vector<1x64xf32>
    %265 = vector.broadcast %264 : vector<1x64xf32> to vector<8x64xf32>
    %266 = arith.mulf %263, %265 : vector<8x64xf32>
    %267 = vector.extract_strided_slice %194 {offsets = [3, 24], sizes = [8, 64], strides = [1, 1]} : vector<12x96xf32> to vector<8x64xf32>
    %c18_95 = arith.constant 18 : index
    %c0_96 = arith.constant 0 : index
    %268 = vector.load %arg11[%c18_95, %c0_96] : memref<25x64xf32, #tpu.memory_space<vmem>>, vector<1x64xf32>
    %269 = vector.broadcast %268 : vector<1x64xf32> to vector<8x64xf32>
    %270 = arith.mulf %267, %269 : vector<8x64xf32>
    %271 = vector.extract_strided_slice %194 {offsets = [3, 32], sizes = [8, 64], strides = [1, 1]} : vector<12x96xf32> to vector<8x64xf32>
    %c19_97 = arith.constant 19 : index
    %c0_98 = arith.constant 0 : index
    %272 = vector.load %arg11[%c19_97, %c0_98] : memref<25x64xf32, #tpu.memory_space<vmem>>, vector<1x64xf32>
    %273 = vector.broadcast %272 : vector<1x64xf32> to vector<8x64xf32>
    %274 = arith.mulf %271, %273 : vector<8x64xf32>
    %275 = vector.extract_strided_slice %194 {offsets = [4, 0], sizes = [8, 64], strides = [1, 1]} : vector<12x96xf32> to vector<8x64xf32>
    %c20_99 = arith.constant 20 : index
    %c0_100 = arith.constant 0 : index
    %276 = vector.load %arg11[%c20_99, %c0_100] : memref<25x64xf32, #tpu.memory_space<vmem>>, vector<1x64xf32>
    %277 = vector.broadcast %276 : vector<1x64xf32> to vector<8x64xf32>
    %278 = arith.mulf %275, %277 : vector<8x64xf32>
    %279 = vector.extract_strided_slice %194 {offsets = [4, 8], sizes = [8, 64], strides = [1, 1]} : vector<12x96xf32> to vector<8x64xf32>
    %c21_101 = arith.constant 21 : index
    %c0_102 = arith.constant 0 : index
    %280 = vector.load %arg11[%c21_101, %c0_102] : memref<25x64xf32, #tpu.memory_space<vmem>>, vector<1x64xf32>
    %281 = vector.broadcast %280 : vector<1x64xf32> to vector<8x64xf32>
    %282 = arith.mulf %279, %281 : vector<8x64xf32>
    %283 = vector.extract_strided_slice %194 {offsets = [4, 16], sizes = [8, 64], strides = [1, 1]} : vector<12x96xf32> to vector<8x64xf32>
    %c22_103 = arith.constant 22 : index
    %c0_104 = arith.constant 0 : index
    %284 = vector.load %arg11[%c22_103, %c0_104] : memref<25x64xf32, #tpu.memory_space<vmem>>, vector<1x64xf32>
    %285 = vector.broadcast %284 : vector<1x64xf32> to vector<8x64xf32>
    %286 = arith.mulf %283, %285 : vector<8x64xf32>
    %287 = vector.extract_strided_slice %194 {offsets = [4, 24], sizes = [8, 64], strides = [1, 1]} : vector<12x96xf32> to vector<8x64xf32>
    %c23_105 = arith.constant 23 : index
    %c0_106 = arith.constant 0 : index
    %288 = vector.load %arg11[%c23_105, %c0_106] : memref<25x64xf32, #tpu.memory_space<vmem>>, vector<1x64xf32>
    %289 = vector.broadcast %288 : vector<1x64xf32> to vector<8x64xf32>
    %290 = arith.mulf %287, %289 : vector<8x64xf32>
    %291 = vector.extract_strided_slice %194 {offsets = [4, 32], sizes = [8, 64], strides = [1, 1]} : vector<12x96xf32> to vector<8x64xf32>
    %c24_107 = arith.constant 24 : index
    %c0_108 = arith.constant 0 : index
    %292 = vector.load %arg11[%c24_107, %c0_108] : memref<25x64xf32, #tpu.memory_space<vmem>>, vector<1x64xf32>
    %293 = vector.broadcast %292 : vector<1x64xf32> to vector<8x64xf32>
    %294 = arith.mulf %291, %293 : vector<8x64xf32>
    %295 = arith.addf %198, %202 : vector<8x64xf32>
    %296 = arith.addf %206, %210 : vector<8x64xf32>
    %297 = arith.addf %214, %218 : vector<8x64xf32>
    %298 = arith.addf %222, %226 : vector<8x64xf32>
    %299 = arith.addf %230, %234 : vector<8x64xf32>
    %300 = arith.addf %238, %242 : vector<8x64xf32>
    %301 = arith.addf %246, %250 : vector<8x64xf32>
    %302 = arith.addf %254, %258 : vector<8x64xf32>
    %303 = arith.addf %262, %266 : vector<8x64xf32>
    %304 = arith.addf %270, %274 : vector<8x64xf32>
    %305 = arith.addf %278, %282 : vector<8x64xf32>
    %306 = arith.addf %286, %290 : vector<8x64xf32>
    %307 = arith.addf %295, %296 : vector<8x64xf32>
    %308 = arith.addf %297, %298 : vector<8x64xf32>
    %309 = arith.addf %299, %300 : vector<8x64xf32>
    %310 = arith.addf %301, %302 : vector<8x64xf32>
    %311 = arith.addf %303, %304 : vector<8x64xf32>
    %312 = arith.addf %305, %306 : vector<8x64xf32>
    %313 = arith.addf %307, %308 : vector<8x64xf32>
    %314 = arith.addf %309, %310 : vector<8x64xf32>
    %315 = arith.addf %311, %312 : vector<8x64xf32>
    %316 = arith.addf %313, %314 : vector<8x64xf32>
    %317 = arith.addf %315, %294 : vector<8x64xf32>
    %318 = arith.addf %316, %317 : vector<8x64xf32>
    %cst_109 = arith.constant 0.000000e+00 : f32
    %319 = vector.broadcast %cst_109 : f32 to vector<8x8xf32>
    %320 = tpu.concatenate %319, %14, %319 in 1 : vector<8x8xf32>, vector<8x64xf32>, vector<8x8xf32> -> vector<8x80xf32>
    %cst_110 = arith.constant 0.000000e+00 : f32
    %321 = vector.broadcast %cst_110 : f32 to vector<1x80xf32>
    %322 = tpu.concatenate %321, %320, %321 in 0 : vector<1x80xf32>, vector<8x80xf32>, vector<1x80xf32> -> vector<10x80xf32>
    %323 = vector.extract_strided_slice %322 {offsets = [0, 0], sizes = [8, 64], strides = [1, 1]} : vector<10x80xf32> to vector<8x64xf32>
    %c0_111 = arith.constant 0 : index
    %c0_112 = arith.constant 0 : index
    %324 = vector.load %arg12[%c0_111, %c0_112] : memref<9x64xf32, #tpu.memory_space<vmem>>, vector<1x64xf32>
    %325 = vector.broadcast %324 : vector<1x64xf32> to vector<8x64xf32>
    %326 = arith.mulf %323, %325 : vector<8x64xf32>
    %327 = vector.extract_strided_slice %322 {offsets = [0, 8], sizes = [8, 64], strides = [1, 1]} : vector<10x80xf32> to vector<8x64xf32>
    %c1_113 = arith.constant 1 : index
    %c0_114 = arith.constant 0 : index
    %328 = vector.load %arg12[%c1_113, %c0_114] : memref<9x64xf32, #tpu.memory_space<vmem>>, vector<1x64xf32>
    %329 = vector.broadcast %328 : vector<1x64xf32> to vector<8x64xf32>
    %330 = arith.mulf %327, %329 : vector<8x64xf32>
    %331 = vector.extract_strided_slice %322 {offsets = [0, 16], sizes = [8, 64], strides = [1, 1]} : vector<10x80xf32> to vector<8x64xf32>
    %c2_115 = arith.constant 2 : index
    %c0_116 = arith.constant 0 : index
    %332 = vector.load %arg12[%c2_115, %c0_116] : memref<9x64xf32, #tpu.memory_space<vmem>>, vector<1x64xf32>
    %333 = vector.broadcast %332 : vector<1x64xf32> to vector<8x64xf32>
    %334 = arith.mulf %331, %333 : vector<8x64xf32>
    %335 = vector.extract_strided_slice %322 {offsets = [1, 0], sizes = [8, 64], strides = [1, 1]} : vector<10x80xf32> to vector<8x64xf32>
    %c3_117 = arith.constant 3 : index
    %c0_118 = arith.constant 0 : index
    %336 = vector.load %arg12[%c3_117, %c0_118] : memref<9x64xf32, #tpu.memory_space<vmem>>, vector<1x64xf32>
    %337 = vector.broadcast %336 : vector<1x64xf32> to vector<8x64xf32>
    %338 = arith.mulf %335, %337 : vector<8x64xf32>
    %339 = vector.extract_strided_slice %322 {offsets = [1, 8], sizes = [8, 64], strides = [1, 1]} : vector<10x80xf32> to vector<8x64xf32>
    %c4_119 = arith.constant 4 : index
    %c0_120 = arith.constant 0 : index
    %340 = vector.load %arg12[%c4_119, %c0_120] : memref<9x64xf32, #tpu.memory_space<vmem>>, vector<1x64xf32>
    %341 = vector.broadcast %340 : vector<1x64xf32> to vector<8x64xf32>
    %342 = arith.mulf %339, %341 : vector<8x64xf32>
    %343 = vector.extract_strided_slice %322 {offsets = [1, 16], sizes = [8, 64], strides = [1, 1]} : vector<10x80xf32> to vector<8x64xf32>
    %c5_121 = arith.constant 5 : index
    %c0_122 = arith.constant 0 : index
    %344 = vector.load %arg12[%c5_121, %c0_122] : memref<9x64xf32, #tpu.memory_space<vmem>>, vector<1x64xf32>
    %345 = vector.broadcast %344 : vector<1x64xf32> to vector<8x64xf32>
    %346 = arith.mulf %343, %345 : vector<8x64xf32>
    %347 = vector.extract_strided_slice %322 {offsets = [2, 0], sizes = [8, 64], strides = [1, 1]} : vector<10x80xf32> to vector<8x64xf32>
    %c6_123 = arith.constant 6 : index
    %c0_124 = arith.constant 0 : index
    %348 = vector.load %arg12[%c6_123, %c0_124] : memref<9x64xf32, #tpu.memory_space<vmem>>, vector<1x64xf32>
    %349 = vector.broadcast %348 : vector<1x64xf32> to vector<8x64xf32>
    %350 = arith.mulf %347, %349 : vector<8x64xf32>
    %351 = vector.extract_strided_slice %322 {offsets = [2, 8], sizes = [8, 64], strides = [1, 1]} : vector<10x80xf32> to vector<8x64xf32>
    %c7_125 = arith.constant 7 : index
    %c0_126 = arith.constant 0 : index
    %352 = vector.load %arg12[%c7_125, %c0_126] : memref<9x64xf32, #tpu.memory_space<vmem>>, vector<1x64xf32>
    %353 = vector.broadcast %352 : vector<1x64xf32> to vector<8x64xf32>
    %354 = arith.mulf %351, %353 : vector<8x64xf32>
    %355 = vector.extract_strided_slice %322 {offsets = [2, 16], sizes = [8, 64], strides = [1, 1]} : vector<10x80xf32> to vector<8x64xf32>
    %c8_127 = arith.constant 8 : index
    %c0_128 = arith.constant 0 : index
    %356 = vector.load %arg12[%c8_127, %c0_128] : memref<9x64xf32, #tpu.memory_space<vmem>>, vector<1x64xf32>
    %357 = vector.broadcast %356 : vector<1x64xf32> to vector<8x64xf32>
    %358 = arith.mulf %355, %357 : vector<8x64xf32>
    %359 = arith.addf %326, %330 : vector<8x64xf32>
    %360 = arith.addf %334, %338 : vector<8x64xf32>
    %361 = arith.addf %342, %346 : vector<8x64xf32>
    %362 = arith.addf %350, %354 : vector<8x64xf32>
    %363 = arith.addf %359, %360 : vector<8x64xf32>
    %364 = arith.addf %361, %362 : vector<8x64xf32>
    %365 = arith.addf %363, %364 : vector<8x64xf32>
    %366 = arith.addf %365, %358 : vector<8x64xf32>
    %cst_129 = arith.constant 0.000000e+00 : f32
    %367 = vector.broadcast %cst_129 : f32 to vector<8x8xf32>
    %368 = tpu.concatenate %367, %12, %367 in 1 : vector<8x8xf32>, vector<8x64xf32>, vector<8x8xf32> -> vector<8x80xf32>
    %cst_130 = arith.constant 0.000000e+00 : f32
    %369 = vector.broadcast %cst_130 : f32 to vector<1x80xf32>
    %370 = tpu.concatenate %369, %368, %369 in 0 : vector<1x80xf32>, vector<8x80xf32>, vector<1x80xf32> -> vector<10x80xf32>
    %371 = vector.extract_strided_slice %370 {offsets = [0, 0], sizes = [8, 64], strides = [1, 1]} : vector<10x80xf32> to vector<8x64xf32>
    %c0_131 = arith.constant 0 : index
    %c0_132 = arith.constant 0 : index
    %372 = vector.load %arg13[%c0_131, %c0_132] : memref<9x64xf32, #tpu.memory_space<vmem>>, vector<1x64xf32>
    %373 = vector.broadcast %372 : vector<1x64xf32> to vector<8x64xf32>
    %374 = arith.mulf %371, %373 : vector<8x64xf32>
    %375 = vector.extract_strided_slice %370 {offsets = [0, 8], sizes = [8, 64], strides = [1, 1]} : vector<10x80xf32> to vector<8x64xf32>
    %c1_133 = arith.constant 1 : index
    %c0_134 = arith.constant 0 : index
    %376 = vector.load %arg13[%c1_133, %c0_134] : memref<9x64xf32, #tpu.memory_space<vmem>>, vector<1x64xf32>
    %377 = vector.broadcast %376 : vector<1x64xf32> to vector<8x64xf32>
    %378 = arith.mulf %375, %377 : vector<8x64xf32>
    %379 = vector.extract_strided_slice %370 {offsets = [0, 16], sizes = [8, 64], strides = [1, 1]} : vector<10x80xf32> to vector<8x64xf32>
    %c2_135 = arith.constant 2 : index
    %c0_136 = arith.constant 0 : index
    %380 = vector.load %arg13[%c2_135, %c0_136] : memref<9x64xf32, #tpu.memory_space<vmem>>, vector<1x64xf32>
    %381 = vector.broadcast %380 : vector<1x64xf32> to vector<8x64xf32>
    %382 = arith.mulf %379, %381 : vector<8x64xf32>
    %383 = vector.extract_strided_slice %370 {offsets = [1, 0], sizes = [8, 64], strides = [1, 1]} : vector<10x80xf32> to vector<8x64xf32>
    %c3_137 = arith.constant 3 : index
    %c0_138 = arith.constant 0 : index
    %384 = vector.load %arg13[%c3_137, %c0_138] : memref<9x64xf32, #tpu.memory_space<vmem>>, vector<1x64xf32>
    %385 = vector.broadcast %384 : vector<1x64xf32> to vector<8x64xf32>
    %386 = arith.mulf %383, %385 : vector<8x64xf32>
    %387 = vector.extract_strided_slice %370 {offsets = [1, 8], sizes = [8, 64], strides = [1, 1]} : vector<10x80xf32> to vector<8x64xf32>
    %c4_139 = arith.constant 4 : index
    %c0_140 = arith.constant 0 : index
    %388 = vector.load %arg13[%c4_139, %c0_140] : memref<9x64xf32, #tpu.memory_space<vmem>>, vector<1x64xf32>
    %389 = vector.broadcast %388 : vector<1x64xf32> to vector<8x64xf32>
    %390 = arith.mulf %387, %389 : vector<8x64xf32>
    %391 = vector.extract_strided_slice %370 {offsets = [1, 16], sizes = [8, 64], strides = [1, 1]} : vector<10x80xf32> to vector<8x64xf32>
    %c5_141 = arith.constant 5 : index
    %c0_142 = arith.constant 0 : index
    %392 = vector.load %arg13[%c5_141, %c0_142] : memref<9x64xf32, #tpu.memory_space<vmem>>, vector<1x64xf32>
    %393 = vector.broadcast %392 : vector<1x64xf32> to vector<8x64xf32>
    %394 = arith.mulf %391, %393 : vector<8x64xf32>
    %395 = vector.extract_strided_slice %370 {offsets = [2, 0], sizes = [8, 64], strides = [1, 1]} : vector<10x80xf32> to vector<8x64xf32>
    %c6_143 = arith.constant 6 : index
    %c0_144 = arith.constant 0 : index
    %396 = vector.load %arg13[%c6_143, %c0_144] : memref<9x64xf32, #tpu.memory_space<vmem>>, vector<1x64xf32>
    %397 = vector.broadcast %396 : vector<1x64xf32> to vector<8x64xf32>
    %398 = arith.mulf %395, %397 : vector<8x64xf32>
    %399 = vector.extract_strided_slice %370 {offsets = [2, 8], sizes = [8, 64], strides = [1, 1]} : vector<10x80xf32> to vector<8x64xf32>
    %c7_145 = arith.constant 7 : index
    %c0_146 = arith.constant 0 : index
    %400 = vector.load %arg13[%c7_145, %c0_146] : memref<9x64xf32, #tpu.memory_space<vmem>>, vector<1x64xf32>
    %401 = vector.broadcast %400 : vector<1x64xf32> to vector<8x64xf32>
    %402 = arith.mulf %399, %401 : vector<8x64xf32>
    %403 = vector.extract_strided_slice %370 {offsets = [2, 16], sizes = [8, 64], strides = [1, 1]} : vector<10x80xf32> to vector<8x64xf32>
    %c8_147 = arith.constant 8 : index
    %c0_148 = arith.constant 0 : index
    %404 = vector.load %arg13[%c8_147, %c0_148] : memref<9x64xf32, #tpu.memory_space<vmem>>, vector<1x64xf32>
    %405 = vector.broadcast %404 : vector<1x64xf32> to vector<8x64xf32>
    %406 = arith.mulf %403, %405 : vector<8x64xf32>
    %407 = arith.addf %374, %378 : vector<8x64xf32>
    %408 = arith.addf %382, %386 : vector<8x64xf32>
    %409 = arith.addf %390, %394 : vector<8x64xf32>
    %410 = arith.addf %398, %402 : vector<8x64xf32>
    %411 = arith.addf %407, %408 : vector<8x64xf32>
    %412 = arith.addf %409, %410 : vector<8x64xf32>
    %413 = arith.addf %411, %412 : vector<8x64xf32>
    %414 = arith.addf %413, %406 : vector<8x64xf32>
    %415 = tpu.concatenate %142, %190, %318, %366, %414 in 1 : vector<8x64xf32>, vector<8x64xf32>, vector<8x64xf32>, vector<8x64xf32>, vector<8x64xf32> -> vector<8x320xf32>
    %c0_149 = arith.constant 0 : index
    %c0_150 = arith.constant 0 : index
    %416 = vector.load %arg5[%c0_149, %c0_150] : memref<320x320xf32, #tpu.memory_space<vmem>>, vector<320x320xf32>
    %cst_151 = arith.constant dense<0.000000e+00> : vector<8x320xf32>
    %417 = tpu.matmul %415, %416, %cst_151 {dimension_numbers = #tpu.dot_dimension_numbers<[1], [0], [0], [1], [0, 0, 1, 1], [], []>} : vector<8x320xf32>, vector<320x320xf32>, vector<8x320xf32> -> vector<8x320xf32>
    %c0_152 = arith.constant 0 : index
    %c0_153 = arith.constant 0 : index
    %418 = vector.load %arg6[%c0_152, %c0_153] : memref<1x320xf32, #tpu.memory_space<vmem>>, vector<1x320xf32>
    %419 = vector.broadcast %418 : vector<1x320xf32> to vector<8x320xf32>
    %420 = arith.addf %417, %419 : vector<8x320xf32>
    %cst_154 = arith.constant 0.000000e+00 : f32
    %421 = vector.broadcast %cst_154 : f32 to vector<8x320xf32>
    %422 = arith.maximumf %420, %421 : vector<8x320xf32>
    %423 = vector.extract_strided_slice %422 {offsets = [0, 0], sizes = [8, 64], strides = [1, 1]} : vector<8x320xf32> to vector<8x64xf32>
    %cst_155 = arith.constant 0.000000e+00 : f32
    %424 = vector.broadcast %cst_155 : f32 to vector<8x16xf32>
    %425 = tpu.concatenate %424, %423, %424 in 1 : vector<8x16xf32>, vector<8x64xf32>, vector<8x16xf32> -> vector<8x96xf32>
    %cst_156 = arith.constant 0.000000e+00 : f32
    %426 = vector.broadcast %cst_156 : f32 to vector<2x96xf32>
    %427 = tpu.concatenate %426, %425, %426 in 0 : vector<2x96xf32>, vector<8x96xf32>, vector<2x96xf32> -> vector<12x96xf32>
    %428 = vector.extract_strided_slice %427 {offsets = [0, 0], sizes = [8, 64], strides = [1, 1]} : vector<12x96xf32> to vector<8x64xf32>
    %c0_157 = arith.constant 0 : index
    %c0_158 = arith.constant 0 : index
    %429 = vector.load %arg14[%c0_157, %c0_158] : memref<25x64xf32, #tpu.memory_space<vmem>>, vector<1x64xf32>
    %430 = vector.broadcast %429 : vector<1x64xf32> to vector<8x64xf32>
    %431 = arith.mulf %428, %430 : vector<8x64xf32>
    %432 = vector.extract_strided_slice %427 {offsets = [0, 8], sizes = [8, 64], strides = [1, 1]} : vector<12x96xf32> to vector<8x64xf32>
    %c1_159 = arith.constant 1 : index
    %c0_160 = arith.constant 0 : index
    %433 = vector.load %arg14[%c1_159, %c0_160] : memref<25x64xf32, #tpu.memory_space<vmem>>, vector<1x64xf32>
    %434 = vector.broadcast %433 : vector<1x64xf32> to vector<8x64xf32>
    %435 = arith.mulf %432, %434 : vector<8x64xf32>
    %436 = vector.extract_strided_slice %427 {offsets = [0, 16], sizes = [8, 64], strides = [1, 1]} : vector<12x96xf32> to vector<8x64xf32>
    %c2_161 = arith.constant 2 : index
    %c0_162 = arith.constant 0 : index
    %437 = vector.load %arg14[%c2_161, %c0_162] : memref<25x64xf32, #tpu.memory_space<vmem>>, vector<1x64xf32>
    %438 = vector.broadcast %437 : vector<1x64xf32> to vector<8x64xf32>
    %439 = arith.mulf %436, %438 : vector<8x64xf32>
    %440 = vector.extract_strided_slice %427 {offsets = [0, 24], sizes = [8, 64], strides = [1, 1]} : vector<12x96xf32> to vector<8x64xf32>
    %c3_163 = arith.constant 3 : index
    %c0_164 = arith.constant 0 : index
    %441 = vector.load %arg14[%c3_163, %c0_164] : memref<25x64xf32, #tpu.memory_space<vmem>>, vector<1x64xf32>
    %442 = vector.broadcast %441 : vector<1x64xf32> to vector<8x64xf32>
    %443 = arith.mulf %440, %442 : vector<8x64xf32>
    %444 = vector.extract_strided_slice %427 {offsets = [0, 32], sizes = [8, 64], strides = [1, 1]} : vector<12x96xf32> to vector<8x64xf32>
    %c4_165 = arith.constant 4 : index
    %c0_166 = arith.constant 0 : index
    %445 = vector.load %arg14[%c4_165, %c0_166] : memref<25x64xf32, #tpu.memory_space<vmem>>, vector<1x64xf32>
    %446 = vector.broadcast %445 : vector<1x64xf32> to vector<8x64xf32>
    %447 = arith.mulf %444, %446 : vector<8x64xf32>
    %448 = vector.extract_strided_slice %427 {offsets = [1, 0], sizes = [8, 64], strides = [1, 1]} : vector<12x96xf32> to vector<8x64xf32>
    %c5_167 = arith.constant 5 : index
    %c0_168 = arith.constant 0 : index
    %449 = vector.load %arg14[%c5_167, %c0_168] : memref<25x64xf32, #tpu.memory_space<vmem>>, vector<1x64xf32>
    %450 = vector.broadcast %449 : vector<1x64xf32> to vector<8x64xf32>
    %451 = arith.mulf %448, %450 : vector<8x64xf32>
    %452 = vector.extract_strided_slice %427 {offsets = [1, 8], sizes = [8, 64], strides = [1, 1]} : vector<12x96xf32> to vector<8x64xf32>
    %c6_169 = arith.constant 6 : index
    %c0_170 = arith.constant 0 : index
    %453 = vector.load %arg14[%c6_169, %c0_170] : memref<25x64xf32, #tpu.memory_space<vmem>>, vector<1x64xf32>
    %454 = vector.broadcast %453 : vector<1x64xf32> to vector<8x64xf32>
    %455 = arith.mulf %452, %454 : vector<8x64xf32>
    %456 = vector.extract_strided_slice %427 {offsets = [1, 16], sizes = [8, 64], strides = [1, 1]} : vector<12x96xf32> to vector<8x64xf32>
    %c7_171 = arith.constant 7 : index
    %c0_172 = arith.constant 0 : index
    %457 = vector.load %arg14[%c7_171, %c0_172] : memref<25x64xf32, #tpu.memory_space<vmem>>, vector<1x64xf32>
    %458 = vector.broadcast %457 : vector<1x64xf32> to vector<8x64xf32>
    %459 = arith.mulf %456, %458 : vector<8x64xf32>
    %460 = vector.extract_strided_slice %427 {offsets = [1, 24], sizes = [8, 64], strides = [1, 1]} : vector<12x96xf32> to vector<8x64xf32>
    %c8_173 = arith.constant 8 : index
    %c0_174 = arith.constant 0 : index
    %461 = vector.load %arg14[%c8_173, %c0_174] : memref<25x64xf32, #tpu.memory_space<vmem>>, vector<1x64xf32>
    %462 = vector.broadcast %461 : vector<1x64xf32> to vector<8x64xf32>
    %463 = arith.mulf %460, %462 : vector<8x64xf32>
    %464 = vector.extract_strided_slice %427 {offsets = [1, 32], sizes = [8, 64], strides = [1, 1]} : vector<12x96xf32> to vector<8x64xf32>
    %c9_175 = arith.constant 9 : index
    %c0_176 = arith.constant 0 : index
    %465 = vector.load %arg14[%c9_175, %c0_176] : memref<25x64xf32, #tpu.memory_space<vmem>>, vector<1x64xf32>
    %466 = vector.broadcast %465 : vector<1x64xf32> to vector<8x64xf32>
    %467 = arith.mulf %464, %466 : vector<8x64xf32>
    %468 = vector.extract_strided_slice %427 {offsets = [2, 0], sizes = [8, 64], strides = [1, 1]} : vector<12x96xf32> to vector<8x64xf32>
    %c10_177 = arith.constant 10 : index
    %c0_178 = arith.constant 0 : index
    %469 = vector.load %arg14[%c10_177, %c0_178] : memref<25x64xf32, #tpu.memory_space<vmem>>, vector<1x64xf32>
    %470 = vector.broadcast %469 : vector<1x64xf32> to vector<8x64xf32>
    %471 = arith.mulf %468, %470 : vector<8x64xf32>
    %472 = vector.extract_strided_slice %427 {offsets = [2, 8], sizes = [8, 64], strides = [1, 1]} : vector<12x96xf32> to vector<8x64xf32>
    %c11_179 = arith.constant 11 : index
    %c0_180 = arith.constant 0 : index
    %473 = vector.load %arg14[%c11_179, %c0_180] : memref<25x64xf32, #tpu.memory_space<vmem>>, vector<1x64xf32>
    %474 = vector.broadcast %473 : vector<1x64xf32> to vector<8x64xf32>
    %475 = arith.mulf %472, %474 : vector<8x64xf32>
    %476 = vector.extract_strided_slice %427 {offsets = [2, 16], sizes = [8, 64], strides = [1, 1]} : vector<12x96xf32> to vector<8x64xf32>
    %c12_181 = arith.constant 12 : index
    %c0_182 = arith.constant 0 : index
    %477 = vector.load %arg14[%c12_181, %c0_182] : memref<25x64xf32, #tpu.memory_space<vmem>>, vector<1x64xf32>
    %478 = vector.broadcast %477 : vector<1x64xf32> to vector<8x64xf32>
    %479 = arith.mulf %476, %478 : vector<8x64xf32>
    %480 = vector.extract_strided_slice %427 {offsets = [2, 24], sizes = [8, 64], strides = [1, 1]} : vector<12x96xf32> to vector<8x64xf32>
    %c13_183 = arith.constant 13 : index
    %c0_184 = arith.constant 0 : index
    %481 = vector.load %arg14[%c13_183, %c0_184] : memref<25x64xf32, #tpu.memory_space<vmem>>, vector<1x64xf32>
    %482 = vector.broadcast %481 : vector<1x64xf32> to vector<8x64xf32>
    %483 = arith.mulf %480, %482 : vector<8x64xf32>
    %484 = vector.extract_strided_slice %427 {offsets = [2, 32], sizes = [8, 64], strides = [1, 1]} : vector<12x96xf32> to vector<8x64xf32>
    %c14_185 = arith.constant 14 : index
    %c0_186 = arith.constant 0 : index
    %485 = vector.load %arg14[%c14_185, %c0_186] : memref<25x64xf32, #tpu.memory_space<vmem>>, vector<1x64xf32>
    %486 = vector.broadcast %485 : vector<1x64xf32> to vector<8x64xf32>
    %487 = arith.mulf %484, %486 : vector<8x64xf32>
    %488 = vector.extract_strided_slice %427 {offsets = [3, 0], sizes = [8, 64], strides = [1, 1]} : vector<12x96xf32> to vector<8x64xf32>
    %c15_187 = arith.constant 15 : index
    %c0_188 = arith.constant 0 : index
    %489 = vector.load %arg14[%c15_187, %c0_188] : memref<25x64xf32, #tpu.memory_space<vmem>>, vector<1x64xf32>
    %490 = vector.broadcast %489 : vector<1x64xf32> to vector<8x64xf32>
    %491 = arith.mulf %488, %490 : vector<8x64xf32>
    %492 = vector.extract_strided_slice %427 {offsets = [3, 8], sizes = [8, 64], strides = [1, 1]} : vector<12x96xf32> to vector<8x64xf32>
    %c16_189 = arith.constant 16 : index
    %c0_190 = arith.constant 0 : index
    %493 = vector.load %arg14[%c16_189, %c0_190] : memref<25x64xf32, #tpu.memory_space<vmem>>, vector<1x64xf32>
    %494 = vector.broadcast %493 : vector<1x64xf32> to vector<8x64xf32>
    %495 = arith.mulf %492, %494 : vector<8x64xf32>
    %496 = vector.extract_strided_slice %427 {offsets = [3, 16], sizes = [8, 64], strides = [1, 1]} : vector<12x96xf32> to vector<8x64xf32>
    %c17_191 = arith.constant 17 : index
    %c0_192 = arith.constant 0 : index
    %497 = vector.load %arg14[%c17_191, %c0_192] : memref<25x64xf32, #tpu.memory_space<vmem>>, vector<1x64xf32>
    %498 = vector.broadcast %497 : vector<1x64xf32> to vector<8x64xf32>
    %499 = arith.mulf %496, %498 : vector<8x64xf32>
    %500 = vector.extract_strided_slice %427 {offsets = [3, 24], sizes = [8, 64], strides = [1, 1]} : vector<12x96xf32> to vector<8x64xf32>
    %c18_193 = arith.constant 18 : index
    %c0_194 = arith.constant 0 : index
    %501 = vector.load %arg14[%c18_193, %c0_194] : memref<25x64xf32, #tpu.memory_space<vmem>>, vector<1x64xf32>
    %502 = vector.broadcast %501 : vector<1x64xf32> to vector<8x64xf32>
    %503 = arith.mulf %500, %502 : vector<8x64xf32>
    %504 = vector.extract_strided_slice %427 {offsets = [3, 32], sizes = [8, 64], strides = [1, 1]} : vector<12x96xf32> to vector<8x64xf32>
    %c19_195 = arith.constant 19 : index
    %c0_196 = arith.constant 0 : index
    %505 = vector.load %arg14[%c19_195, %c0_196] : memref<25x64xf32, #tpu.memory_space<vmem>>, vector<1x64xf32>
    %506 = vector.broadcast %505 : vector<1x64xf32> to vector<8x64xf32>
    %507 = arith.mulf %504, %506 : vector<8x64xf32>
    %508 = vector.extract_strided_slice %427 {offsets = [4, 0], sizes = [8, 64], strides = [1, 1]} : vector<12x96xf32> to vector<8x64xf32>
    %c20_197 = arith.constant 20 : index
    %c0_198 = arith.constant 0 : index
    %509 = vector.load %arg14[%c20_197, %c0_198] : memref<25x64xf32, #tpu.memory_space<vmem>>, vector<1x64xf32>
    %510 = vector.broadcast %509 : vector<1x64xf32> to vector<8x64xf32>
    %511 = arith.mulf %508, %510 : vector<8x64xf32>
    %512 = vector.extract_strided_slice %427 {offsets = [4, 8], sizes = [8, 64], strides = [1, 1]} : vector<12x96xf32> to vector<8x64xf32>
    %c21_199 = arith.constant 21 : index
    %c0_200 = arith.constant 0 : index
    %513 = vector.load %arg14[%c21_199, %c0_200] : memref<25x64xf32, #tpu.memory_space<vmem>>, vector<1x64xf32>
    %514 = vector.broadcast %513 : vector<1x64xf32> to vector<8x64xf32>
    %515 = arith.mulf %512, %514 : vector<8x64xf32>
    %516 = vector.extract_strided_slice %427 {offsets = [4, 16], sizes = [8, 64], strides = [1, 1]} : vector<12x96xf32> to vector<8x64xf32>
    %c22_201 = arith.constant 22 : index
    %c0_202 = arith.constant 0 : index
    %517 = vector.load %arg14[%c22_201, %c0_202] : memref<25x64xf32, #tpu.memory_space<vmem>>, vector<1x64xf32>
    %518 = vector.broadcast %517 : vector<1x64xf32> to vector<8x64xf32>
    %519 = arith.mulf %516, %518 : vector<8x64xf32>
    %520 = vector.extract_strided_slice %427 {offsets = [4, 24], sizes = [8, 64], strides = [1, 1]} : vector<12x96xf32> to vector<8x64xf32>
    %c23_203 = arith.constant 23 : index
    %c0_204 = arith.constant 0 : index
    %521 = vector.load %arg14[%c23_203, %c0_204] : memref<25x64xf32, #tpu.memory_space<vmem>>, vector<1x64xf32>
    %522 = vector.broadcast %521 : vector<1x64xf32> to vector<8x64xf32>
    %523 = arith.mulf %520, %522 : vector<8x64xf32>
    %524 = vector.extract_strided_slice %427 {offsets = [4, 32], sizes = [8, 64], strides = [1, 1]} : vector<12x96xf32> to vector<8x64xf32>
    %c24_205 = arith.constant 24 : index
    %c0_206 = arith.constant 0 : index
    %525 = vector.load %arg14[%c24_205, %c0_206] : memref<25x64xf32, #tpu.memory_space<vmem>>, vector<1x64xf32>
    %526 = vector.broadcast %525 : vector<1x64xf32> to vector<8x64xf32>
    %527 = arith.mulf %524, %526 : vector<8x64xf32>
    %528 = arith.addf %431, %435 : vector<8x64xf32>
    %529 = arith.addf %439, %443 : vector<8x64xf32>
    %530 = arith.addf %447, %451 : vector<8x64xf32>
    %531 = arith.addf %455, %459 : vector<8x64xf32>
    %532 = arith.addf %463, %467 : vector<8x64xf32>
    %533 = arith.addf %471, %475 : vector<8x64xf32>
    %534 = arith.addf %479, %483 : vector<8x64xf32>
    %535 = arith.addf %487, %491 : vector<8x64xf32>
    %536 = arith.addf %495, %499 : vector<8x64xf32>
    %537 = arith.addf %503, %507 : vector<8x64xf32>
    %538 = arith.addf %511, %515 : vector<8x64xf32>
    %539 = arith.addf %519, %523 : vector<8x64xf32>
    %540 = arith.addf %528, %529 : vector<8x64xf32>
    %541 = arith.addf %530, %531 : vector<8x64xf32>
    %542 = arith.addf %532, %533 : vector<8x64xf32>
    %543 = arith.addf %534, %535 : vector<8x64xf32>
    %544 = arith.addf %536, %537 : vector<8x64xf32>
    %545 = arith.addf %538, %539 : vector<8x64xf32>
    %546 = arith.addf %540, %541 : vector<8x64xf32>
    %547 = arith.addf %542, %543 : vector<8x64xf32>
    %548 = arith.addf %544, %545 : vector<8x64xf32>
    %549 = arith.addf %546, %547 : vector<8x64xf32>
    %550 = arith.addf %548, %527 : vector<8x64xf32>
    %551 = arith.addf %549, %550 : vector<8x64xf32>
    %552 = vector.extract_strided_slice %422 {offsets = [0, 64], sizes = [8, 64], strides = [1, 1]} : vector<8x320xf32> to vector<8x64xf32>
    %cst_207 = arith.constant 0.000000e+00 : f32
    %553 = vector.broadcast %cst_207 : f32 to vector<8x8xf32>
    %554 = tpu.concatenate %553, %552, %553 in 1 : vector<8x8xf32>, vector<8x64xf32>, vector<8x8xf32> -> vector<8x80xf32>
    %cst_208 = arith.constant 0.000000e+00 : f32
    %555 = vector.broadcast %cst_208 : f32 to vector<1x80xf32>
    %556 = tpu.concatenate %555, %554, %555 in 0 : vector<1x80xf32>, vector<8x80xf32>, vector<1x80xf32> -> vector<10x80xf32>
    %557 = vector.extract_strided_slice %556 {offsets = [0, 0], sizes = [8, 64], strides = [1, 1]} : vector<10x80xf32> to vector<8x64xf32>
    %c0_209 = arith.constant 0 : index
    %c0_210 = arith.constant 0 : index
    %558 = vector.load %arg15[%c0_209, %c0_210] : memref<9x64xf32, #tpu.memory_space<vmem>>, vector<1x64xf32>
    %559 = vector.broadcast %558 : vector<1x64xf32> to vector<8x64xf32>
    %560 = arith.mulf %557, %559 : vector<8x64xf32>
    %561 = vector.extract_strided_slice %556 {offsets = [0, 8], sizes = [8, 64], strides = [1, 1]} : vector<10x80xf32> to vector<8x64xf32>
    %c1_211 = arith.constant 1 : index
    %c0_212 = arith.constant 0 : index
    %562 = vector.load %arg15[%c1_211, %c0_212] : memref<9x64xf32, #tpu.memory_space<vmem>>, vector<1x64xf32>
    %563 = vector.broadcast %562 : vector<1x64xf32> to vector<8x64xf32>
    %564 = arith.mulf %561, %563 : vector<8x64xf32>
    %565 = vector.extract_strided_slice %556 {offsets = [0, 16], sizes = [8, 64], strides = [1, 1]} : vector<10x80xf32> to vector<8x64xf32>
    %c2_213 = arith.constant 2 : index
    %c0_214 = arith.constant 0 : index
    %566 = vector.load %arg15[%c2_213, %c0_214] : memref<9x64xf32, #tpu.memory_space<vmem>>, vector<1x64xf32>
    %567 = vector.broadcast %566 : vector<1x64xf32> to vector<8x64xf32>
    %568 = arith.mulf %565, %567 : vector<8x64xf32>
    %569 = vector.extract_strided_slice %556 {offsets = [1, 0], sizes = [8, 64], strides = [1, 1]} : vector<10x80xf32> to vector<8x64xf32>
    %c3_215 = arith.constant 3 : index
    %c0_216 = arith.constant 0 : index
    %570 = vector.load %arg15[%c3_215, %c0_216] : memref<9x64xf32, #tpu.memory_space<vmem>>, vector<1x64xf32>
    %571 = vector.broadcast %570 : vector<1x64xf32> to vector<8x64xf32>
    %572 = arith.mulf %569, %571 : vector<8x64xf32>
    %573 = vector.extract_strided_slice %556 {offsets = [1, 8], sizes = [8, 64], strides = [1, 1]} : vector<10x80xf32> to vector<8x64xf32>
    %c4_217 = arith.constant 4 : index
    %c0_218 = arith.constant 0 : index
    %574 = vector.load %arg15[%c4_217, %c0_218] : memref<9x64xf32, #tpu.memory_space<vmem>>, vector<1x64xf32>
    %575 = vector.broadcast %574 : vector<1x64xf32> to vector<8x64xf32>
    %576 = arith.mulf %573, %575 : vector<8x64xf32>
    %577 = vector.extract_strided_slice %556 {offsets = [1, 16], sizes = [8, 64], strides = [1, 1]} : vector<10x80xf32> to vector<8x64xf32>
    %c5_219 = arith.constant 5 : index
    %c0_220 = arith.constant 0 : index
    %578 = vector.load %arg15[%c5_219, %c0_220] : memref<9x64xf32, #tpu.memory_space<vmem>>, vector<1x64xf32>
    %579 = vector.broadcast %578 : vector<1x64xf32> to vector<8x64xf32>
    %580 = arith.mulf %577, %579 : vector<8x64xf32>
    %581 = vector.extract_strided_slice %556 {offsets = [2, 0], sizes = [8, 64], strides = [1, 1]} : vector<10x80xf32> to vector<8x64xf32>
    %c6_221 = arith.constant 6 : index
    %c0_222 = arith.constant 0 : index
    %582 = vector.load %arg15[%c6_221, %c0_222] : memref<9x64xf32, #tpu.memory_space<vmem>>, vector<1x64xf32>
    %583 = vector.broadcast %582 : vector<1x64xf32> to vector<8x64xf32>
    %584 = arith.mulf %581, %583 : vector<8x64xf32>
    %585 = vector.extract_strided_slice %556 {offsets = [2, 8], sizes = [8, 64], strides = [1, 1]} : vector<10x80xf32> to vector<8x64xf32>
    %c7_223 = arith.constant 7 : index
    %c0_224 = arith.constant 0 : index
    %586 = vector.load %arg15[%c7_223, %c0_224] : memref<9x64xf32, #tpu.memory_space<vmem>>, vector<1x64xf32>
    %587 = vector.broadcast %586 : vector<1x64xf32> to vector<8x64xf32>
    %588 = arith.mulf %585, %587 : vector<8x64xf32>
    %589 = vector.extract_strided_slice %556 {offsets = [2, 16], sizes = [8, 64], strides = [1, 1]} : vector<10x80xf32> to vector<8x64xf32>
    %c8_225 = arith.constant 8 : index
    %c0_226 = arith.constant 0 : index
    %590 = vector.load %arg15[%c8_225, %c0_226] : memref<9x64xf32, #tpu.memory_space<vmem>>, vector<1x64xf32>
    %591 = vector.broadcast %590 : vector<1x64xf32> to vector<8x64xf32>
    %592 = arith.mulf %589, %591 : vector<8x64xf32>
    %593 = arith.addf %560, %564 : vector<8x64xf32>
    %594 = arith.addf %568, %572 : vector<8x64xf32>
    %595 = arith.addf %576, %580 : vector<8x64xf32>
    %596 = arith.addf %584, %588 : vector<8x64xf32>
    %597 = arith.addf %593, %594 : vector<8x64xf32>
    %598 = arith.addf %595, %596 : vector<8x64xf32>
    %599 = arith.addf %597, %598 : vector<8x64xf32>
    %600 = arith.addf %599, %592 : vector<8x64xf32>
    %601 = vector.extract_strided_slice %422 {offsets = [0, 128], sizes = [8, 64], strides = [1, 1]} : vector<8x320xf32> to vector<8x64xf32>
    %cst_227 = arith.constant 0.000000e+00 : f32
    %602 = vector.broadcast %cst_227 : f32 to vector<8x16xf32>
    %603 = tpu.concatenate %602, %601, %602 in 1 : vector<8x16xf32>, vector<8x64xf32>, vector<8x16xf32> -> vector<8x96xf32>
    %cst_228 = arith.constant 0.000000e+00 : f32
    %604 = vector.broadcast %cst_228 : f32 to vector<2x96xf32>
    %605 = tpu.concatenate %604, %603, %604 in 0 : vector<2x96xf32>, vector<8x96xf32>, vector<2x96xf32> -> vector<12x96xf32>
    %606 = vector.extract_strided_slice %605 {offsets = [0, 0], sizes = [8, 64], strides = [1, 1]} : vector<12x96xf32> to vector<8x64xf32>
    %c0_229 = arith.constant 0 : index
    %c0_230 = arith.constant 0 : index
    %607 = vector.load %arg16[%c0_229, %c0_230] : memref<25x64xf32, #tpu.memory_space<vmem>>, vector<1x64xf32>
    %608 = vector.broadcast %607 : vector<1x64xf32> to vector<8x64xf32>
    %609 = arith.mulf %606, %608 : vector<8x64xf32>
    %610 = vector.extract_strided_slice %605 {offsets = [0, 8], sizes = [8, 64], strides = [1, 1]} : vector<12x96xf32> to vector<8x64xf32>
    %c1_231 = arith.constant 1 : index
    %c0_232 = arith.constant 0 : index
    %611 = vector.load %arg16[%c1_231, %c0_232] : memref<25x64xf32, #tpu.memory_space<vmem>>, vector<1x64xf32>
    %612 = vector.broadcast %611 : vector<1x64xf32> to vector<8x64xf32>
    %613 = arith.mulf %610, %612 : vector<8x64xf32>
    %614 = vector.extract_strided_slice %605 {offsets = [0, 16], sizes = [8, 64], strides = [1, 1]} : vector<12x96xf32> to vector<8x64xf32>
    %c2_233 = arith.constant 2 : index
    %c0_234 = arith.constant 0 : index
    %615 = vector.load %arg16[%c2_233, %c0_234] : memref<25x64xf32, #tpu.memory_space<vmem>>, vector<1x64xf32>
    %616 = vector.broadcast %615 : vector<1x64xf32> to vector<8x64xf32>
    %617 = arith.mulf %614, %616 : vector<8x64xf32>
    %618 = vector.extract_strided_slice %605 {offsets = [0, 24], sizes = [8, 64], strides = [1, 1]} : vector<12x96xf32> to vector<8x64xf32>
    %c3_235 = arith.constant 3 : index
    %c0_236 = arith.constant 0 : index
    %619 = vector.load %arg16[%c3_235, %c0_236] : memref<25x64xf32, #tpu.memory_space<vmem>>, vector<1x64xf32>
    %620 = vector.broadcast %619 : vector<1x64xf32> to vector<8x64xf32>
    %621 = arith.mulf %618, %620 : vector<8x64xf32>
    %622 = vector.extract_strided_slice %605 {offsets = [0, 32], sizes = [8, 64], strides = [1, 1]} : vector<12x96xf32> to vector<8x64xf32>
    %c4_237 = arith.constant 4 : index
    %c0_238 = arith.constant 0 : index
    %623 = vector.load %arg16[%c4_237, %c0_238] : memref<25x64xf32, #tpu.memory_space<vmem>>, vector<1x64xf32>
    %624 = vector.broadcast %623 : vector<1x64xf32> to vector<8x64xf32>
    %625 = arith.mulf %622, %624 : vector<8x64xf32>
    %626 = vector.extract_strided_slice %605 {offsets = [1, 0], sizes = [8, 64], strides = [1, 1]} : vector<12x96xf32> to vector<8x64xf32>
    %c5_239 = arith.constant 5 : index
    %c0_240 = arith.constant 0 : index
    %627 = vector.load %arg16[%c5_239, %c0_240] : memref<25x64xf32, #tpu.memory_space<vmem>>, vector<1x64xf32>
    %628 = vector.broadcast %627 : vector<1x64xf32> to vector<8x64xf32>
    %629 = arith.mulf %626, %628 : vector<8x64xf32>
    %630 = vector.extract_strided_slice %605 {offsets = [1, 8], sizes = [8, 64], strides = [1, 1]} : vector<12x96xf32> to vector<8x64xf32>
    %c6_241 = arith.constant 6 : index
    %c0_242 = arith.constant 0 : index
    %631 = vector.load %arg16[%c6_241, %c0_242] : memref<25x64xf32, #tpu.memory_space<vmem>>, vector<1x64xf32>
    %632 = vector.broadcast %631 : vector<1x64xf32> to vector<8x64xf32>
    %633 = arith.mulf %630, %632 : vector<8x64xf32>
    %634 = vector.extract_strided_slice %605 {offsets = [1, 16], sizes = [8, 64], strides = [1, 1]} : vector<12x96xf32> to vector<8x64xf32>
    %c7_243 = arith.constant 7 : index
    %c0_244 = arith.constant 0 : index
    %635 = vector.load %arg16[%c7_243, %c0_244] : memref<25x64xf32, #tpu.memory_space<vmem>>, vector<1x64xf32>
    %636 = vector.broadcast %635 : vector<1x64xf32> to vector<8x64xf32>
    %637 = arith.mulf %634, %636 : vector<8x64xf32>
    %638 = vector.extract_strided_slice %605 {offsets = [1, 24], sizes = [8, 64], strides = [1, 1]} : vector<12x96xf32> to vector<8x64xf32>
    %c8_245 = arith.constant 8 : index
    %c0_246 = arith.constant 0 : index
    %639 = vector.load %arg16[%c8_245, %c0_246] : memref<25x64xf32, #tpu.memory_space<vmem>>, vector<1x64xf32>
    %640 = vector.broadcast %639 : vector<1x64xf32> to vector<8x64xf32>
    %641 = arith.mulf %638, %640 : vector<8x64xf32>
    %642 = vector.extract_strided_slice %605 {offsets = [1, 32], sizes = [8, 64], strides = [1, 1]} : vector<12x96xf32> to vector<8x64xf32>
    %c9_247 = arith.constant 9 : index
    %c0_248 = arith.constant 0 : index
    %643 = vector.load %arg16[%c9_247, %c0_248] : memref<25x64xf32, #tpu.memory_space<vmem>>, vector<1x64xf32>
    %644 = vector.broadcast %643 : vector<1x64xf32> to vector<8x64xf32>
    %645 = arith.mulf %642, %644 : vector<8x64xf32>
    %646 = vector.extract_strided_slice %605 {offsets = [2, 0], sizes = [8, 64], strides = [1, 1]} : vector<12x96xf32> to vector<8x64xf32>
    %c10_249 = arith.constant 10 : index
    %c0_250 = arith.constant 0 : index
    %647 = vector.load %arg16[%c10_249, %c0_250] : memref<25x64xf32, #tpu.memory_space<vmem>>, vector<1x64xf32>
    %648 = vector.broadcast %647 : vector<1x64xf32> to vector<8x64xf32>
    %649 = arith.mulf %646, %648 : vector<8x64xf32>
    %650 = vector.extract_strided_slice %605 {offsets = [2, 8], sizes = [8, 64], strides = [1, 1]} : vector<12x96xf32> to vector<8x64xf32>
    %c11_251 = arith.constant 11 : index
    %c0_252 = arith.constant 0 : index
    %651 = vector.load %arg16[%c11_251, %c0_252] : memref<25x64xf32, #tpu.memory_space<vmem>>, vector<1x64xf32>
    %652 = vector.broadcast %651 : vector<1x64xf32> to vector<8x64xf32>
    %653 = arith.mulf %650, %652 : vector<8x64xf32>
    %654 = vector.extract_strided_slice %605 {offsets = [2, 16], sizes = [8, 64], strides = [1, 1]} : vector<12x96xf32> to vector<8x64xf32>
    %c12_253 = arith.constant 12 : index
    %c0_254 = arith.constant 0 : index
    %655 = vector.load %arg16[%c12_253, %c0_254] : memref<25x64xf32, #tpu.memory_space<vmem>>, vector<1x64xf32>
    %656 = vector.broadcast %655 : vector<1x64xf32> to vector<8x64xf32>
    %657 = arith.mulf %654, %656 : vector<8x64xf32>
    %658 = vector.extract_strided_slice %605 {offsets = [2, 24], sizes = [8, 64], strides = [1, 1]} : vector<12x96xf32> to vector<8x64xf32>
    %c13_255 = arith.constant 13 : index
    %c0_256 = arith.constant 0 : index
    %659 = vector.load %arg16[%c13_255, %c0_256] : memref<25x64xf32, #tpu.memory_space<vmem>>, vector<1x64xf32>
    %660 = vector.broadcast %659 : vector<1x64xf32> to vector<8x64xf32>
    %661 = arith.mulf %658, %660 : vector<8x64xf32>
    %662 = vector.extract_strided_slice %605 {offsets = [2, 32], sizes = [8, 64], strides = [1, 1]} : vector<12x96xf32> to vector<8x64xf32>
    %c14_257 = arith.constant 14 : index
    %c0_258 = arith.constant 0 : index
    %663 = vector.load %arg16[%c14_257, %c0_258] : memref<25x64xf32, #tpu.memory_space<vmem>>, vector<1x64xf32>
    %664 = vector.broadcast %663 : vector<1x64xf32> to vector<8x64xf32>
    %665 = arith.mulf %662, %664 : vector<8x64xf32>
    %666 = vector.extract_strided_slice %605 {offsets = [3, 0], sizes = [8, 64], strides = [1, 1]} : vector<12x96xf32> to vector<8x64xf32>
    %c15_259 = arith.constant 15 : index
    %c0_260 = arith.constant 0 : index
    %667 = vector.load %arg16[%c15_259, %c0_260] : memref<25x64xf32, #tpu.memory_space<vmem>>, vector<1x64xf32>
    %668 = vector.broadcast %667 : vector<1x64xf32> to vector<8x64xf32>
    %669 = arith.mulf %666, %668 : vector<8x64xf32>
    %670 = vector.extract_strided_slice %605 {offsets = [3, 8], sizes = [8, 64], strides = [1, 1]} : vector<12x96xf32> to vector<8x64xf32>
    %c16_261 = arith.constant 16 : index
    %c0_262 = arith.constant 0 : index
    %671 = vector.load %arg16[%c16_261, %c0_262] : memref<25x64xf32, #tpu.memory_space<vmem>>, vector<1x64xf32>
    %672 = vector.broadcast %671 : vector<1x64xf32> to vector<8x64xf32>
    %673 = arith.mulf %670, %672 : vector<8x64xf32>
    %674 = vector.extract_strided_slice %605 {offsets = [3, 16], sizes = [8, 64], strides = [1, 1]} : vector<12x96xf32> to vector<8x64xf32>
    %c17_263 = arith.constant 17 : index
    %c0_264 = arith.constant 0 : index
    %675 = vector.load %arg16[%c17_263, %c0_264] : memref<25x64xf32, #tpu.memory_space<vmem>>, vector<1x64xf32>
    %676 = vector.broadcast %675 : vector<1x64xf32> to vector<8x64xf32>
    %677 = arith.mulf %674, %676 : vector<8x64xf32>
    %678 = vector.extract_strided_slice %605 {offsets = [3, 24], sizes = [8, 64], strides = [1, 1]} : vector<12x96xf32> to vector<8x64xf32>
    %c18_265 = arith.constant 18 : index
    %c0_266 = arith.constant 0 : index
    %679 = vector.load %arg16[%c18_265, %c0_266] : memref<25x64xf32, #tpu.memory_space<vmem>>, vector<1x64xf32>
    %680 = vector.broadcast %679 : vector<1x64xf32> to vector<8x64xf32>
    %681 = arith.mulf %678, %680 : vector<8x64xf32>
    %682 = vector.extract_strided_slice %605 {offsets = [3, 32], sizes = [8, 64], strides = [1, 1]} : vector<12x96xf32> to vector<8x64xf32>
    %c19_267 = arith.constant 19 : index
    %c0_268 = arith.constant 0 : index
    %683 = vector.load %arg16[%c19_267, %c0_268] : memref<25x64xf32, #tpu.memory_space<vmem>>, vector<1x64xf32>
    %684 = vector.broadcast %683 : vector<1x64xf32> to vector<8x64xf32>
    %685 = arith.mulf %682, %684 : vector<8x64xf32>
    %686 = vector.extract_strided_slice %605 {offsets = [4, 0], sizes = [8, 64], strides = [1, 1]} : vector<12x96xf32> to vector<8x64xf32>
    %c20_269 = arith.constant 20 : index
    %c0_270 = arith.constant 0 : index
    %687 = vector.load %arg16[%c20_269, %c0_270] : memref<25x64xf32, #tpu.memory_space<vmem>>, vector<1x64xf32>
    %688 = vector.broadcast %687 : vector<1x64xf32> to vector<8x64xf32>
    %689 = arith.mulf %686, %688 : vector<8x64xf32>
    %690 = vector.extract_strided_slice %605 {offsets = [4, 8], sizes = [8, 64], strides = [1, 1]} : vector<12x96xf32> to vector<8x64xf32>
    %c21_271 = arith.constant 21 : index
    %c0_272 = arith.constant 0 : index
    %691 = vector.load %arg16[%c21_271, %c0_272] : memref<25x64xf32, #tpu.memory_space<vmem>>, vector<1x64xf32>
    %692 = vector.broadcast %691 : vector<1x64xf32> to vector<8x64xf32>
    %693 = arith.mulf %690, %692 : vector<8x64xf32>
    %694 = vector.extract_strided_slice %605 {offsets = [4, 16], sizes = [8, 64], strides = [1, 1]} : vector<12x96xf32> to vector<8x64xf32>
    %c22_273 = arith.constant 22 : index
    %c0_274 = arith.constant 0 : index
    %695 = vector.load %arg16[%c22_273, %c0_274] : memref<25x64xf32, #tpu.memory_space<vmem>>, vector<1x64xf32>
    %696 = vector.broadcast %695 : vector<1x64xf32> to vector<8x64xf32>
    %697 = arith.mulf %694, %696 : vector<8x64xf32>
    %698 = vector.extract_strided_slice %605 {offsets = [4, 24], sizes = [8, 64], strides = [1, 1]} : vector<12x96xf32> to vector<8x64xf32>
    %c23_275 = arith.constant 23 : index
    %c0_276 = arith.constant 0 : index
    %699 = vector.load %arg16[%c23_275, %c0_276] : memref<25x64xf32, #tpu.memory_space<vmem>>, vector<1x64xf32>
    %700 = vector.broadcast %699 : vector<1x64xf32> to vector<8x64xf32>
    %701 = arith.mulf %698, %700 : vector<8x64xf32>
    %702 = vector.extract_strided_slice %605 {offsets = [4, 32], sizes = [8, 64], strides = [1, 1]} : vector<12x96xf32> to vector<8x64xf32>
    %c24_277 = arith.constant 24 : index
    %c0_278 = arith.constant 0 : index
    %703 = vector.load %arg16[%c24_277, %c0_278] : memref<25x64xf32, #tpu.memory_space<vmem>>, vector<1x64xf32>
    %704 = vector.broadcast %703 : vector<1x64xf32> to vector<8x64xf32>
    %705 = arith.mulf %702, %704 : vector<8x64xf32>
    %706 = arith.addf %609, %613 : vector<8x64xf32>
    %707 = arith.addf %617, %621 : vector<8x64xf32>
    %708 = arith.addf %625, %629 : vector<8x64xf32>
    %709 = arith.addf %633, %637 : vector<8x64xf32>
    %710 = arith.addf %641, %645 : vector<8x64xf32>
    %711 = arith.addf %649, %653 : vector<8x64xf32>
    %712 = arith.addf %657, %661 : vector<8x64xf32>
    %713 = arith.addf %665, %669 : vector<8x64xf32>
    %714 = arith.addf %673, %677 : vector<8x64xf32>
    %715 = arith.addf %681, %685 : vector<8x64xf32>
    %716 = arith.addf %689, %693 : vector<8x64xf32>
    %717 = arith.addf %697, %701 : vector<8x64xf32>
    %718 = arith.addf %706, %707 : vector<8x64xf32>
    %719 = arith.addf %708, %709 : vector<8x64xf32>
    %720 = arith.addf %710, %711 : vector<8x64xf32>
    %721 = arith.addf %712, %713 : vector<8x64xf32>
    %722 = arith.addf %714, %715 : vector<8x64xf32>
    %723 = arith.addf %716, %717 : vector<8x64xf32>
    %724 = arith.addf %718, %719 : vector<8x64xf32>
    %725 = arith.addf %720, %721 : vector<8x64xf32>
    %726 = arith.addf %722, %723 : vector<8x64xf32>
    %727 = arith.addf %724, %725 : vector<8x64xf32>
    %728 = arith.addf %726, %705 : vector<8x64xf32>
    %729 = arith.addf %727, %728 : vector<8x64xf32>
    %730 = vector.extract_strided_slice %422 {offsets = [0, 192], sizes = [8, 64], strides = [1, 1]} : vector<8x320xf32> to vector<8x64xf32>
    %cst_279 = arith.constant 0.000000e+00 : f32
    %731 = vector.broadcast %cst_279 : f32 to vector<8x8xf32>
    %732 = tpu.concatenate %731, %730, %731 in 1 : vector<8x8xf32>, vector<8x64xf32>, vector<8x8xf32> -> vector<8x80xf32>
    %cst_280 = arith.constant 0.000000e+00 : f32
    %733 = vector.broadcast %cst_280 : f32 to vector<1x80xf32>
    %734 = tpu.concatenate %733, %732, %733 in 0 : vector<1x80xf32>, vector<8x80xf32>, vector<1x80xf32> -> vector<10x80xf32>
    %735 = vector.extract_strided_slice %734 {offsets = [0, 0], sizes = [8, 64], strides = [1, 1]} : vector<10x80xf32> to vector<8x64xf32>
    %c0_281 = arith.constant 0 : index
    %c0_282 = arith.constant 0 : index
    %736 = vector.load %arg17[%c0_281, %c0_282] : memref<9x64xf32, #tpu.memory_space<vmem>>, vector<1x64xf32>
    %737 = vector.broadcast %736 : vector<1x64xf32> to vector<8x64xf32>
    %738 = arith.mulf %735, %737 : vector<8x64xf32>
    %739 = vector.extract_strided_slice %734 {offsets = [0, 8], sizes = [8, 64], strides = [1, 1]} : vector<10x80xf32> to vector<8x64xf32>
    %c1_283 = arith.constant 1 : index
    %c0_284 = arith.constant 0 : index
    %740 = vector.load %arg17[%c1_283, %c0_284] : memref<9x64xf32, #tpu.memory_space<vmem>>, vector<1x64xf32>
    %741 = vector.broadcast %740 : vector<1x64xf32> to vector<8x64xf32>
    %742 = arith.mulf %739, %741 : vector<8x64xf32>
    %743 = vector.extract_strided_slice %734 {offsets = [0, 16], sizes = [8, 64], strides = [1, 1]} : vector<10x80xf32> to vector<8x64xf32>
    %c2_285 = arith.constant 2 : index
    %c0_286 = arith.constant 0 : index
    %744 = vector.load %arg17[%c2_285, %c0_286] : memref<9x64xf32, #tpu.memory_space<vmem>>, vector<1x64xf32>
    %745 = vector.broadcast %744 : vector<1x64xf32> to vector<8x64xf32>
    %746 = arith.mulf %743, %745 : vector<8x64xf32>
    %747 = vector.extract_strided_slice %734 {offsets = [1, 0], sizes = [8, 64], strides = [1, 1]} : vector<10x80xf32> to vector<8x64xf32>
    %c3_287 = arith.constant 3 : index
    %c0_288 = arith.constant 0 : index
    %748 = vector.load %arg17[%c3_287, %c0_288] : memref<9x64xf32, #tpu.memory_space<vmem>>, vector<1x64xf32>
    %749 = vector.broadcast %748 : vector<1x64xf32> to vector<8x64xf32>
    %750 = arith.mulf %747, %749 : vector<8x64xf32>
    %751 = vector.extract_strided_slice %734 {offsets = [1, 8], sizes = [8, 64], strides = [1, 1]} : vector<10x80xf32> to vector<8x64xf32>
    %c4_289 = arith.constant 4 : index
    %c0_290 = arith.constant 0 : index
    %752 = vector.load %arg17[%c4_289, %c0_290] : memref<9x64xf32, #tpu.memory_space<vmem>>, vector<1x64xf32>
    %753 = vector.broadcast %752 : vector<1x64xf32> to vector<8x64xf32>
    %754 = arith.mulf %751, %753 : vector<8x64xf32>
    %755 = vector.extract_strided_slice %734 {offsets = [1, 16], sizes = [8, 64], strides = [1, 1]} : vector<10x80xf32> to vector<8x64xf32>
    %c5_291 = arith.constant 5 : index
    %c0_292 = arith.constant 0 : index
    %756 = vector.load %arg17[%c5_291, %c0_292] : memref<9x64xf32, #tpu.memory_space<vmem>>, vector<1x64xf32>
    %757 = vector.broadcast %756 : vector<1x64xf32> to vector<8x64xf32>
    %758 = arith.mulf %755, %757 : vector<8x64xf32>
    %759 = vector.extract_strided_slice %734 {offsets = [2, 0], sizes = [8, 64], strides = [1, 1]} : vector<10x80xf32> to vector<8x64xf32>
    %c6_293 = arith.constant 6 : index
    %c0_294 = arith.constant 0 : index
    %760 = vector.load %arg17[%c6_293, %c0_294] : memref<9x64xf32, #tpu.memory_space<vmem>>, vector<1x64xf32>
    %761 = vector.broadcast %760 : vector<1x64xf32> to vector<8x64xf32>
    %762 = arith.mulf %759, %761 : vector<8x64xf32>
    %763 = vector.extract_strided_slice %734 {offsets = [2, 8], sizes = [8, 64], strides = [1, 1]} : vector<10x80xf32> to vector<8x64xf32>
    %c7_295 = arith.constant 7 : index
    %c0_296 = arith.constant 0 : index
    %764 = vector.load %arg17[%c7_295, %c0_296] : memref<9x64xf32, #tpu.memory_space<vmem>>, vector<1x64xf32>
    %765 = vector.broadcast %764 : vector<1x64xf32> to vector<8x64xf32>
    %766 = arith.mulf %763, %765 : vector<8x64xf32>
    %767 = vector.extract_strided_slice %734 {offsets = [2, 16], sizes = [8, 64], strides = [1, 1]} : vector<10x80xf32> to vector<8x64xf32>
    %c8_297 = arith.constant 8 : index
    %c0_298 = arith.constant 0 : index
    %768 = vector.load %arg17[%c8_297, %c0_298] : memref<9x64xf32, #tpu.memory_space<vmem>>, vector<1x64xf32>
    %769 = vector.broadcast %768 : vector<1x64xf32> to vector<8x64xf32>
    %770 = arith.mulf %767, %769 : vector<8x64xf32>
    %771 = arith.addf %738, %742 : vector<8x64xf32>
    %772 = arith.addf %746, %750 : vector<8x64xf32>
    %773 = arith.addf %754, %758 : vector<8x64xf32>
    %774 = arith.addf %762, %766 : vector<8x64xf32>
    %775 = arith.addf %771, %772 : vector<8x64xf32>
    %776 = arith.addf %773, %774 : vector<8x64xf32>
    %777 = arith.addf %775, %776 : vector<8x64xf32>
    %778 = arith.addf %777, %770 : vector<8x64xf32>
    %779 = vector.extract_strided_slice %422 {offsets = [0, 256], sizes = [8, 64], strides = [1, 1]} : vector<8x320xf32> to vector<8x64xf32>
    %cst_299 = arith.constant 0.000000e+00 : f32
    %780 = vector.broadcast %cst_299 : f32 to vector<8x8xf32>
    %781 = tpu.concatenate %780, %779, %780 in 1 : vector<8x8xf32>, vector<8x64xf32>, vector<8x8xf32> -> vector<8x80xf32>
    %cst_300 = arith.constant 0.000000e+00 : f32
    %782 = vector.broadcast %cst_300 : f32 to vector<1x80xf32>
    %783 = tpu.concatenate %782, %781, %782 in 0 : vector<1x80xf32>, vector<8x80xf32>, vector<1x80xf32> -> vector<10x80xf32>
    %784 = vector.extract_strided_slice %783 {offsets = [0, 0], sizes = [8, 64], strides = [1, 1]} : vector<10x80xf32> to vector<8x64xf32>
    %c0_301 = arith.constant 0 : index
    %c0_302 = arith.constant 0 : index
    %785 = vector.load %arg18[%c0_301, %c0_302] : memref<9x64xf32, #tpu.memory_space<vmem>>, vector<1x64xf32>
    %786 = vector.broadcast %785 : vector<1x64xf32> to vector<8x64xf32>
    %787 = arith.mulf %784, %786 : vector<8x64xf32>
    %788 = vector.extract_strided_slice %783 {offsets = [0, 8], sizes = [8, 64], strides = [1, 1]} : vector<10x80xf32> to vector<8x64xf32>
    %c1_303 = arith.constant 1 : index
    %c0_304 = arith.constant 0 : index
    %789 = vector.load %arg18[%c1_303, %c0_304] : memref<9x64xf32, #tpu.memory_space<vmem>>, vector<1x64xf32>
    %790 = vector.broadcast %789 : vector<1x64xf32> to vector<8x64xf32>
    %791 = arith.mulf %788, %790 : vector<8x64xf32>
    %792 = vector.extract_strided_slice %783 {offsets = [0, 16], sizes = [8, 64], strides = [1, 1]} : vector<10x80xf32> to vector<8x64xf32>
    %c2_305 = arith.constant 2 : index
    %c0_306 = arith.constant 0 : index
    %793 = vector.load %arg18[%c2_305, %c0_306] : memref<9x64xf32, #tpu.memory_space<vmem>>, vector<1x64xf32>
    %794 = vector.broadcast %793 : vector<1x64xf32> to vector<8x64xf32>
    %795 = arith.mulf %792, %794 : vector<8x64xf32>
    %796 = vector.extract_strided_slice %783 {offsets = [1, 0], sizes = [8, 64], strides = [1, 1]} : vector<10x80xf32> to vector<8x64xf32>
    %c3_307 = arith.constant 3 : index
    %c0_308 = arith.constant 0 : index
    %797 = vector.load %arg18[%c3_307, %c0_308] : memref<9x64xf32, #tpu.memory_space<vmem>>, vector<1x64xf32>
    %798 = vector.broadcast %797 : vector<1x64xf32> to vector<8x64xf32>
    %799 = arith.mulf %796, %798 : vector<8x64xf32>
    %800 = vector.extract_strided_slice %783 {offsets = [1, 8], sizes = [8, 64], strides = [1, 1]} : vector<10x80xf32> to vector<8x64xf32>
    %c4_309 = arith.constant 4 : index
    %c0_310 = arith.constant 0 : index
    %801 = vector.load %arg18[%c4_309, %c0_310] : memref<9x64xf32, #tpu.memory_space<vmem>>, vector<1x64xf32>
    %802 = vector.broadcast %801 : vector<1x64xf32> to vector<8x64xf32>
    %803 = arith.mulf %800, %802 : vector<8x64xf32>
    %804 = vector.extract_strided_slice %783 {offsets = [1, 16], sizes = [8, 64], strides = [1, 1]} : vector<10x80xf32> to vector<8x64xf32>
    %c5_311 = arith.constant 5 : index
    %c0_312 = arith.constant 0 : index
    %805 = vector.load %arg18[%c5_311, %c0_312] : memref<9x64xf32, #tpu.memory_space<vmem>>, vector<1x64xf32>
    %806 = vector.broadcast %805 : vector<1x64xf32> to vector<8x64xf32>
    %807 = arith.mulf %804, %806 : vector<8x64xf32>
    %808 = vector.extract_strided_slice %783 {offsets = [2, 0], sizes = [8, 64], strides = [1, 1]} : vector<10x80xf32> to vector<8x64xf32>
    %c6_313 = arith.constant 6 : index
    %c0_314 = arith.constant 0 : index
    %809 = vector.load %arg18[%c6_313, %c0_314] : memref<9x64xf32, #tpu.memory_space<vmem>>, vector<1x64xf32>
    %810 = vector.broadcast %809 : vector<1x64xf32> to vector<8x64xf32>
    %811 = arith.mulf %808, %810 : vector<8x64xf32>
    %812 = vector.extract_strided_slice %783 {offsets = [2, 8], sizes = [8, 64], strides = [1, 1]} : vector<10x80xf32> to vector<8x64xf32>
    %c7_315 = arith.constant 7 : index
    %c0_316 = arith.constant 0 : index
    %813 = vector.load %arg18[%c7_315, %c0_316] : memref<9x64xf32, #tpu.memory_space<vmem>>, vector<1x64xf32>
    %814 = vector.broadcast %813 : vector<1x64xf32> to vector<8x64xf32>
    %815 = arith.mulf %812, %814 : vector<8x64xf32>
    %816 = vector.extract_strided_slice %783 {offsets = [2, 16], sizes = [8, 64], strides = [1, 1]} : vector<10x80xf32> to vector<8x64xf32>
    %c8_317 = arith.constant 8 : index
    %c0_318 = arith.constant 0 : index
    %817 = vector.load %arg18[%c8_317, %c0_318] : memref<9x64xf32, #tpu.memory_space<vmem>>, vector<1x64xf32>
    %818 = vector.broadcast %817 : vector<1x64xf32> to vector<8x64xf32>
    %819 = arith.mulf %816, %818 : vector<8x64xf32>
    %820 = arith.addf %787, %791 : vector<8x64xf32>
    %821 = arith.addf %795, %799 : vector<8x64xf32>
    %822 = arith.addf %803, %807 : vector<8x64xf32>
    %823 = arith.addf %811, %815 : vector<8x64xf32>
    %824 = arith.addf %820, %821 : vector<8x64xf32>
    %825 = arith.addf %822, %823 : vector<8x64xf32>
    %826 = arith.addf %824, %825 : vector<8x64xf32>
    %827 = arith.addf %826, %819 : vector<8x64xf32>
    %828 = tpu.concatenate %551, %600, %729, %778, %827 in 1 : vector<8x64xf32>, vector<8x64xf32>, vector<8x64xf32>, vector<8x64xf32>, vector<8x64xf32> -> vector<8x320xf32>
    %c0_319 = arith.constant 0 : index
    %c0_320 = arith.constant 0 : index
    %829 = vector.load %arg7[%c0_319, %c0_320] : memref<320x320xf32, #tpu.memory_space<vmem>>, vector<320x320xf32>
    %cst_321 = arith.constant dense<0.000000e+00> : vector<8x320xf32>
    %830 = tpu.matmul %828, %829, %cst_321 {dimension_numbers = #tpu.dot_dimension_numbers<[1], [0], [0], [1], [0, 0, 1, 1], [], []>} : vector<8x320xf32>, vector<320x320xf32>, vector<8x320xf32> -> vector<8x320xf32>
    %c0_322 = arith.constant 0 : index
    %c0_323 = arith.constant 0 : index
    %831 = vector.load %arg8[%c0_322, %c0_323] : memref<1x320xf32, #tpu.memory_space<vmem>>, vector<1x320xf32>
    %832 = vector.broadcast %831 : vector<1x320xf32> to vector<8x320xf32>
    %833 = arith.addf %830, %832 : vector<8x320xf32>
    %834 = vector.extract_strided_slice %833 {offsets = [0, 0], sizes = [8, 64], strides = [1, 1]} : vector<8x320xf32> to vector<8x64xf32>
    %835 = vector.extract_strided_slice %833 {offsets = [0, 64], sizes = [8, 64], strides = [1, 1]} : vector<8x320xf32> to vector<8x64xf32>
    %836 = vector.extract_strided_slice %833 {offsets = [0, 128], sizes = [8, 64], strides = [1, 1]} : vector<8x320xf32> to vector<8x64xf32>
    %837 = vector.extract_strided_slice %833 {offsets = [0, 192], sizes = [8, 64], strides = [1, 1]} : vector<8x320xf32> to vector<8x64xf32>
    %838 = vector.extract_strided_slice %833 {offsets = [0, 256], sizes = [8, 64], strides = [1, 1]} : vector<8x320xf32> to vector<8x64xf32>
    %cst_324 = arith.constant 0.000000e+00 : f32
    %839 = vector.broadcast %cst_324 : f32 to vector<8x8xf32>
    %840 = tpu.concatenate %839, %9, %839 in 1 : vector<8x8xf32>, vector<8x64xf32>, vector<8x8xf32> -> vector<8x80xf32>
    %cst_325 = arith.constant 0.000000e+00 : f32
    %841 = vector.broadcast %cst_325 : f32 to vector<1x80xf32>
    %842 = tpu.concatenate %841, %840, %841 in 0 : vector<1x80xf32>, vector<8x80xf32>, vector<1x80xf32> -> vector<10x80xf32>
    %843 = vector.extract_strided_slice %842 {offsets = [0, 0], sizes = [8, 64], strides = [1, 1]} : vector<10x80xf32> to vector<8x64xf32>
    %844 = vector.extract_strided_slice %842 {offsets = [0, 8], sizes = [8, 64], strides = [1, 1]} : vector<10x80xf32> to vector<8x64xf32>
    %845 = vector.extract_strided_slice %842 {offsets = [0, 16], sizes = [8, 64], strides = [1, 1]} : vector<10x80xf32> to vector<8x64xf32>
    %846 = vector.extract_strided_slice %842 {offsets = [1, 0], sizes = [8, 64], strides = [1, 1]} : vector<10x80xf32> to vector<8x64xf32>
    %847 = vector.extract_strided_slice %842 {offsets = [1, 8], sizes = [8, 64], strides = [1, 1]} : vector<10x80xf32> to vector<8x64xf32>
    %848 = vector.extract_strided_slice %842 {offsets = [1, 16], sizes = [8, 64], strides = [1, 1]} : vector<10x80xf32> to vector<8x64xf32>
    %849 = vector.extract_strided_slice %842 {offsets = [2, 0], sizes = [8, 64], strides = [1, 1]} : vector<10x80xf32> to vector<8x64xf32>
    %850 = vector.extract_strided_slice %842 {offsets = [2, 8], sizes = [8, 64], strides = [1, 1]} : vector<10x80xf32> to vector<8x64xf32>
    %851 = vector.extract_strided_slice %842 {offsets = [2, 16], sizes = [8, 64], strides = [1, 1]} : vector<10x80xf32> to vector<8x64xf32>
    %852 = arith.addf %843, %844 : vector<8x64xf32>
    %853 = arith.addf %845, %846 : vector<8x64xf32>
    %854 = arith.addf %847, %848 : vector<8x64xf32>
    %855 = arith.addf %849, %850 : vector<8x64xf32>
    %856 = arith.addf %852, %853 : vector<8x64xf32>
    %857 = arith.addf %854, %855 : vector<8x64xf32>
    %858 = arith.addf %856, %857 : vector<8x64xf32>
    %859 = arith.addf %858, %851 : vector<8x64xf32>
    %c0_326 = arith.constant 0 : index
    %c0_327 = arith.constant 0 : index
    %860 = vector.load %arg2[%c0_326, %c0_327] : memref<8x64xf32, #tpu.memory_space<vmem>>, vector<8x64xf32>
    %861 = arith.mulf %859, %860 : vector<8x64xf32>
    %cst_328 = arith.constant 0.000000e+00 : f32
    %862 = vector.broadcast %cst_328 : f32 to vector<8x8xf32>
    %863 = tpu.concatenate %862, %10, %862 in 1 : vector<8x8xf32>, vector<8x64xf32>, vector<8x8xf32> -> vector<8x80xf32>
    %cst_329 = arith.constant 0.000000e+00 : f32
    %864 = vector.broadcast %cst_329 : f32 to vector<1x80xf32>
    %865 = tpu.concatenate %864, %863, %864 in 0 : vector<1x80xf32>, vector<8x80xf32>, vector<1x80xf32> -> vector<10x80xf32>
    %866 = vector.extract_strided_slice %865 {offsets = [0, 0], sizes = [8, 64], strides = [1, 1]} : vector<10x80xf32> to vector<8x64xf32>
    %867 = vector.extract_strided_slice %865 {offsets = [0, 8], sizes = [8, 64], strides = [1, 1]} : vector<10x80xf32> to vector<8x64xf32>
    %868 = vector.extract_strided_slice %865 {offsets = [0, 16], sizes = [8, 64], strides = [1, 1]} : vector<10x80xf32> to vector<8x64xf32>
    %869 = vector.extract_strided_slice %865 {offsets = [1, 0], sizes = [8, 64], strides = [1, 1]} : vector<10x80xf32> to vector<8x64xf32>
    %870 = vector.extract_strided_slice %865 {offsets = [1, 8], sizes = [8, 64], strides = [1, 1]} : vector<10x80xf32> to vector<8x64xf32>
    %871 = vector.extract_strided_slice %865 {offsets = [1, 16], sizes = [8, 64], strides = [1, 1]} : vector<10x80xf32> to vector<8x64xf32>
    %872 = vector.extract_strided_slice %865 {offsets = [2, 0], sizes = [8, 64], strides = [1, 1]} : vector<10x80xf32> to vector<8x64xf32>
    %873 = vector.extract_strided_slice %865 {offsets = [2, 8], sizes = [8, 64], strides = [1, 1]} : vector<10x80xf32> to vector<8x64xf32>
    %874 = vector.extract_strided_slice %865 {offsets = [2, 16], sizes = [8, 64], strides = [1, 1]} : vector<10x80xf32> to vector<8x64xf32>
    %875 = arith.addf %866, %867 : vector<8x64xf32>
    %876 = arith.addf %868, %869 : vector<8x64xf32>
    %877 = arith.addf %870, %871 : vector<8x64xf32>
    %878 = arith.addf %872, %873 : vector<8x64xf32>
    %879 = arith.addf %875, %876 : vector<8x64xf32>
    %880 = arith.addf %877, %878 : vector<8x64xf32>
    %881 = arith.addf %879, %880 : vector<8x64xf32>
    %882 = arith.addf %881, %874 : vector<8x64xf32>
    %c0_330 = arith.constant 0 : index
    %c0_331 = arith.constant 0 : index
    %883 = vector.load %arg2[%c0_330, %c0_331] : memref<8x64xf32, #tpu.memory_space<vmem>>, vector<8x64xf32>
    %884 = arith.mulf %882, %883 : vector<8x64xf32>
    %885 = arith.addf %834, %835 : vector<8x64xf32>
    %886 = arith.addf %836, %837 : vector<8x64xf32>
    %887 = arith.addf %861, %10 : vector<8x64xf32>
    %cst_332 = arith.constant 2.000000e+00 : f32
    %888 = vector.broadcast %cst_332 : f32 to vector<8x64xf32>
    %889 = arith.mulf %888, %884 : vector<8x64xf32>
    %890 = arith.addf %838, %9 : vector<8x64xf32>
    %891 = tpu.concatenate %10, %885, %886, %887, %889, %890 in 1 : vector<8x64xf32>, vector<8x64xf32>, vector<8x64xf32>, vector<8x64xf32>, vector<8x64xf32>, vector<8x64xf32> -> vector<8x384xf32>
    %c0_333 = arith.constant 0 : index
    %c0_334 = arith.constant 0 : index
    %c0_335 = arith.constant 0 : index
    %892 = vector.load %arg19[%c0_333, %c0_334, %c0_335] : memref<1x8x384xf32, #tpu.memory_space<vmem>>, vector<1x8x384xf32>
    %893 = vector.shape_cast %892 : vector<1x8x384xf32> to vector<8x384xf32>
    %894 = vector.shape_cast %891 : vector<8x384xf32> to vector<1x8x384xf32>
    tpu.vector_store %arg19[%c0_333, %c0_334, %c0_335], %894 {strides = array<i32>} : memref<1x8x384xf32, #tpu.memory_space<vmem>>, vector<1x8x384xf32>,
    return
  }
  func.func @transform_0(%arg0: i32) -> (i32, i32, i32) {
    %c0_i32 = arith.constant 0 : i32
    %c0_i32_0 = arith.constant 0 : i32
    %c0_i32_1 = arith.constant 0 : i32
    return %arg0, %c0_i32, %c0_i32_0 : i32, i32, i32
  }
  func.func @transform_1(%arg0: i32) -> (i32, i32) {
    %c0_i32 = arith.constant 0 : i32
    %c0_i32_0 = arith.constant 0 : i32
    %c0_i32_1 = arith.constant 0 : i32
    return %c0_i32, %c0_i32_0 : i32, i32
  }
  func.func @transform_2(%arg0: i32) -> (i32, i32) {
    %c0_i32 = arith.constant 0 : i32
    %c0_i32_0 = arith.constant 0 : i32
    %c0_i32_1 = arith.constant 0 : i32
    return %c0_i32, %c0_i32_0 : i32, i32
  }
  func.func @transform_3(%arg0: i32) -> (i32, i32) {
    %c0_i32 = arith.constant 0 : i32
    %c0_i32_0 = arith.constant 0 : i32
    %c0_i32_1 = arith.constant 0 : i32
    return %c0_i32, %c0_i32_0 : i32, i32
  }
  func.func @transform_4(%arg0: i32) -> (i32, i32) {
    %c0_i32 = arith.constant 0 : i32
    %c0_i32_0 = arith.constant 0 : i32
    %c0_i32_1 = arith.constant 0 : i32
    return %c0_i32, %c0_i32_0 : i32, i32
  }
  func.func @transform_5(%arg0: i32) -> (i32, i32) {
    %c0_i32 = arith.constant 0 : i32
    %c0_i32_0 = arith.constant 0 : i32
    %c0_i32_1 = arith.constant 0 : i32
    return %c0_i32, %c0_i32_0 : i32, i32
  }
  func.func @transform_6(%arg0: i32) -> (i32, i32) {
    %c0_i32 = arith.constant 0 : i32
    %c0_i32_0 = arith.constant 0 : i32
    %c0_i32_1 = arith.constant 0 : i32
    return %c0_i32, %c0_i32_0 : i32, i32
  }
  func.func @transform_7(%arg0: i32) -> (i32, i32) {
    %c0_i32 = arith.constant 0 : i32
    %c0_i32_0 = arith.constant 0 : i32
    %c0_i32_1 = arith.constant 0 : i32
    return %c0_i32, %c0_i32_0 : i32, i32
  }
  func.func @transform_8(%arg0: i32) -> (i32, i32) {
    %c0_i32 = arith.constant 0 : i32
    %c0_i32_0 = arith.constant 0 : i32
    %c0_i32_1 = arith.constant 0 : i32
    return %c0_i32, %c0_i32_0 : i32, i32
  }
  func.func @transform_9(%arg0: i32) -> (i32, i32) {
    %c0_i32 = arith.constant 0 : i32
    %c0_i32_0 = arith.constant 0 : i32
    %c0_i32_1 = arith.constant 0 : i32
    return %c0_i32, %c0_i32_0 : i32, i32
  }
  func.func @transform_10(%arg0: i32) -> (i32, i32) {
    %c0_i32 = arith.constant 0 : i32
    %c0_i32_0 = arith.constant 0 : i32
    %c0_i32_1 = arith.constant 0 : i32
    return %c0_i32, %c0_i32_0 : i32, i32
  }
  func.func @transform_11(%arg0: i32) -> (i32, i32) {
    %c0_i32 = arith.constant 0 : i32
    %c0_i32_0 = arith.constant 0 : i32
    %c0_i32_1 = arith.constant 0 : i32
    return %c0_i32, %c0_i32_0 : i32, i32
  }
  func.func @transform_12(%arg0: i32) -> (i32, i32) {
    %c0_i32 = arith.constant 0 : i32
    %c0_i32_0 = arith.constant 0 : i32
    %c0_i32_1 = arith.constant 0 : i32
    return %c0_i32, %c0_i32_0 : i32, i32
  }
  func.func @transform_13(%arg0: i32) -> (i32, i32) {
    %c0_i32 = arith.constant 0 : i32
    %c0_i32_0 = arith.constant 0 : i32
    %c0_i32_1 = arith.constant 0 : i32
    return %c0_i32, %c0_i32_0 : i32, i32
  }
  func.func @transform_14(%arg0: i32) -> (i32, i32) {
    %c0_i32 = arith.constant 0 : i32
    %c0_i32_0 = arith.constant 0 : i32
    %c0_i32_1 = arith.constant 0 : i32
    return %c0_i32, %c0_i32_0 : i32, i32
  }
  func.func @transform_15(%arg0: i32) -> (i32, i32) {
    %c0_i32 = arith.constant 0 : i32
    %c0_i32_0 = arith.constant 0 : i32
    %c0_i32_1 = arith.constant 0 : i32
    return %c0_i32, %c0_i32_0 : i32, i32
  }
  func.func @transform_16(%arg0: i32) -> (i32, i32) {
    %c0_i32 = arith.constant 0 : i32
    %c0_i32_0 = arith.constant 0 : i32
    %c0_i32_1 = arith.constant 0 : i32
    return %c0_i32, %c0_i32_0 : i32, i32
  }
  func.func @transform_17(%arg0: i32) -> (i32, i32) {
    %c0_i32 = arith.constant 0 : i32
    %c0_i32_0 = arith.constant 0 : i32
    %c0_i32_1 = arith.constant 0 : i32
    return %c0_i32, %c0_i32_0 : i32, i32
  }
  func.func @transform_18(%arg0: i32) -> (i32, i32, i32) {
    %c0_i32 = arith.constant 0 : i32
    %c0_i32_0 = arith.constant 0 : i32
    %c0_i32_1 = arith.constant 0 : i32
    return %arg0, %c0_i32, %c0_i32_0 : i32, i32, i32
  }
}

</mosaic_0001>

<llo_original>
// kernel: tile.90
$region0: #{tile.90}
  #allocation0 [shape = 's32[1]{0}', space=sflag, size = 0x4, scoped, tag = 'scoped memory for tile.90']
  %s0 = inlined_call_operand.vmem [shape: f32[8], index: 0, kind: input, shape index: {}]
  %s1 = inlined_call_operand.vmem [shape: f32[8,8], index: 1, kind: output, shape index: {}]
  // Predicated region
  $region2: #{tile.90} parent=0 // pred_check
    _
  $region3: #{tile.90} parent=0 // pred_check_branch
    %3 = sbr.rel (0) target = $region5
  $region4: #{tile.90} parent=0 // pred_region
    _
  $region5: #{tile.90} parent=0 // pred_fallthru
    _
  %v4 = vld [vmem:[%s0] ss:$0 sm:$0xff]
  %5 = vst [vmem:[%s1] sm:$0xff] %v4

// kernel: tile.91
$region0: #{tile.91}
  %s0 = inlined_call_operand.vmem [shape: f32[8,8], index: 0, kind: input, shape index: {}]
  %s1 = inlined_call_operand.vmem [shape: f32[64], index: 1, kind: output, shape index: {}]
  $region1: #{tile.91} parent=0
    #allocation0 [shape = 'u8[4096]{0}', space=vmem, size = 0x1000, scoped, tag = 'scoped mem for output reshape']
    %v2 = vld [vmem:[%s0] sm:$0x1]
    %vm3 = vcmask 64512
    %4 = vst.msk [vmem:[#allocation0] sm:$0x1] %vm3, %v2
    %s5 = scalar_lea.vmem %s0, 7
    %v6 = vld [vmem:[%s5] sm:$0x1]
    %7 = vrot.lane.b32.xlu0 %v6, 56
    %v8 = vpop.permute.xlu0 %7
    %vm9 = vcmask 523712
    %10 = vst.msk [vmem:[#allocation0] sm:$0x1] %vm9, %v8
    %s11 = scalar_lea.vmem %s0, 6
    %v12 = vld [vmem:[%s11] sm:$0x1]
    %13 = vrot.lane.b32.xlu0 %v12, 48
    %v14 = vpop.permute.xlu0 %13
    %vm15 = vcmask 458112
    %16 = vst.msk [vmem:[#allocation0] sm:$0x1] %vm15, %v14
    %s17 = scalar_lea.vmem %s0, 5
    %v18 = vld [vmem:[%s17] sm:$0x1]
    %19 = vrot.lane.b32.xlu0 %v18, 40
    %v20 = vpop.permute.xlu0 %19
    %vm21 = vcmask 392512
    %22 = vst.msk [vmem:[#allocation0] sm:$0x1] %vm21, %v20
    %s23 = scalar_lea.vmem %s0, 4
    %v24 = vld [vmem:[%s23] sm:$0x1]
    %25 = vrot.lane.b32.xlu0 %v24, 32
    %v26 = vpop.permute.xlu0 %25
    %vm27 = vcmask 326912
    %28 = vst.msk [vmem:[#allocation0] sm:$0x1] %vm27, %v26
    %s29 = scalar_lea.vmem %s0, 3
    %v30 = vld [vmem:[%s29] sm:$0x1]
    %31 = vrot.lane.b32.xlu0 %v30, 24
    %v32 = vpop.permute.xlu0 %31
    %vm33 = vcmask 261312
    %34 = vst.msk [vmem:[#allocation0] sm:$0x1] %vm33, %v32
    %s35 = scalar_lea.vmem %s0, 2
    %v36 = vld [vmem:[%s35] sm:$0x1]
    %37 = vrot.lane.b32.xlu0 %v36, 16
    %v38 = vpop.permute.xlu0 %37
    %vm39 = vcmask 195712
    %40 = vst.msk [vmem:[#allocation0] sm:$0x1] %vm39, %v38
    %s41 = scalar_lea.vmem %s0, 1
    %v42 = vld [vmem:[%s41] sm:$0x1]
    %43 = vrot.lane.b32.xlu0 %v42, 8
    %v44 = vpop.permute.xlu0 %43
    %vm45 = vcmask 130112
    %46 = vst.msk [vmem:[#allocation0] sm:$0x1] %vm45, %v44
    %s48 = sshllo.u32 0, 1
    %v50 = vld [vmem:[#allocation0] sm:%s48]
    %s51 = sshllo.u32 0, 1
    %52 = vst [vmem:[%s1] sm:%s51] %v50

// kernel: tile.143
$region0: #{tile.143}
  %s0 = inlined_call_operand.vmem [shape: f32[9,8,8], index: 0, kind: input, shape index: {}]
  %s1 = inlined_call_operand.vmem [shape: f32[9,64], index: 1, kind: output, shape index: {}]
  %v2 = vld [vmem:[%s0] ss:$8 sm:$0xf]
  %v3 = vld [vmem:[%s0] ss:$8 sm:$0xf0]
  %vm4 = vcmask 1047556
  %v5 = vsel %vm4, %v3, %v2
  %vm6 = vcmask 64512
  %7 = vst.msk [vmem:[%s1] sm:$0xff] %vm6, %v5
  %s8 = scalar_lea.vmem %s0, 64
  %v9 = vld [vmem:[%s8] sm:$0x1]
  %vm10 = vcmask 64512
  %s11 = scalar_lea.vmem %s1, 8
  %12 = vst.msk [vmem:[%s11] sm:$0x1] %vm10, %v9
  %s13 = scalar_lea.vmem %s0, 7
  %v14 = vld [vmem:[%s13] ss:$8 sm:$0xf]
  %s15 = scalar_lea.vmem %s0, 7
  %v16 = vld [vmem:[%s15] ss:$8 sm:$0xf0]
  %vm17 = vcmask 1047556
  %v18 = vsel %vm17, %v16, %v14
  %19 = vrot.lane.b32.xlu0 %v18, 56
  %v20 = vpop.permute.xlu0 %19
  %vm21 = vcmask 523712
  %22 = vst.msk [vmem:[%s1] sm:$0xff] %vm21, %v20
  %s23 = scalar_lea.vmem %s0, 71
  %v24 = vld [vmem:[%s23] sm:$0x1]
  %25 = vrot.lane.b32.xlu0 %v24, 56
  %v26 = vpop.permute.xlu0 %25
  %vm27 = vcmask 523712
  %s28 = scalar_lea.vmem %s1, 8
  %29 = vst.msk [vmem:[%s28] sm:$0x1] %vm27, %v26
  %s30 = scalar_lea.vmem %s0, 6
  %v31 = vld [vmem:[%s30] ss:$8 sm:$0xf]
  %s32 = scalar_lea.vmem %s0, 6
  %v33 = vld [vmem:[%s32] ss:$8 sm:$0xf0]
  %vm34 = vcmask 1047556
  %v35 = vsel %vm34, %v33, %v31
  %36 = vrot.lane.b32.xlu0 %v35, 48
  %v37 = vpop.permute.xlu0 %36
  %vm38 = vcmask 458112
  %39 = vst.msk [vmem:[%s1] sm:$0xff] %vm38, %v37
  %s40 = scalar_lea.vmem %s0, 70
  %v41 = vld [vmem:[%s40] sm:$0x1]
  %42 = vrot.lane.b32.xlu0 %v41, 48
  %v43 = vpop.permute.xlu0 %42
  %vm44 = vcmask 458112
  %s45 = scalar_lea.vmem %s1, 8
  %46 = vst.msk [vmem:[%s45] sm:$0x1] %vm44, %v43
  %s47 = scalar_lea.vmem %s0, 5
  %v48 = vld [vmem:[%s47] ss:$8 sm:$0xf]
  %s49 = scalar_lea.vmem %s0, 5
  %v50 = vld [vmem:[%s49] ss:$8 sm:$0xf0]
  %vm51 = vcmask 1047556
  %v52 = vsel %vm51, %v50, %v48
  %53 = vrot.lane.b32.xlu0 %v52, 40
  %v54 = vpop.permute.xlu0 %53
  %vm55 = vcmask 392512
  %56 = vst.msk [vmem:[%s1] sm:$0xff] %vm55, %v54
  %s57 = scalar_lea.vmem %s0, 69
  %v58 = vld [vmem:[%s57] sm:$0x1]
  %59 = vrot.lane.b32.xlu0 %v58, 40
  %v60 = vpop.permute.xlu0 %59
  %vm61 = vcmask 392512
  %s62 = scalar_lea.vmem %s1, 8
  %63 = vst.msk [vmem:[%s62] sm:$0x1] %vm61, %v60
  %s64 = scalar_lea.vmem %s0, 4
  %v65 = vld [vmem:[%s64] ss:$8 sm:$0xf]
  %s66 = scalar_lea.vmem %s0, 4
  %v67 = vld [vmem:[%s66] ss:$8 sm:$0xf0]
  %vm68 = vcmask 1047556
  %v69 = vsel %vm68, %v67, %v65
  %70 = vrot.lane.b32.xlu0 %v69, 32
  %v71 = vpop.permute.xlu0 %70
  %vm72 = vcmask 326912
  %73 = vst.msk [vmem:[%s1] sm:$0xff] %vm72, %v71
  %s74 = scalar_lea.vmem %s0, 68
  %v75 = vld [vmem:[%s74] sm:$0x1]
  %76 = vrot.lane.b32.xlu0 %v75, 32
  %v77 = vpop.permute.xlu0 %76
  %vm78 = vcmask 326912
  %s79 = scalar_lea.vmem %s1, 8
  %80 = vst.msk [vmem:[%s79] sm:$0x1] %vm78, %v77
  %s81 = scalar_lea.vmem %s0, 3
  %v82 = vld [vmem:[%s81] ss:$8 sm:$0xf]
  %s83 = scalar_lea.vmem %s0, 3
  %v84 = vld [vmem:[%s83] ss:$8 sm:$0xf0]
  %vm85 = vcmask 1047556
  %v86 = vsel %vm85, %v84, %v82
  %87 = vrot.lane.b32.xlu0 %v86, 24
  %v88 = vpop.permute.xlu0 %87
  %vm89 = vcmask 261312
  %90 = vst.msk [vmem:[%s1] sm:$0xff] %vm89, %v88
  %s91 = scalar_lea.vmem %s0, 67
  %v92 = vld [vmem:[%s91] sm:$0x1]
  %93 = vrot.lane.b32.xlu0 %v92, 24
  %v94 = vpop.permute.xlu0 %93
  %vm95 = vcmask 261312
  %s96 = scalar_lea.vmem %s1, 8
  %97 = vst.msk [vmem:[%s96] sm:$0x1] %vm95, %v94
  %s98 = scalar_lea.vmem %s0, 2
  %v99 = vld [vmem:[%s98] ss:$8 sm:$0xf]
  %s100 = scalar_lea.vmem %s0, 2
  %v101 = vld [vmem:[%s100] ss:$8 sm:$0xf0]
  %vm102 = vcmask 1047556
  %v103 = vsel %vm102, %v101, %v99
  %104 = vrot.lane.b32.xlu0 %v103, 16
  %v105 = vpop.permute.xlu0 %104
  %vm106 = vcmask 195712
  %107 = vst.msk [vmem:[%s1] sm:$0xff] %vm106, %v105
  %s108 = scalar_lea.vmem %s0, 66
  %v109 = vld [vmem:[%s108] sm:$0x1]
  %110 = vrot.lane.b32.xlu0 %v109, 16
  %v111 = vpop.permute.xlu0 %110
  %vm112 = vcmask 195712
  %s113 = scalar_lea.vmem %s1, 8
  %114 = vst.msk [vmem:[%s113] sm:$0x1] %vm112, %v111
  %s115 = scalar_lea.vmem %s0, 1
  %v116 = vld [vmem:[%s115] ss:$8 sm:$0xf]
  %s117 = scalar_lea.vmem %s0, 1
  %v118 = vld [vmem:[%s117] ss:$8 sm:$0xf0]
  %vm119 = vcmask 1047556
  %v120 = vsel %vm119, %v118, %v116
  %121 = vrot.lane.b32.xlu0 %v120, 8
  %v122 = vpop.permute.xlu0 %121
  %vm123 = vcmask 130112
  %124 = vst.msk [vmem:[%s1] sm:$0xff] %vm123, %v122
  %s125 = scalar_lea.vmem %s0, 65
  %v126 = vld [vmem:[%s125] sm:$0x1]
  %127 = vrot.lane.b32.xlu0 %v126, 8
  %v128 = vpop.permute.xlu0 %127
  %vm129 = vcmask 130112
  %s130 = scalar_lea.vmem %s1, 8
  %131 = vst.msk [vmem:[%s130] sm:$0x1] %vm129, %v128

// kernel: first_cell_forward.1
$region0: #{first_cell_forward.1}
  #allocation0 [shape = 'u32[]', space=smem, size = 0x4, offset = 0x4, fixed_abs, tag = 'smem constant byte address 0x4 - core index']
  #allocation1 [shape = 'u32[144,128]{1,0:T(1,128)}', space=vmem, size = 0x12000, scoped, tag = 'internal scratch']
  %s0 = inlined_call_operand.vmem [shape: f32[2,8,192], index: 0, kind: input, shape index: {}]
  %s1 = inlined_call_operand.vmem [shape: f32[8,64], index: 1, kind: input, shape index: {}]
  %s2 = inlined_call_operand.vmem [shape: f32[192,128], index: 2, kind: input, shape index: {}]
  %s3 = inlined_call_operand.vmem [shape: f32[1,128], index: 3, kind: input, shape index: {}]
  %s4 = inlined_call_operand.vmem [shape: f32[320,320], index: 4, kind: input, shape index: {}]
  %s5 = inlined_call_operand.vmem [shape: f32[1,320], index: 5, kind: input, shape index: {}]
  %s6 = inlined_call_operand.vmem [shape: f32[320,320], index: 6, kind: input, shape index: {}]
  %s7 = inlined_call_operand.vmem [shape: f32[1,320], index: 7, kind: input, shape index: {}]
  %s8 = inlined_call_operand.vmem [shape: f32[25,64], index: 8, kind: input, shape index: {}]
  %s9 = inlined_call_operand.vmem [shape: f32[9,64], index: 9, kind: input, shape index: {}]
  %s10 = inlined_call_operand.vmem [shape: f32[25,64], index: 10, kind: input, shape index: {}]
  %s11 = inlined_call_operand.vmem [shape: f32[9,64], index: 11, kind: input, shape index: {}]
  %s12 = inlined_call_operand.vmem [shape: f32[9,64], index: 12, kind: input, shape index: {}]
  %s13 = inlined_call_operand.vmem [shape: f32[25,64], index: 13, kind: input, shape index: {}]
  %s14 = inlined_call_operand.vmem [shape: f32[9,64], index: 14, kind: input, shape index: {}]
  %s15 = inlined_call_operand.vmem [shape: f32[25,64], index: 15, kind: input, shape index: {}]
  %s16 = inlined_call_operand.vmem [shape: f32[9,64], index: 16, kind: input, shape index: {}]
  %s17 = inlined_call_operand.vmem [shape: f32[9,64], index: 17, kind: input, shape index: {}]
  %s18 = inlined_call_operand.vmem [shape: f32[2,8,384], index: 18, kind: output, shape index: {}]
  %s19 = sld [smem:[#allocation0]]
  $region105: #{first_cell_forward.1} parent=0
    _
  %s21 = ssub.s32 1, %s19
  %s22 = scalar_select 0, %s21, %s19
  loop: start=0, step=1, limit=4
  $region2: #{first_cell_forward.1} parent=0 // loop_pre_header
    _
  $region3: #{first_cell_forward.1} parent=0 // loop_header
    %s24 = sphi 0, %s28
    %p25 = scmp.ge.s32.totalorder %s24, 4
    %s34 = sphi 0, %s36
    %s37 = sphi 0, %s34
    %s38 = sphi 0, %s37
    %s54 = sphi 0, %s38
    %s58 = sphi 0, %s58
    %s60 = sphi 0, %s58
    %s61 = sphi 0, %s60
    %s75 = sphi 0, %s61
    %s79 = sphi 0, %s79
    %s81 = sphi 0, %s79
    %s82 = sphi 0, %s81
    %s96 = sphi 0, %s82
    %s100 = sphi 0, %s100
    %s102 = sphi 0, %s100
    %s103 = sphi 0, %s102
    %s117 = sphi 0, %s103
    %s121 = sphi 0, %s121
    %s123 = sphi 0, %s121
    %s124 = sphi 0, %s123
    %s138 = sphi 0, %s124
    %s142 = sphi 0, %s142
    %s144 = sphi 0, %s142
    %s145 = sphi 0, %s144
    %s159 = sphi 0, %s145
    %s163 = sphi 0, %s163
    %s165 = sphi 0, %s163
    %s166 = sphi 0, %s165
    %s180 = sphi 0, %s166
    %s184 = sphi 0, %s184
    %s186 = sphi 0, %s184
    %s187 = sphi 0, %s186
    %s201 = sphi 0, %s187
    %s205 = sphi 0, %s205
    %s207 = sphi 0, %s205
    %s208 = sphi 0, %s207
    %s222 = sphi 0, %s208
    %s226 = sphi 0, %s226
    %s228 = sphi 0, %s226
    %s229 = sphi 0, %s228
    %s243 = sphi 0, %s229
    %s247 = sphi 0, %s247
    %s249 = sphi 0, %s247
    %s250 = sphi 0, %s249
    %s264 = sphi 0, %s250
    %s268 = sphi 0, %s268
    %s270 = sphi 0, %s268
    %s271 = sphi 0, %s270
    %s285 = sphi 0, %s271
    %s289 = sphi 0, %s289
    %s291 = sphi 0, %s289
    %s292 = sphi 0, %s291
    %s306 = sphi 0, %s292
    %s310 = sphi 0, %s310
    %s312 = sphi 0, %s310
    %s313 = sphi 0, %s312
    %s327 = sphi 0, %s313
    %s331 = sphi 0, %s331
    %s333 = sphi 0, %s331
    %s334 = sphi 0, %s333
    %s348 = sphi 0, %s334
    %s352 = sphi 0, %s352
    %s354 = sphi 0, %s352
    %s355 = sphi 0, %s354
    %s369 = sphi 0, %s355
    %s373 = sphi 0, %s373
    %s375 = sphi 0, %s373
    %s376 = sphi 0, %s375
    %s390 = sphi 0, %s376
    %s394 = sphi 0, %s394
    %s396 = sphi 0, %s394
    %s397 = sphi 0, %s396
    %s411 = sphi 0, %s397
    %s417 = sphi 0, %s419
    %s420 = sphi 0, %s417
    %s421 = sphi 0, %s420
    %s437 = sphi 0, %s421
  $region4: #{first_cell_forward.1} parent=0 // loop_header_branch
    %27 = sbr.rel (%p25) target = $region8
  $region5: #{first_cell_forward.1} parent=0 // loop_body
    %s29 = ssub.s32 %s24, 1
    %s30 = ssub.s32 %s24, 2
    %s31 = sadd.s32 %s24, 1
    %s32 = ssub.s32 %s24, %s31
    %p33 = scmp.eq.s32.totalorder %s32, 0
    %s35 = sadd.s32 %s34, 1
    %s36 = scalar_select %p33, %s34, %s35
    %p39 = pneg %p33
    %p40 = scmp.eq.s32.totalorder %s24, 1
    %p41 = por %p39, %p40
    %p42 = scmp.ne.s32.totalorder %s34, %s37
    %p43 = scmp.eq.s32.totalorder %s24, 0
    %p44 = por %p42, %p43
    %p45 = scmp.ne.s32.totalorder %s34, %s37
    %p46 = scmp.eq.s32.totalorder %s29, 1
    %p47 = por %p45, %p46
    %p48 = scmp.ne.s32.totalorder %s37, %s38
    %p49 = scmp.eq.s32.totalorder %s29, 0
    %p50 = por %p48, %p49
    %p51 = scmp.ne.s32.totalorder %s37, %s38
    %p52 = scmp.eq.s32.totalorder %s30, 1
    %p53 = por %p51, %p52
    %p55 = scmp.ne.s32.totalorder %s38, %s54
    %p56 = scmp.eq.s32.totalorder %s30, 0
    %p57 = por %p55, %p56
    %s59 = sadd.s32 %s58, 1
    %p62 = scmp.eq.s32.totalorder %s24, 1
    %p63 = scmp.ne.s32.totalorder %s58, %s60
    %p64 = scmp.eq.s32.totalorder %s24, 0
    %p65 = por %p63, %p64
    %p66 = scmp.ne.s32.totalorder %s58, %s60
    %p67 = scmp.eq.s32.totalorder %s29, 1
    %p68 = por %p66, %p67
    %p69 = scmp.ne.s32.totalorder %s60, %s61
    %p70 = scmp.eq.s32.totalorder %s29, 0
    %p71 = por %p69, %p70
    %p72 = scmp.ne.s32.totalorder %s60, %s61
    %p73 = scmp.eq.s32.totalorder %s30, 1
    %p74 = por %p72, %p73
    %p76 = scmp.ne.s32.totalorder %s61, %s75
    %p77 = scmp.eq.s32.totalorder %s30, 0
    %p78 = por %p76, %p77
    %s80 = sadd.s32 %s79, 1
    %p83 = scmp.eq.s32.totalorder %s24, 1
    %p84 = scmp.ne.s32.totalorder %s79, %s81
    %p85 = scmp.eq.s32.totalorder %s24, 0
    %p86 = por %p84, %p85
    %p87 = scmp.ne.s32.totalorder %s79, %s81
    %p88 = scmp.eq.s32.totalorder %s29, 1
    %p89 = por %p87, %p88
    %p90 = scmp.ne.s32.totalorder %s81, %s82
    %p91 = scmp.eq.s32.totalorder %s29, 0
    %p92 = por %p90, %p91
    %p93 = scmp.ne.s32.totalorder %s81, %s82
    %p94 = scmp.eq.s32.totalorder %s30, 1
    %p95 = por %p93, %p94
    %p97 = scmp.ne.s32.totalorder %s82, %s96
    %p98 = scmp.eq.s32.totalorder %s30, 0
    %p99 = por %p97, %p98
    %s101 = sadd.s32 %s100, 1
    %p104 = scmp.eq.s32.totalorder %s24, 1
    %p105 = scmp.ne.s32.totalorder %s100, %s102
    %p106 = scmp.eq.s32.totalorder %s24, 0
    %p107 = por %p105, %p106
    %p108 = scmp.ne.s32.totalorder %s100, %s102
    %p109 = scmp.eq.s32.totalorder %s29, 1
    %p110 = por %p108, %p109
    %p111 = scmp.ne.s32.totalorder %s102, %s103
    %p112 = scmp.eq.s32.totalorder %s29, 0
    %p113 = por %p111, %p112
    %p114 = scmp.ne.s32.totalorder %s102, %s103
    %p115 = scmp.eq.s32.totalorder %s30, 1
    %p116 = por %p114, %p115
    %p118 = scmp.ne.s32.totalorder %s103, %s117
    %p119 = scmp.eq.s32.totalorder %s30, 0
    %p120 = por %p118, %p119
    %s122 = sadd.s32 %s121, 1
    %p125 = scmp.eq.s32.totalorder %s24, 1
    %p126 = scmp.ne.s32.totalorder %s121, %s123
    %p127 = scmp.eq.s32.totalorder %s24, 0
    %p128 = por %p126, %p127
    %p129 = scmp.ne.s32.totalorder %s121, %s123
    %p130 = scmp.eq.s32.totalorder %s29, 1
    %p131 = por %p129, %p130
    %p132 = scmp.ne.s32.totalorder %s123, %s124
    %p133 = scmp.eq.s32.totalorder %s29, 0
    %p134 = por %p132, %p133
    %p135 = scmp.ne.s32.totalorder %s123, %s124
    %p136 = scmp.eq.s32.totalorder %s30, 1
    %p137 = por %p135, %p136
    %p139 = scmp.ne.s32.totalorder %s124, %s138
    %p140 = scmp.eq.s32.totalorder %s30, 0
    %p141 = por %p139, %p140
    %s143 = sadd.s32 %s142, 1
    %p146 = scmp.eq.s32.totalorder %s24, 1
    %p147 = scmp.ne.s32.totalorder %s142, %s144
    %p148 = scmp.eq.s32.totalorder %s24, 0
    %p149 = por %p147, %p148
    %p150 = scmp.ne.s32.totalorder %s142, %s144
    %p151 = scmp.eq.s32.totalorder %s29, 1
    %p152 = por %p150, %p151
    %p153 = scmp.ne.s32.totalorder %s144, %s145
    %p154 = scmp.eq.s32.totalorder %s29, 0
    %p155 = por %p153, %p154
    %p156 = scmp.ne.s32.totalorder %s144, %s145
    %p157 = scmp.eq.s32.totalorder %s30, 1
    %p158 = por %p156, %p157
    %p160 = scmp.ne.s32.totalorder %s145, %s159
    %p161 = scmp.eq.s32.totalorder %s30, 0
    %p162 = por %p160, %p161
    %s164 = sadd.s32 %s163, 1
    %p167 = scmp.eq.s32.totalorder %s24, 1
    %p168 = scmp.ne.s32.totalorder %s163, %s165
    %p169 = scmp.eq.s32.totalorder %s24, 0
    %p170 = por %p168, %p169
    %p171 = scmp.ne.s32.totalorder %s163, %s165
    %p172 = scmp.eq.s32.totalorder %s29, 1
    %p173 = por %p171, %p172
    %p174 = scmp.ne.s32.totalorder %s165, %s166
    %p175 = scmp.eq.s32.totalorder %s29, 0
    %p176 = por %p174, %p175
    %p177 = scmp.ne.s32.totalorder %s165, %s166
    %p178 = scmp.eq.s32.totalorder %s30, 1
    %p179 = por %p177, %p178
    %p181 = scmp.ne.s32.totalorder %s166, %s180
    %p182 = scmp.eq.s32.totalorder %s30, 0
    %p183 = por %p181, %p182
    %s185 = sadd.s32 %s184, 1
    %p188 = scmp.eq.s32.totalorder %s24, 1
    %p189 = scmp.ne.s32.totalorder %s184, %s186
    %p190 = scmp.eq.s32.totalorder %s24, 0
    %p191 = por %p189, %p190
    %p192 = scmp.ne.s32.totalorder %s184, %s186
    %p193 = scmp.eq.s32.totalorder %s29, 1
    %p194 = por %p192, %p193
    %p195 = scmp.ne.s32.totalorder %s186, %s187
    %p196 = scmp.eq.s32.totalorder %s29, 0
    %p197 = por %p195, %p196
    %p198 = scmp.ne.s32.totalorder %s186, %s187
    %p199 = scmp.eq.s32.totalorder %s30, 1
    %p200 = por %p198, %p199
    %p202 = scmp.ne.s32.totalorder %s187, %s201
    %p203 = scmp.eq.s32.totalorder %s30, 0
    %p204 = por %p202, %p203
    %s206 = sadd.s32 %s205, 1
    %p209 = scmp.eq.s32.totalorder %s24, 1
    %p210 = scmp.ne.s32.totalorder %s205, %s207
    %p211 = scmp.eq.s32.totalorder %s24, 0
    %p212 = por %p210, %p211
    %p213 = scmp.ne.s32.totalorder %s205, %s207
    %p214 = scmp.eq.s32.totalorder %s29, 1
    %p215 = por %p213, %p214
    %p216 = scmp.ne.s32.totalorder %s207, %s208
    %p217 = scmp.eq.s32.totalorder %s29, 0
    %p218 = por %p216, %p217
    %p219 = scmp.ne.s32.totalorder %s207, %s208
    %p220 = scmp.eq.s32.totalorder %s30, 1
    %p221 = por %p219, %p220
    %p223 = scmp.ne.s32.totalorder %s208, %s222
    %p224 = scmp.eq.s32.totalorder %s30, 0
    %p225 = por %p223, %p224
    %s227 = sadd.s32 %s226, 1
    %p230 = scmp.eq.s32.totalorder %s24, 1
    %p231 = scmp.ne.s32.totalorder %s226, %s228
    %p232 = scmp.eq.s32.totalorder %s24, 0
    %p233 = por %p231, %p232
    %p234 = scmp.ne.s32.totalorder %s226, %s228
    %p235 = scmp.eq.s32.totalorder %s29, 1
    %p236 = por %p234, %p235
    %p237 = scmp.ne.s32.totalorder %s228, %s229
    %p238 = scmp.eq.s32.totalorder %s29, 0
    %p239 = por %p237, %p238
    %p240 = scmp.ne.s32.totalorder %s228, %s229
    %p241 = scmp.eq.s32.totalorder %s30, 1
    %p242 = por %p240, %p241
    %p244 = scmp.ne.s32.totalorder %s229, %s243
    %p245 = scmp.eq.s32.totalorder %s30, 0
    %p246 = por %p244, %p245
    %s248 = sadd.s32 %s247, 1
    %p251 = scmp.eq.s32.totalorder %s24, 1
    %p252 = scmp.ne.s32.totalorder %s247, %s249
    %p253 = scmp.eq.s32.totalorder %s24, 0
    %p254 = por %p252, %p253
    %p255 = scmp.ne.s32.totalorder %s247, %s249
    %p256 = scmp.eq.s32.totalorder %s29, 1
    %p257 = por %p255, %p256
    %p258 = scmp.ne.s32.totalorder %s249, %s250
    %p259 = scmp.eq.s32.totalorder %s29, 0
    %p260 = por %p258, %p259
    %p261 = scmp.ne.s32.totalorder %s249, %s250
    %p262 = scmp.eq.s32.totalorder %s30, 1
    %p263 = por %p261, %p262
    %p265 = scmp.ne.s32.totalorder %s250, %s264
    %p266 = scmp.eq.s32.totalorder %s30, 0
    %p267 = por %p265, %p266
    %s269 = sadd.s32 %s268, 1
    %p272 = scmp.eq.s32.totalorder %s24, 1
    %p273 = scmp.ne.s32.totalorder %s268, %s270
    %p274 = scmp.eq.s32.totalorder %s24, 0
    %p275 = por %p273, %p274
    %p276 = scmp.ne.s32.totalorder %s268, %s270
    %p277 = scmp.eq.s32.totalorder %s29, 1
    %p278 = por %p276, %p277
    %p279 = scmp.ne.s32.totalorder %s270, %s271
    %p280 = scmp.eq.s32.totalorder %s29, 0
    %p281 = por %p279, %p280
    %p282 = scmp.ne.s32.totalorder %s270, %s271
    %p283 = scmp.eq.s32.totalorder %s30, 1
    %p284 = por %p282, %p283
    %p286 = scmp.ne.s32.totalorder %s271, %s285
    %p287 = scmp.eq.s32.totalorder %s30, 0
    %p288 = por %p286, %p287
    %s290 = sadd.s32 %s289, 1
    %p293 = scmp.eq.s32.totalorder %s24, 1
    %p294 = scmp.ne.s32.totalorder %s289, %s291
    %p295 = scmp.eq.s32.totalorder %s24, 0
    %p296 = por %p294, %p295
    %p297 = scmp.ne.s32.totalorder %s289, %s291
    %p298 = scmp.eq.s32.totalorder %s29, 1
    %p299 = por %p297, %p298
    %p300 = scmp.ne.s32.totalorder %s291, %s292
    %p301 = scmp.eq.s32.totalorder %s29, 0
    %p302 = por %p300, %p301
    %p303 = scmp.ne.s32.totalorder %s291, %s292
    %p304 = scmp.eq.s32.totalorder %s30, 1
    %p305 = por %p303, %p304
    %p307 = scmp.ne.s32.totalorder %s292, %s306
    %p308 = scmp.eq.s32.totalorder %s30, 0
    %p309 = por %p307, %p308
    %s311 = sadd.s32 %s310, 1
    %p314 = scmp.eq.s32.totalorder %s24, 1
    %p315 = scmp.ne.s32.totalorder %s310, %s312
    %p316 = scmp.eq.s32.totalorder %s24, 0
    %p317 = por %p315, %p316
    %p318 = scmp.ne.s32.totalorder %s310, %s312
    %p319 = scmp.eq.s32.totalorder %s29, 1
    %p320 = por %p318, %p319
    %p321 = scmp.ne.s32.totalorder %s312, %s313
    %p322 = scmp.eq.s32.totalorder %s29, 0
    %p323 = por %p321, %p322
    %p324 = scmp.ne.s32.totalorder %s312, %s313
    %p325 = scmp.eq.s32.totalorder %s30, 1
    %p326 = por %p324, %p325
    %p328 = scmp.ne.s32.totalorder %s313, %s327
    %p329 = scmp.eq.s32.totalorder %s30, 0
    %p330 = por %p328, %p329
    %s332 = sadd.s32 %s331, 1
    %p335 = scmp.eq.s32.totalorder %s24, 1
    %p336 = scmp.ne.s32.totalorder %s331, %s333
    %p337 = scmp.eq.s32.totalorder %s24, 0
    %p338 = por %p336, %p337
    %p339 = scmp.ne.s32.totalorder %s331, %s333
    %p340 = scmp.eq.s32.totalorder %s29, 1
    %p341 = por %p339, %p340
    %p342 = scmp.ne.s32.totalorder %s333, %s334
    %p343 = scmp.eq.s32.totalorder %s29, 0
    %p344 = por %p342, %p343
    %p345 = scmp.ne.s32.totalorder %s333, %s334
    %p346 = scmp.eq.s32.totalorder %s30, 1
    %p347 = por %p345, %p346
    %p349 = scmp.ne.s32.totalorder %s334, %s348
    %p350 = scmp.eq.s32.totalorder %s30, 0
    %p351 = por %p349, %p350
    %s353 = sadd.s32 %s352, 1
    %p356 = scmp.eq.s32.totalorder %s24, 1
    %p357 = scmp.ne.s32.totalorder %s352, %s354
    %p358 = scmp.eq.s32.totalorder %s24, 0
    %p359 = por %p357, %p358
    %p360 = scmp.ne.s32.totalorder %s352, %s354
    %p361 = scmp.eq.s32.totalorder %s29, 1
    %p362 = por %p360, %p361
    %p363 = scmp.ne.s32.totalorder %s354, %s355
    %p364 = scmp.eq.s32.totalorder %s29, 0
    %p365 = por %p363, %p364
    %p366 = scmp.ne.s32.totalorder %s354, %s355
    %p367 = scmp.eq.s32.totalorder %s30, 1
    %p368 = por %p366, %p367
    %p370 = scmp.ne.s32.totalorder %s355, %s369
    %p371 = scmp.eq.s32.totalorder %s30, 0
    %p372 = por %p370, %p371
    %s374 = sadd.s32 %s373, 1
    %p377 = scmp.eq.s32.totalorder %s24, 1
    %p378 = scmp.ne.s32.totalorder %s373, %s375
    %p379 = scmp.eq.s32.totalorder %s24, 0
    %p380 = por %p378, %p379
    %p381 = scmp.ne.s32.totalorder %s373, %s375
    %p382 = scmp.eq.s32.totalorder %s29, 1
    %p383 = por %p381, %p382
    %p384 = scmp.ne.s32.totalorder %s375, %s376
    %p385 = scmp.eq.s32.totalorder %s29, 0
    %p386 = por %p384, %p385
    %p387 = scmp.ne.s32.totalorder %s375, %s376
    %p388 = scmp.eq.s32.totalorder %s30, 1
    %p389 = por %p387, %p388
    %p391 = scmp.ne.s32.totalorder %s376, %s390
    %p392 = scmp.eq.s32.totalorder %s30, 0
    %p393 = por %p391, %p392
    %s395 = sadd.s32 %s394, 1
    %p398 = scmp.eq.s32.totalorder %s24, 1
    %p399 = scmp.ne.s32.totalorder %s394, %s396
    %p400 = scmp.eq.s32.totalorder %s24, 0
    %p401 = por %p399, %p400
    %p402 = scmp.ne.s32.totalorder %s394, %s396
    %p403 = scmp.eq.s32.totalorder %s29, 1
    %p404 = por %p402, %p403
    %p405 = scmp.ne.s32.totalorder %s396, %s397
    %p406 = scmp.eq.s32.totalorder %s29, 0
    %p407 = por %p405, %p406
    %p408 = scmp.ne.s32.totalorder %s396, %s397
    %p409 = scmp.eq.s32.totalorder %s30, 1
    %p410 = por %p408, %p409
    %p412 = scmp.ne.s32.totalorder %s397, %s411
    %p413 = scmp.eq.s32.totalorder %s30, 0
    %p414 = por %p412, %p413
    %s415 = ssub.s32 %s24, %s31
    %p416 = scmp.eq.s32.totalorder %s415, 0
    %s418 = sadd.s32 %s417, 1
    %s419 = scalar_select %p416, %s417, %s418
    %p422 = pneg %p416
    %p423 = scmp.eq.s32.totalorder %s24, 1
    %p424 = por %p422, %p423
    %p425 = scmp.ne.s32.totalorder %s417, %s420
    %p426 = scmp.eq.s32.totalorder %s24, 0
    %p427 = por %p425, %p426
    %p428 = scmp.ne.s32.totalorder %s417, %s420
    %p429 = scmp.eq.s32.totalorder %s29, 1
    %p430 = por %p428, %p429
    %p431 = scmp.ne.s32.totalorder %s420, %s421
    %p432 = scmp.eq.s32.totalorder %s29, 0
    %p433 = por %p431, %p432
    %p434 = scmp.ne.s32.totalorder %s420, %s421
    %p435 = scmp.eq.s32.totalorder %s30, 1
    %p436 = por %p434, %p435
    %p438 = scmp.ne.s32.totalorder %s421, %s437
    %p439 = scmp.eq.s32.totalorder %s30, 0
    %p440 = por %p438, %p439
    %p441 = scmp.le.s32.totalorder 1, %s24
    %p442 = scmp.lt.s32.totalorder %s24, 3
    %p443 = pnand %p441, %p442
    %p444 = pneg %p443
    // Predicated region
    $region9: #{first_cell_forward.1} parent=5 // pred_check
      _
    $region10: #{first_cell_forward.1} parent=5 // pred_check_branch
      %446 = sbr.rel (%p443) target = $region12
    $region11: #{first_cell_forward.1} parent=5 // pred_region
      %s447 = ssub.s32 %s24, 1
      // Predicated region
      $region13: #{first_cell_forward.1} parent=11 // pred_check
        %p448 = pneg %p71
      $region14: #{first_cell_forward.1} parent=11 // pred_check_branch
        %450 = sbr.rel (%p448) target = $region16
      $region15: #{first_cell_forward.1} parent=11 // pred_region
        _
      $region16: #{first_cell_forward.1} parent=11 // pred_fallthru
        _
      // Predicated region
      $region17: #{first_cell_forward.1} parent=11 // pred_check
        %p451 = pneg %p92
      $region18: #{first_cell_forward.1} parent=11 // pred_check_branch
        %453 = sbr.rel (%p451) target = $region20
      $region19: #{first_cell_forward.1} parent=11 // pred_region
        _
      $region20: #{first_cell_forward.1} parent=11 // pred_fallthru
        _
      // Predicated region
      $region21: #{first_cell_forward.1} parent=11 // pred_check
        %p454 = pneg %p113
      $region22: #{first_cell_forward.1} parent=11 // pred_check_branch
        %456 = sbr.rel (%p454) target = $region24
      $region23: #{first_cell_forward.1} parent=11 // pred_region
        _
      $region24: #{first_cell_forward.1} parent=11 // pred_fallthru
        _
      // Predicated region
      $region25: #{first_cell_forward.1} parent=11 // pred_check
        %p457 = pneg %p134
      $region26: #{first_cell_forward.1} parent=11 // pred_check_branch
        %459 = sbr.rel (%p457) target = $region28
      $region27: #{first_cell_forward.1} parent=11 // pred_region
        _
      $region28: #{first_cell_forward.1} parent=11 // pred_fallthru
        _
      // Predicated region
      $region29: #{first_cell_forward.1} parent=11 // pred_check
        %p460 = pneg %p155
      $region30: #{first_cell_forward.1} parent=11 // pred_check_branch
        %462 = sbr.rel (%p460) target = $region32
      $region31: #{first_cell_forward.1} parent=11 // pred_region
        _
      $region32: #{first_cell_forward.1} parent=11 // pred_fallthru
        _
      // Predicated region
      $region33: #{first_cell_forward.1} parent=11 // pred_check
        %p463 = pneg %p176
      $region34: #{first_cell_forward.1} parent=11 // pred_check_branch
        %465 = sbr.rel (%p463) target = $region36
      $region35: #{first_cell_forward.1} parent=11 // pred_region
        _
      $region36: #{first_cell_forward.1} parent=11 // pred_fallthru
        _
      // Predicated region
      $region37: #{first_cell_forward.1} parent=11 // pred_check
        %p466 = pneg %p197
      $region38: #{first_cell_forward.1} parent=11 // pred_check_branch
        %468 = sbr.rel (%p466) target = $region40
      $region39: #{first_cell_forward.1} parent=11 // pred_region
        _
      $region40: #{first_cell_forward.1} parent=11 // pred_fallthru
        _
      // Predicated region
      $region41: #{first_cell_forward.1} parent=11 // pred_check
        %p469 = pneg %p218
      $region42: #{first_cell_forward.1} parent=11 // pred_check_branch
        %471 = sbr.rel (%p469) target = $region44
      $region43: #{first_cell_forward.1} parent=11 // pred_region
        _
      $region44: #{first_cell_forward.1} parent=11 // pred_fallthru
        _
      // Predicated region
      $region45: #{first_cell_forward.1} parent=11 // pred_check
        %p472 = pneg %p239
      $region46: #{first_cell_forward.1} parent=11 // pred_check_branch
        %474 = sbr.rel (%p472) target = $region48
      $region47: #{first_cell_forward.1} parent=11 // pred_region
        _
      $region48: #{first_cell_forward.1} parent=11 // pred_fallthru
        _
      // Predicated region
      $region49: #{first_cell_forward.1} parent=11 // pred_check
        %p475 = pneg %p260
      $region50: #{first_cell_forward.1} parent=11 // pred_check_branch
        %477 = sbr.rel (%p475) target = $region52
      $region51: #{first_cell_forward.1} parent=11 // pred_region
        _
      $region52: #{first_cell_forward.1} parent=11 // pred_fallthru
        _
      // Predicated region
      $region53: #{first_cell_forward.1} parent=11 // pred_check
        %p478 = pneg %p281
      $region54: #{first_cell_forward.1} parent=11 // pred_check_branch
        %480 = sbr.rel (%p478) target = $region56
      $region55: #{first_cell_forward.1} parent=11 // pred_region
        _
      $region56: #{first_cell_forward.1} parent=11 // pred_fallthru
        _
      // Predicated region
      $region57: #{first_cell_forward.1} parent=11 // pred_check
        %p481 = pneg %p302
      $region58: #{first_cell_forward.1} parent=11 // pred_check_branch
        %483 = sbr.rel (%p481) target = $region60
      $region59: #{first_cell_forward.1} parent=11 // pred_region
        _
      $region60: #{first_cell_forward.1} parent=11 // pred_fallthru
        _
      // Predicated region
      $region61: #{first_cell_forward.1} parent=11 // pred_check
        %p484 = pneg %p323
      $region62: #{first_cell_forward.1} parent=11 // pred_check_branch
        %486 = sbr.rel (%p484) target = $region64
      $region63: #{first_cell_forward.1} parent=11 // pred_region
        _
      $region64: #{first_cell_forward.1} parent=11 // pred_fallthru
        _
      // Predicated region
      $region65: #{first_cell_forward.1} parent=11 // pred_check
        %p487 = pneg %p344
      $region66: #{first_cell_forward.1} parent=11 // pred_check_branch
        %489 = sbr.rel (%p487) target = $region68
      $region67: #{first_cell_forward.1} parent=11 // pred_region
        _
      $region68: #{first_cell_forward.1} parent=11 // pred_fallthru
        _
      // Predicated region
      $region69: #{first_cell_forward.1} parent=11 // pred_check
        %p490 = pneg %p365
      $region70: #{first_cell_forward.1} parent=11 // pred_check_branch
        %492 = sbr.rel (%p490) target = $region72
      $region71: #{first_cell_forward.1} parent=11 // pred_region
        _
      $region72: #{first_cell_forward.1} parent=11 // pred_fallthru
        _
      // Predicated region
      $region73: #{first_cell_forward.1} parent=11 // pred_check
        %p493 = pneg %p386
      $region74: #{first_cell_forward.1} parent=11 // pred_check_branch
        %495 = sbr.rel (%p493) target = $region76
      $region75: #{first_cell_forward.1} parent=11 // pred_region
        _
      $region76: #{first_cell_forward.1} parent=11 // pred_fallthru
        _
      // Predicated region
      $region77: #{first_cell_forward.1} parent=11 // pred_check
        %p496 = pneg %p407
      $region78: #{first_cell_forward.1} parent=11 // pred_check_branch
        %498 = sbr.rel (%p496) target = $region80
      $region79: #{first_cell_forward.1} parent=11 // pred_region
        _
      $region80: #{first_cell_forward.1} parent=11 // pred_fallthru
        _
    $region12: #{first_cell_forward.1} parent=5 // pred_fallthru
      _
    %p499 = scmp.lt.s32.totalorder %s24, 2
    // Predicated region
    $region81: #{first_cell_forward.1} parent=5 // pred_check
      %p500 = pneg %p499
    $region82: #{first_cell_forward.1} parent=5 // pred_check_branch
      %502 = sbr.rel (%p500) target = $region84
    $region83: #{first_cell_forward.1} parent=5 // pred_region
      // Predicated region
      $region85: #{first_cell_forward.1} parent=83 // pred_check
        %p503 = pneg %p44
      $region86: #{first_cell_forward.1} parent=83 // pred_check_branch
        %505 = sbr.rel (%p503) target = $region88
      $region87: #{first_cell_forward.1} parent=83 // pred_region
        %p506 = scmp.lt.s32.totalorder %s24, 1
        %s507 = scalar_select %p506, %s24, 1
        %s508 = smul.addr %s507, 2
        %s509 = smul.addr %s508, 8
        %s510 = scalar_lea.vmem %s0, %s509
      $region88: #{first_cell_forward.1} parent=83 // pred_fallthru
        _
    $region84: #{first_cell_forward.1} parent=5 // pred_fallthru
      _
    %p511 = scmp.le.s32.totalorder 1, %s24
    %p512 = scmp.lt.s32.totalorder %s24, 3
    %p513 = pnand %p511, %p512
    %p514 = pneg %p513
    // Predicated region
    $region89: #{first_cell_forward.1} parent=5 // pred_check
      _
    $region90: #{first_cell_forward.1} parent=5 // pred_check_branch
      %516 = sbr.rel (%p513) target = $region92
    $region91: #{first_cell_forward.1} parent=5 // pred_region
      %s517 = ssub.s32 %s24, 1
      %p518 = scmp.lt.s32.totalorder %s29, 1
      %s519 = scalar_select %p518, %s29, 1
      %s520 = smul.addr %s519, 2
      %s521 = smul.addr %s520, 8
      %s522 = scalar_lea.vmem %s0, %s521
      %p523 = pneg %p50
      %p524 = pneg %p47
      %p525 = pneg %p71
      %p526 = pneg %p68
      %p527 = pneg %p92
      %p528 = pneg %p89
      %p529 = pneg %p113
      %p530 = pneg %p110
      %p531 = pneg %p134
      %p532 = pneg %p131
      %p533 = pneg %p155
      %p534 = pneg %p152
      %p535 = pneg %p176
      %p536 = pneg %p173
      %p537 = pneg %p197
      %p538 = pneg %p194
      %p539 = pneg %p218
      %p540 = pneg %p215
      %p541 = pneg %p239
      %p542 = pneg %p236
      %p543 = pneg %p260
      %p544 = pneg %p257
      %p545 = pneg %p281
      %p546 = pneg %p278
      %p547 = pneg %p302
      %p548 = pneg %p299
      %p549 = pneg %p323
      %p550 = pneg %p320
      %p551 = pneg %p344
      %p552 = pneg %p341
      %p553 = pneg %p365
      %p554 = pneg %p362
      %p555 = pneg %p386
      %p556 = pneg %p383
      %p557 = pneg %p407
      %p558 = pneg %p404
      %p559 = pneg %p433
      %p560 = pneg %p430
      %p561 = scmp.lt.s32.totalorder %s29, 1
      %s562 = scalar_select %p561, %s29, 1
      %s563 = smul.addr %s562, 3
      %s564 = smul.addr %s563, 8
      %s565 = scalar_lea.vmem %s18, %s564
      %p566 = scmp.lt.s32.totalorder %s29, 1
      %s567 = scalar_select %p566, %s29, 1
      %s568 = smul.addr %s567, 2
      %s569 = smul.addr %s568, 8
      %s570 = scalar_lea.vmem %s0, %s569
      %p571 = scmp.lt.s32.totalorder %s29, 1
      %s572 = scalar_select %p571, %s29, 1
      %s573 = smul.addr %s572, 3
      %s574 = smul.addr %s573, 8
      %s575 = scalar_lea.vmem %s18, %s574
      %v576 = vld [vmem:[%s570] sm:$0xff]
      %v577 = vld [vmem:[%s570 + $0x8] sm:$0xff]
      %v578 = vmax.f32 %v576, 0.0
      %v579 = vmax.f32 %v577, 0.0
      %v580 = vld [vmem:[%s2] sm:$0xff]
      %v581 = vld [vmem:[%s2 + $0x8] sm:$0xff]
      %v582 = vld [vmem:[%s2 + $0x10] sm:$0xff]
      %v583 = vld [vmem:[%s2 + $0x18] sm:$0xff]
      %v584 = vld [vmem:[%s2 + $0x20] sm:$0xff]
      %v585 = vld [vmem:[%s2 + $0x28] sm:$0xff]
      %v586 = vld [vmem:[%s2 + $0x30] sm:$0xff]
      %v587 = vld [vmem:[%s2 + $0x38] sm:$0xff]
      %v588 = vld [vmem:[%s2 + $0x40] sm:$0xff]
      %v589 = vld [vmem:[%s2 + $0x48] sm:$0xff]
      %v590 = vld [vmem:[%s2 + $0x50] sm:$0xff]
      %v591 = vld [vmem:[%s2 + $0x58] sm:$0xff]
      %v592 = vld [vmem:[%s2 + $0x60] sm:$0xff]
      %v593 = vld [vmem:[%s2 + $0x68] sm:$0xff]
      %v594 = vld [vmem:[%s2 + $0x70] sm:$0xff]
      %v595 = vld [vmem:[%s2 + $0x78] sm:$0xff]
      %v596 = vld [vmem:[%s2 + $0x80] sm:$0xff]
      %v597 = vld [vmem:[%s2 + $0x88] sm:$0xff]
      %v598 = vld [vmem:[%s2 + $0x90] sm:$0xff]
      %v599 = vld [vmem:[%s2 + $0x98] sm:$0xff]
      %v600 = vld [vmem:[%s2 + $0xa0] sm:$0xff]
      %v601 = vld [vmem:[%s2 + $0xa8] sm:$0xff]
      %v602 = vld [vmem:[%s2 + $0xb0] sm:$0xff]
      %v603 = vld [vmem:[%s2 + $0xb8] sm:$0xff]
      %v604 = vld [vmem:[%s3] sm:$0x1]
      %v606 = vlaneseq
      %v607 = vshrl.u32 %v606, 7
      %v608 = vsub.s32 0, %v607
      %v609 = vrot.slane %v604, %v608
      %vm611 = vcmask 523264
      %v613 = vsel %vm611, %v579, 0
      %615 = vmatprep.subr.mxu0 0.0
      %616 = vmatpush1.msra.mxu0 %v580
      %617 = vmatprep.subr.mxu0 0.0
      %618 = vmatpush1.msra.mxu0 %v581
      %619 = vmatprep.subr.mxu0 0.0
      %620 = vmatpush1.msra.mxu0 %v582
      %621 = vmatprep.subr.mxu0 0.0
      %622 = vmatpush1.msra.mxu0 %v583
      %623 = vmatprep.subr.mxu0 0.0
      %624 = vmatpush1.msra.mxu0 %v584
      %625 = vmatprep.subr.mxu0 0.0
      %626 = vmatpush1.msra.mxu0 %v585
      %627 = vmatprep.subr.mxu0 0.0
      %628 = vmatpush1.msra.mxu0 %v586
      %629 = vmatprep.subr.mxu0 0.0
      %630 = vmatpush1.msra.mxu0 %v587
      %631 = vmatprep.subr.mxu0 0.0
      %632 = vmatpush1.msra.mxu0 %v588
      %633 = vmatprep.subr.mxu0 0.0
      %634 = vmatpush1.msra.mxu0 %v589
      %635 = vmatprep.subr.mxu0 0.0
      %636 = vmatpush1.msra.mxu0 %v590
      %637 = vmatprep.subr.mxu0 0.0
      %638 = vmatpush1.msra.mxu0 %v591
      %639 = vmatprep.subr.mxu0 0.0
      %640 = vmatpush1.msra.mxu0 %v592
      %641 = vmatprep.subr.mxu0 0.0
      %642 = vmatpush1.msra.mxu0 %v593
      %643 = vmatprep.subr.mxu0 0.0
      %644 = vmatpush1.msra.mxu0 %v594
      %645 = vmatprep.subr.mxu0 0.0
      %646 = vmatpush1.msra.mxu0 %v595
      %647 = vmatprep.subr.mxu0 0.0
      %648 = vmatpush1.msra.mxu0 %v596
      %649 = vmatprep.subr.mxu0 0.0
      %650 = vmatpush1.msra.mxu0 %v597
      %651 = vmatprep.subr.mxu0 0.0
      %652 = vmatpush1.msra.mxu0 %v598
      %653 = vmatprep.subr.mxu0 0.0
      %654 = vmatpush1.msra.mxu0 %v599
      %655 = vmatprep.subr.mxu0 0.0
      %656 = vmatpush1.msra.mxu0 %v600
      %657 = vmatprep.subr.mxu0 0.0
      %658 = vmatpush1.msra.mxu0 %v601
      %659 = vmatprep.subr.mxu0 0.0
      %660 = vmatpush1.msra.mxu0 %v602
      %661 = vmatprep.subr.mxu0 0.0
      %662 = vmatpush1.msra.mxu0 %v603
      %663 = vmatprep.subr.mxu0 0.0
      %664 = vmatpush1.msra.mxu0 0.0
      %665 = vmatprep.subr.mxu0 0.0
      %666 = vmatpush1.msra.mxu0 0.0
      %667 = vmatprep.subr.mxu0 0.0
      %668 = vmatpush1.msra.mxu0 0.0
      %669 = vmatprep.subr.mxu0 0.0
      %670 = vmatpush1.msra.mxu0 0.0
      %671 = vmatprep.subr.mxu0 0.0
      %672 = vmatpush1.msra.mxu0 0.0
      %673 = vmatprep.subr.mxu0 0.0
      %674 = vmatpush1.msra.mxu0 0.0
      %675 = vmatprep.subr.mxu0 0.0
      %676 = vmatpush1.msra.mxu0 0.0
      %677 = vmatprep.subr.mxu0 0.0
      %678 = vmatpush1.msra.mxu0 0.0
      %679 = vmatprep.mubr.f32.mxu0 %v613
      %680 = vmatmul.mubr.f32.gmra.mrb[0].mxu0 %v578
      %v681 = vpop.f32.mrb[0].mxu0
      %v682 = vadd.f32 %v609, %v681
      %v683 = vpop.f32.mrb[0].mxu0
      %684 = vdwg.mxu0
      %v685 = vmax.f32 %v682, 0.0
      %687 = vrot.lane.b32.xlu0 %v685, 16
      %v688 = vpop.permute.xlu0 %687
      %vm690 = vcmask 130048
      %v691 = vsel %vm690, 0.0, %v688
      %vm692 = vcmask 654336
      %v693 = vsel %vm692, %v691, 0.0
      %v695 = vrot.slane %v693, 6
      %vm697 = vcmask 1041408
      %v698 = vsel %vm697, 0.0, %v695
      %v699 = vsel %vm697, %v695, 0.0
      %v700 = vld [vmem:[%s8] sm:$0x1]
      %v701 = vlaneseq
      %v702 = vshrl.u32 %v701, 7
      %v703 = vsub.s32 0, %v702
      %v704 = vrot.slane %v700, %v703
      %v705 = vmul.f32 %v698, %v704
      %v706 = vld [vmem:[%s8 + $0x1] sm:$0x1]
      %v707 = vlaneseq
      %v708 = vshrl.u32 %v707, 7
      %v709 = vsub.s32 0, %v708
      %v710 = vrot.slane %v706, %v709
      %712 = vrot.lane.b32.xlu0 %v710, 8
      %v713 = vpop.permute.xlu0 %712
      %v715 = vmul.f32 %v698, %v713
      %v716 = vld [vmem:[%s8 + $0x2] sm:$0x1]
      %v717 = vlaneseq
      %v718 = vshrl.u32 %v717, 7
      %v719 = vsub.s32 0, %v718
      %v720 = vrot.slane %v716, %v719
      %722 = vrot.lane.b32.xlu0 %v720, 16
      %v723 = vpop.permute.xlu0 %722
      %v725 = vmul.f32 %v698, %v723
      %v726 = vld [vmem:[%s8 + $0x3] sm:$0x1]
      %v727 = vlaneseq
      %v728 = vshrl.u32 %v727, 7
      %v729 = vsub.s32 0, %v728
      %v730 = vrot.slane %v726, %v729
      %732 = vrot.lane.b32.xlu0 %v730, 24
      %v733 = vpop.permute.xlu0 %732
      %v735 = vmul.f32 %v698, %v733
      %v736 = vld [vmem:[%s8 + $0x4] sm:$0x1]
      %v737 = vlaneseq
      %v738 = vshrl.u32 %v737, 7
      %v739 = vsub.s32 0, %v738
      %v740 = vrot.slane %v736, %v739
      %742 = vrot.lane.b32.xlu0 %v740, 32
      %v743 = vpop.permute.xlu0 %742
      %v745 = vmul.f32 %v698, %v743
      %v746 = vld [vmem:[%s8 + $0x5] sm:$0x1]
      %v747 = vlaneseq
      %v748 = vshrl.u32 %v747, 7
      %v749 = vsub.s32 0, %v748
      %v750 = vrot.slane %v746, %v749
      %v751 = vmul.f32 %v698, %v750
      %v752 = vmul.f32 %v699, %v750
      %v753 = vld [vmem:[%s8 + $0x6] sm:$0x1]
      %v754 = vlaneseq
      %v755 = vshrl.u32 %v754, 7
      %v756 = vsub.s32 0, %v755
      %v757 = vrot.slane %v753, %v756
      %759 = vrot.lane.b32.xlu0 %v757, 8
      %v760 = vpop.permute.xlu0 %759
      %v762 = vmul.f32 %v698, %v760
      %v763 = vmul.f32 %v699, %v760
      %v764 = vld [vmem:[%s8 + $0x7] sm:$0x1]
      %v765 = vlaneseq
      %v766 = vshrl.u32 %v765, 7
      %v767 = vsub.s32 0, %v766
      %v768 = vrot.slane %v764, %v767
      %770 = vrot.lane.b32.xlu0 %v768, 16
      %v771 = vpop.permute.xlu0 %770
      %v773 = vmul.f32 %v698, %v771
      %v774 = vmul.f32 %v699, %v771
      %v775 = vld [vmem:[%s8 + $0x8] sm:$0x1]
      %v776 = vlaneseq
      %v777 = vshrl.u32 %v776, 7
      %v778 = vsub.s32 0, %v777
      %v779 = vrot.slane %v775, %v778
      %781 = vrot.lane.b32.xlu0 %v779, 24
      %v782 = vpop.permute.xlu0 %781
      %v784 = vmul.f32 %v698, %v782
      %v785 = vmul.f32 %v699, %v782
      %v786 = vld [vmem:[%s8 + $0x9] sm:$0x1]
      %v787 = vlaneseq
      %v788 = vshrl.u32 %v787, 7
      %v789 = vsub.s32 0, %v788
      %v790 = vrot.slane %v786, %v789
      %792 = vrot.lane.b32.xlu0 %v790, 32
      %v793 = vpop.permute.xlu0 %792
      %v795 = vmul.f32 %v698, %v793
      %v796 = vmul.f32 %v699, %v793
      %v797 = vld [vmem:[%s8 + $0xa] sm:$0x1]
      %v798 = vlaneseq
      %v799 = vshrl.u32 %v798, 7
      %v800 = vsub.s32 0, %v799
      %v801 = vrot.slane %v797, %v800
      %v802 = vmul.f32 %v698, %v801
      %v803 = vmul.f32 %v699, %v801
      %v804 = vld [vmem:[%s8 + $0xb] sm:$0x1]
      %v805 = vlaneseq
      %v806 = vshrl.u32 %v805, 7
      %v807 = vsub.s32 0, %v806
      %v808 = vrot.slane %v804, %v807
      %810 = vrot.lane.b32.xlu0 %v808, 8
      %v811 = vpop.permute.xlu0 %810
      %v813 = vmul.f32 %v698, %v811
      %v814 = vmul.f32 %v699, %v811
      %v815 = vld [vmem:[%s8 + $0xc] sm:$0x1]
      %v816 = vlaneseq
      %v817 = vshrl.u32 %v816, 7
      %v818 = vsub.s32 0, %v817
      %v819 = vrot.slane %v815, %v818
      %821 = vrot.lane.b32.xlu0 %v819, 16
      %v822 = vpop.permute.xlu0 %821
      %v824 = vmul.f32 %v698, %v822
      %v825 = vmul.f32 %v699, %v822
      %v826 = vld [vmem:[%s8 + $0xd] sm:$0x1]
      %v827 = vlaneseq
      %v828 = vshrl.u32 %v827, 7
      %v829 = vsub.s32 0, %v828
      %v830 = vrot.slane %v826, %v829
      %832 = vrot.lane.b32.xlu0 %v830, 24
      %v833 = vpop.permute.xlu0 %832
      %v835 = vmul.f32 %v698, %v833
      %v836 = vmul.f32 %v699, %v833
      %v837 = vld [vmem:[%s8 + $0xe] sm:$0x1]
      %v838 = vlaneseq
      %v839 = vshrl.u32 %v838, 7
      %v840 = vsub.s32 0, %v839
      %v841 = vrot.slane %v837, %v840
      %843 = vrot.lane.b32.xlu0 %v841, 32
      %v844 = vpop.permute.xlu0 %843
      %v846 = vmul.f32 %v698, %v844
      %v847 = vmul.f32 %v699, %v844
      %v848 = vld [vmem:[%s8 + $0xf] sm:$0x1]
      %v849 = vlaneseq
      %v850 = vshrl.u32 %v849, 7
      %v851 = vsub.s32 0, %v850
      %v852 = vrot.slane %v848, %v851
      %v853 = vmul.f32 %v698, %v852
      %v854 = vmul.f32 %v699, %v852
      %v855 = vld [vmem:[%s8 + $0x10] sm:$0x1]
      %v856 = vlaneseq
      %v857 = vshrl.u32 %v856, 7
      %v858 = vsub.s32 0, %v857
      %v859 = vrot.slane %v855, %v858
      %861 = vrot.lane.b32.xlu0 %v859, 8
      %v862 = vpop.permute.xlu0 %861
      %v864 = vmul.f32 %v698, %v862
      %v865 = vmul.f32 %v699, %v862
      %v866 = vld [vmem:[%s8 + $0x11] sm:$0x1]
      %v867 = vlaneseq
      %v868 = vshrl.u32 %v867, 7
      %v869 = vsub.s32 0, %v868
      %v870 = vrot.slane %v866, %v869
      %872 = vrot.lane.b32.xlu0 %v870, 16
      %v873 = vpop.permute.xlu0 %872
      %v875 = vmul.f32 %v698, %v873
      %v876 = vmul.f32 %v699, %v873
      %v877 = vld [vmem:[%s8 + $0x12] sm:$0x1]
      %v878 = vlaneseq
      %v879 = vshrl.u32 %v878, 7
      %v880 = vsub.s32 0, %v879
      %v881 = vrot.slane %v877, %v880
      %883 = vrot.lane.b32.xlu0 %v881, 24
      %v884 = vpop.permute.xlu0 %883
      %v886 = vmul.f32 %v698, %v884
      %v887 = vmul.f32 %v699, %v884
      %v888 = vld [vmem:[%s8 + $0x13] sm:$0x1]
      %v889 = vlaneseq
      %v890 = vshrl.u32 %v889, 7
      %v891 = vsub.s32 0, %v890
      %v892 = vrot.slane %v888, %v891
      %894 = vrot.lane.b32.xlu0 %v892, 32
      %v895 = vpop.permute.xlu0 %894
      %v897 = vmul.f32 %v698, %v895
      %v898 = vmul.f32 %v699, %v895
      %v899 = vld [vmem:[%s8 + $0x14] sm:$0x1]
      %v900 = vlaneseq
      %v901 = vshrl.u32 %v900, 7
      %v902 = vsub.s32 0, %v901
      %v903 = vrot.slane %v899, %v902
      %v904 = vmul.f32 %v698, %v903
      %v905 = vmul.f32 %v699, %v903
      %v906 = vld [vmem:[%s8 + $0x15] sm:$0x1]
      %v907 = vlaneseq
      %v908 = vshrl.u32 %v907, 7
      %v909 = vsub.s32 0, %v908
      %v910 = vrot.slane %v906, %v909
      %912 = vrot.lane.b32.xlu0 %v910, 8
      %v913 = vpop.permute.xlu0 %912
      %v915 = vmul.f32 %v698, %v913
      %v916 = vmul.f32 %v699, %v913
      %v917 = vld [vmem:[%s8 + $0x16] sm:$0x1]
      %v918 = vlaneseq
      %v919 = vshrl.u32 %v918, 7
      %v920 = vsub.s32 0, %v919
      %v921 = vrot.slane %v917, %v920
      %923 = vrot.lane.b32.xlu0 %v921, 16
      %v924 = vpop.permute.xlu0 %923
      %v926 = vmul.f32 %v698, %v924
      %v927 = vmul.f32 %v699, %v924
      %v928 = vld [vmem:[%s8 + $0x17] sm:$0x1]
      %v929 = vlaneseq
      %v930 = vshrl.u32 %v929, 7
      %v931 = vsub.s32 0, %v930
      %v932 = vrot.slane %v928, %v931
      %934 = vrot.lane.b32.xlu0 %v932, 24
      %v935 = vpop.permute.xlu0 %934
      %v937 = vmul.f32 %v698, %v935
      %v938 = vmul.f32 %v699, %v935
      %v939 = vld [vmem:[%s8 + $0x18] sm:$0x1]
      %v940 = vlaneseq
      %v941 = vshrl.u32 %v940, 7
      %v942 = vsub.s32 0, %v941
      %v943 = vrot.slane %v939, %v942
      %945 = vrot.lane.b32.xlu0 %v943, 32
      %v946 = vpop.permute.xlu0 %945
      %v948 = vmul.f32 %v698, %v946
      %v949 = vmul.f32 %v699, %v946
      %951 = vrot.lane.b32.xlu0 %v715, 120
      %v952 = vpop.permute.xlu0 %951
      %v954 = vadd.f32 %v705, %v952
      %956 = vrot.lane.b32.xlu0 %v735, 120
      %v957 = vpop.permute.xlu0 %956
      %v959 = vadd.f32 %v725, %v957
      %vm962 = vcmask 1046528
      %v963 = vrot.slane %v751, 1
      %v964 = vrot.slane %v752, 1
      %v965 = vsel %vm962, %v963, %v964
      %966 = vrot.lane.b32.xlu0 %v965, 32
      %v967 = vpop.permute.xlu0 %966
      %v969 = vadd.f32 %v745, %v967
      %972 = vrot.lane.b32.xlu0 %v773, 120
      %v973 = vpop.permute.xlu0 %972
      %974 = vrot.lane.b32.xlu0 %v774, 120
      %v975 = vpop.permute.xlu0 %974
      %v978 = vadd.f32 %v762, %v973
      %v979 = vadd.f32 %v763, %v975
      %982 = vrot.lane.b32.xlu0 %v795, 120
      %v983 = vpop.permute.xlu0 %982
      %984 = vrot.lane.b32.xlu0 %v796, 120
      %v985 = vpop.permute.xlu0 %984
      %v988 = vadd.f32 %v784, %v983
      %v989 = vadd.f32 %v785, %v985
      %992 = vrot.lane.b32.xlu0 %v813, 120
      %v993 = vpop.permute.xlu0 %992
      %994 = vrot.lane.b32.xlu0 %v814, 120
      %v995 = vpop.permute.xlu0 %994
      %v998 = vadd.f32 %v802, %v993
      %v999 = vadd.f32 %v803, %v995
      %1002 = vrot.lane.b32.xlu0 %v835, 120
      %v1003 = vpop.permute.xlu0 %1002
      %1004 = vrot.lane.b32.xlu0 %v836, 120
      %v1005 = vpop.permute.xlu0 %1004
      %v1008 = vadd.f32 %v824, %v1003
      %v1009 = vadd.f32 %v825, %v1005
      %v1012 = vrot.slane %v853, 1
      %v1013 = vrot.slane %v854, 1
      %v1014 = vsel %vm962, %v1012, %v1013
      %1015 = vrot.lane.b32.xlu0 %v1014, 32
      %v1016 = vpop.permute.xlu0 %1015
      %1017 = vrot.lane.b32.xlu0 %v1013, 32
      %v1018 = vpop.permute.xlu0 %1017
      %v1021 = vadd.f32 %v846, %v1016
      %v1022 = vadd.f32 %v847, %v1018
      %1025 = vrot.lane.b32.xlu0 %v875, 120
      %v1026 = vpop.permute.xlu0 %1025
      %1027 = vrot.lane.b32.xlu0 %v876, 120
      %v1028 = vpop.permute.xlu0 %1027
      %v1031 = vadd.f32 %v864, %v1026
      %v1032 = vadd.f32 %v865, %v1028
      %1035 = vrot.lane.b32.xlu0 %v897, 120
      %v1036 = vpop.permute.xlu0 %1035
      %1037 = vrot.lane.b32.xlu0 %v898, 120
      %v1038 = vpop.permute.xlu0 %1037
      %v1041 = vadd.f32 %v886, %v1036
      %v1042 = vadd.f32 %v887, %v1038
      %1045 = vrot.lane.b32.xlu0 %v915, 120
      %v1046 = vpop.permute.xlu0 %1045
      %1047 = vrot.lane.b32.xlu0 %v916, 120
      %v1048 = vpop.permute.xlu0 %1047
      %v1051 = vadd.f32 %v904, %v1046
      %v1052 = vadd.f32 %v905, %v1048
      %1055 = vrot.lane.b32.xlu0 %v937, 120
      %v1056 = vpop.permute.xlu0 %1055
      %1057 = vrot.lane.b32.xlu0 %v938, 120
      %v1058 = vpop.permute.xlu0 %1057
      %v1061 = vadd.f32 %v926, %v1056
      %v1062 = vadd.f32 %v927, %v1058
      %1064 = vrot.lane.b32.xlu0 %v959, 112
      %v1065 = vpop.permute.xlu0 %1064
      %v1067 = vadd.f32 %v954, %v1065
      %v1070 = vrot.slane %v978, 1
      %v1071 = vrot.slane %v979, 1
      %v1072 = vsel %vm962, %v1070, %v1071
      %1073 = vrot.lane.b32.xlu0 %v1072, 24
      %v1074 = vpop.permute.xlu0 %1073
      %v1076 = vadd.f32 %v969, %v1074
      %v1079 = vrot.slane %v998, 1
      %v1080 = vrot.slane %v999, 1
      %v1081 = vsel %vm962, %v1079, %v1080
      %1082 = vrot.lane.b32.xlu0 %v1081, 24
      %v1083 = vpop.permute.xlu0 %1082
      %1084 = vrot.lane.b32.xlu0 %v1080, 24
      %v1085 = vpop.permute.xlu0 %1084
      %v1088 = vadd.f32 %v988, %v1083
      %v1089 = vadd.f32 %v989, %v1085
      %1092 = vrot.lane.b32.xlu0 %v1021, 112
      %v1093 = vpop.permute.xlu0 %1092
      %1094 = vrot.lane.b32.xlu0 %v1022, 112
      %v1095 = vpop.permute.xlu0 %1094
      %v1098 = vadd.f32 %v1008, %v1093
      %v1099 = vadd.f32 %v1009, %v1095
      %1102 = vrot.lane.b32.xlu0 %v1041, 112
      %v1103 = vpop.permute.xlu0 %1102
      %1104 = vrot.lane.b32.xlu0 %v1042, 112
      %v1105 = vpop.permute.xlu0 %1104
      %v1108 = vadd.f32 %v1031, %v1103
      %v1109 = vadd.f32 %v1032, %v1105
      %1112 = vrot.lane.b32.xlu0 %v1061, 112
      %v1113 = vpop.permute.xlu0 %1112
      %1114 = vrot.lane.b32.xlu0 %v1062, 112
      %v1115 = vpop.permute.xlu0 %1114
      %v1118 = vadd.f32 %v1051, %v1113
      %v1119 = vadd.f32 %v1052, %v1115
      %1121 = vrot.lane.b32.xlu0 %v1076, 96
      %v1122 = vpop.permute.xlu0 %1121
      %v1124 = vadd.f32 %v1067, %v1122
      %v1127 = vrot.slane %v1098, 1
      %v1128 = vrot.slane %v1099, 1
      %v1129 = vsel %vm962, %v1127, %v1128
      %1130 = vrot.lane.b32.xlu0 %v1129, 8
      %v1131 = vpop.permute.xlu0 %1130
      %1132 = vrot.lane.b32.xlu0 %v1128, 8
      %v1133 = vpop.permute.xlu0 %1132
      %v1136 = vadd.f32 %v1088, %v1131
      %v1137 = vadd.f32 %v1089, %v1133
      %v1140 = vrot.slane %v1118, 1
      %v1141 = vrot.slane %v1119, 1
      %v1142 = vsel %vm962, %v1140, %v1141
      %1143 = vrot.lane.b32.xlu0 %v1142, 8
      %v1144 = vpop.permute.xlu0 %1143
      %1145 = vrot.lane.b32.xlu0 %v1141, 8
      %v1146 = vpop.permute.xlu0 %1145
      %v1149 = vadd.f32 %v1108, %v1144
      %v1150 = vadd.f32 %v1109, %v1146
      %v1153 = vrot.slane %v1136, 1
      %v1154 = vrot.slane %v1137, 1
      %v1155 = vsel %vm962, %v1153, %v1154
      %1156 = vrot.lane.b32.xlu0 %v1155, 104
      %v1157 = vpop.permute.xlu0 %1156
      %v1159 = vadd.f32 %v1124, %v1157
      %v1162 = vrot.slane %v948, 1
      %v1163 = vrot.slane %v949, 1
      %v1164 = vsel %vm962, %v1162, %v1163
      %1165 = vrot.lane.b32.xlu0 %v1164, 104
      %v1166 = vpop.permute.xlu0 %1165
      %1167 = vrot.lane.b32.xlu0 %v1163, 104
      %v1168 = vpop.permute.xlu0 %1167
      %v1171 = vadd.f32 %v1149, %v1166
      %v1172 = vadd.f32 %v1150, %v1168
      %vm1175 = vcmask 1044480
      %v1176 = vrot.slane %v1171, 3
      %v1177 = vrot.slane %v1172, 3
      %v1178 = vsel %vm1175, %v1176, %v1177
      %1179 = vrot.lane.b32.xlu0 %v1178, 120
      %v1180 = vpop.permute.xlu0 %1179
      %v1182 = vadd.f32 %v1159, %v1180
      %1183 = vrot.lane.b32.xlu0 %v685, 72
      %v1184 = vpop.permute.xlu0 %1183
      %vm1186 = vcmask 64512
      %v1187 = vsel %vm1186, 0.0, %v1184
      %vm1188 = vcmask 588800
      %v1189 = vsel %vm1188, %v1187, 0.0
      %v1191 = vrot.slane %v1189, 7
      %vm1193 = vcmask 1040384
      %v1194 = vsel %vm1193, 0.0, %v1191
      %v1195 = vsel %vm1193, %v1191, 0.0
      %v1196 = vld [vmem:[%s9] sm:$0x1]
      %v1197 = vlaneseq
      %v1198 = vshrl.u32 %v1197, 7
      %v1199 = vsub.s32 0, %v1198
      %v1200 = vrot.slane %v1196, %v1199
      %v1201 = vmul.f32 %v1194, %v1200
      %v1202 = vld [vmem:[%s9 + $0x1] sm:$0x1]
      %v1203 = vlaneseq
      %v1204 = vshrl.u32 %v1203, 7
      %v1205 = vsub.s32 0, %v1204
      %v1206 = vrot.slane %v1202, %v1205
      %1208 = vrot.lane.b32.xlu0 %v1206, 8
      %v1209 = vpop.permute.xlu0 %1208
      %v1211 = vmul.f32 %v1194, %v1209
      %v1212 = vld [vmem:[%s9 + $0x2] sm:$0x1]
      %v1213 = vlaneseq
      %v1214 = vshrl.u32 %v1213, 7
      %v1215 = vsub.s32 0, %v1214
      %v1216 = vrot.slane %v1212, %v1215
      %1218 = vrot.lane.b32.xlu0 %v1216, 16
      %v1219 = vpop.permute.xlu0 %1218
      %v1221 = vmul.f32 %v1194, %v1219
      %v1222 = vld [vmem:[%s9 + $0x3] sm:$0x1]
      %v1223 = vlaneseq
      %v1224 = vshrl.u32 %v1223, 7
      %v1225 = vsub.s32 0, %v1224
      %v1226 = vrot.slane %v1222, %v1225
      %v1227 = vmul.f32 %v1194, %v1226
      %v1228 = vmul.f32 %v1195, %v1226
      %v1229 = vld [vmem:[%s9 + $0x4] sm:$0x1]
      %v1230 = vlaneseq
      %v1231 = vshrl.u32 %v1230, 7
      %v1232 = vsub.s32 0, %v1231
      %v1233 = vrot.slane %v1229, %v1232
      %1235 = vrot.lane.b32.xlu0 %v1233, 8
      %v1236 = vpop.permute.xlu0 %1235
      %v1238 = vmul.f32 %v1194, %v1236
      %v1239 = vmul.f32 %v1195, %v1236
      %v1240 = vld [vmem:[%s9 + $0x5] sm:$0x1]
      %v1241 = vlaneseq
      %v1242 = vshrl.u32 %v1241, 7
      %v1243 = vsub.s32 0, %v1242
      %v1244 = vrot.slane %v1240, %v1243
      %1246 = vrot.lane.b32.xlu0 %v1244, 16
      %v1247 = vpop.permute.xlu0 %1246
      %v1249 = vmul.f32 %v1194, %v1247
      %v1250 = vmul.f32 %v1195, %v1247
      %v1251 = vld [vmem:[%s9 + $0x6] sm:$0x1]
      %v1252 = vlaneseq
      %v1253 = vshrl.u32 %v1252, 7
      %v1254 = vsub.s32 0, %v1253
      %v1255 = vrot.slane %v1251, %v1254
      %v1256 = vmul.f32 %v1194, %v1255
      %v1257 = vmul.f32 %v1195, %v1255
      %v1258 = vld [vmem:[%s9 + $0x7] sm:$0x1]
      %v1259 = vlaneseq
      %v1260 = vshrl.u32 %v1259, 7
      %v1261 = vsub.s32 0, %v1260
      %v1262 = vrot.slane %v1258, %v1261
      %1264 = vrot.lane.b32.xlu0 %v1262, 8
      %v1265 = vpop.permute.xlu0 %1264
      %v1267 = vmul.f32 %v1194, %v1265
      %v1268 = vmul.f32 %v1195, %v1265
      %v1269 = vld [vmem:[%s9 + $0x8] sm:$0x1]
      %v1270 = vlaneseq
      %v1271 = vshrl.u32 %v1270, 7
      %v1272 = vsub.s32 0, %v1271
      %v1273 = vrot.slane %v1269, %v1272
      %1275 = vrot.lane.b32.xlu0 %v1273, 16
      %v1276 = vpop.permute.xlu0 %1275
      %v1278 = vmul.f32 %v1194, %v1276
      %v1279 = vmul.f32 %v1195, %v1276
      %1281 = vrot.lane.b32.xlu0 %v1211, 120
      %v1282 = vpop.permute.xlu0 %1281
      %v1284 = vadd.f32 %v1201, %v1282
      %v1287 = vrot.slane %v1227, 1
      %v1288 = vrot.slane %v1228, 1
      %v1289 = vsel %vm962, %v1287, %v1288
      %1290 = vrot.lane.b32.xlu0 %v1289, 16
      %v1291 = vpop.permute.xlu0 %1290
      %v1293 = vadd.f32 %v1221, %v1291
      %1296 = vrot.lane.b32.xlu0 %v1249, 120
      %v1297 = vpop.permute.xlu0 %1296
      %1298 = vrot.lane.b32.xlu0 %v1250, 120
      %v1299 = vpop.permute.xlu0 %1298
      %v1302 = vadd.f32 %v1238, %v1297
      %v1303 = vadd.f32 %v1239, %v1299
      %1306 = vrot.lane.b32.xlu0 %v1267, 120
      %v1307 = vpop.permute.xlu0 %1306
      %1308 = vrot.lane.b32.xlu0 %v1268, 120
      %v1309 = vpop.permute.xlu0 %1308
      %v1312 = vadd.f32 %v1256, %v1307
      %v1313 = vadd.f32 %v1257, %v1309
      %1315 = vrot.lane.b32.xlu0 %v1293, 112
      %v1316 = vpop.permute.xlu0 %1315
      %v1318 = vadd.f32 %v1284, %v1316
      %v1321 = vrot.slane %v1312, 1
      %v1322 = vrot.slane %v1313, 1
      %v1323 = vsel %vm962, %v1321, %v1322
      %1324 = vrot.lane.b32.xlu0 %v1323, 8
      %v1325 = vpop.permute.xlu0 %1324
      %1326 = vrot.lane.b32.xlu0 %v1322, 8
      %v1327 = vpop.permute.xlu0 %1326
      %v1330 = vadd.f32 %v1302, %v1325
      %v1331 = vadd.f32 %v1303, %v1327
      %v1334 = vrot.slane %v1330, 1
      %v1335 = vrot.slane %v1331, 1
      %v1336 = vsel %vm962, %v1334, %v1335
      %1337 = vrot.lane.b32.xlu0 %v1336, 120
      %v1338 = vpop.permute.xlu0 %1337
      %v1340 = vadd.f32 %v1318, %v1338
      %vm1343 = vcmask 1045504
      %v1344 = vrot.slane %v1278, 2
      %v1345 = vrot.slane %v1279, 2
      %v1346 = vsel %vm1343, %v1344, %v1345
      %1347 = vrot.lane.b32.xlu0 %v1346, 112
      %v1348 = vpop.permute.xlu0 %1347
      %v1350 = vadd.f32 %v1340, %v1348
      %1351 = vrot.lane.b32.xlu0 %v685, 80
      %v1352 = vpop.permute.xlu0 %1351
      %v1354 = vsel %vm690, 0.0, %v1352
      %v1355 = vsel %vm692, %v1354, 0.0
      %v1357 = vrot.slane %v1355, 6
      %v1359 = vsel %vm697, 0.0, %v1357
      %v1360 = vsel %vm697, %v1357, 0.0
      %v1361 = vld [vmem:[%s10] sm:$0x1]
      %v1362 = vlaneseq
      %v1363 = vshrl.u32 %v1362, 7
      %v1364 = vsub.s32 0, %v1363
      %v1365 = vrot.slane %v1361, %v1364
      %v1366 = vmul.f32 %v1359, %v1365
      %v1367 = vld [vmem:[%s10 + $0x1] sm:$0x1]
      %v1368 = vlaneseq
      %v1369 = vshrl.u32 %v1368, 7
      %v1370 = vsub.s32 0, %v1369
      %v1371 = vrot.slane %v1367, %v1370
      %1373 = vrot.lane.b32.xlu0 %v1371, 8
      %v1374 = vpop.permute.xlu0 %1373
      %v1376 = vmul.f32 %v1359, %v1374
      %v1377 = vld [vmem:[%s10 + $0x2] sm:$0x1]
      %v1378 = vlaneseq
      %v1379 = vshrl.u32 %v1378, 7
      %v1380 = vsub.s32 0, %v1379
      %v1381 = vrot.slane %v1377, %v1380
      %1383 = vrot.lane.b32.xlu0 %v1381, 16
      %v1384 = vpop.permute.xlu0 %1383
      %v1386 = vmul.f32 %v1359, %v1384
      %v1387 = vld [vmem:[%s10 + $0x3] sm:$0x1]
      %v1388 = vlaneseq
      %v1389 = vshrl.u32 %v1388, 7
      %v1390 = vsub.s32 0, %v1389
      %v1391 = vrot.slane %v1387, %v1390
      %1393 = vrot.lane.b32.xlu0 %v1391, 24
      %v1394 = vpop.permute.xlu0 %1393
      %v1396 = vmul.f32 %v1359, %v1394
      %v1397 = vld [vmem:[%s10 + $0x4] sm:$0x1]
      %v1398 = vlaneseq
      %v1399 = vshrl.u32 %v1398, 7
      %v1400 = vsub.s32 0, %v1399
      %v1401 = vrot.slane %v1397, %v1400
      %1403 = vrot.lane.b32.xlu0 %v1401, 32
      %v1404 = vpop.permute.xlu0 %1403
      %v1406 = vmul.f32 %v1359, %v1404
      %v1407 = vld [vmem:[%s10 + $0x5] sm:$0x1]
      %v1408 = vlaneseq
      %v1409 = vshrl.u32 %v1408, 7
      %v1410 = vsub.s32 0, %v1409
      %v1411 = vrot.slane %v1407, %v1410
      %v1412 = vmul.f32 %v1359, %v1411
      %v1413 = vmul.f32 %v1360, %v1411
      %v1414 = vld [vmem:[%s10 + $0x6] sm:$0x1]
      %v1415 = vlaneseq
      %v1416 = vshrl.u32 %v1415, 7
      %v1417 = vsub.s32 0, %v1416
      %v1418 = vrot.slane %v1414, %v1417
      %1420 = vrot.lane.b32.xlu0 %v1418, 8
      %v1421 = vpop.permute.xlu0 %1420
      %v1423 = vmul.f32 %v1359, %v1421
      %v1424 = vmul.f32 %v1360, %v1421
      %v1425 = vld [vmem:[%s10 + $0x7] sm:$0x1]
      %v1426 = vlaneseq
      %v1427 = vshrl.u32 %v1426, 7
      %v1428 = vsub.s32 0, %v1427
      %v1429 = vrot.slane %v1425, %v1428
      %1431 = vrot.lane.b32.xlu0 %v1429, 16
      %v1432 = vpop.permute.xlu0 %1431
      %v1434 = vmul.f32 %v1359, %v1432
      %v1435 = vmul.f32 %v1360, %v1432
      %v1436 = vld [vmem:[%s10 + $0x8] sm:$0x1]
      %v1437 = vlaneseq
      %v1438 = vshrl.u32 %v1437, 7
      %v1439 = vsub.s32 0, %v1438
      %v1440 = vrot.slane %v1436, %v1439
      %1442 = vrot.lane.b32.xlu0 %v1440, 24
      %v1443 = vpop.permute.xlu0 %1442
      %v1445 = vmul.f32 %v1359, %v1443
      %v1446 = vmul.f32 %v1360, %v1443
      %v1447 = vld [vmem:[%s10 + $0x9] sm:$0x1]
      %v1448 = vlaneseq
      %v1449 = vshrl.u32 %v1448, 7
      %v1450 = vsub.s32 0, %v1449
      %v1451 = vrot.slane %v1447, %v1450
      %1453 = vrot.lane.b32.xlu0 %v1451, 32
      %v1454 = vpop.permute.xlu0 %1453
      %v1456 = vmul.f32 %v1359, %v1454
      %v1457 = vmul.f32 %v1360, %v1454
      %v1458 = vld [vmem:[%s10 + $0xa] sm:$0x1]
      %v1459 = vlaneseq
      %v1460 = vshrl.u32 %v1459, 7
      %v1461 = vsub.s32 0, %v1460
      %v1462 = vrot.slane %v1458, %v1461
      %v1463 = vmul.f32 %v1359, %v1462
      %v1464 = vmul.f32 %v1360, %v1462
      %v1465 = vld [vmem:[%s10 + $0xb] sm:$0x1]
      %v1466 = vlaneseq
      %v1467 = vshrl.u32 %v1466, 7
      %v1468 = vsub.s32 0, %v1467
      %v1469 = vrot.slane %v1465, %v1468
      %1471 = vrot.lane.b32.xlu0 %v1469, 8
      %v1472 = vpop.permute.xlu0 %1471
      %v1474 = vmul.f32 %v1359, %v1472
      %v1475 = vmul.f32 %v1360, %v1472
      %v1476 = vld [vmem:[%s10 + $0xc] sm:$0x1]
      %v1477 = vlaneseq
      %v1478 = vshrl.u32 %v1477, 7
      %v1479 = vsub.s32 0, %v1478
      %v1480 = vrot.slane %v1476, %v1479
      %1482 = vrot.lane.b32.xlu0 %v1480, 16
      %v1483 = vpop.permute.xlu0 %1482
      %v1485 = vmul.f32 %v1359, %v1483
      %v1486 = vmul.f32 %v1360, %v1483
      %v1487 = vld [vmem:[%s10 + $0xd] sm:$0x1]
      %v1488 = vlaneseq
      %v1489 = vshrl.u32 %v1488, 7
      %v1490 = vsub.s32 0, %v1489
      %v1491 = vrot.slane %v1487, %v1490
      %1493 = vrot.lane.b32.xlu0 %v1491, 24
      %v1494 = vpop.permute.xlu0 %1493
      %v1496 = vmul.f32 %v1359, %v1494
      %v1497 = vmul.f32 %v1360, %v1494
      %v1498 = vld [vmem:[%s10 + $0xe] sm:$0x1]
      %v1499 = vlaneseq
      %v1500 = vshrl.u32 %v1499, 7
      %v1501 = vsub.s32 0, %v1500
      %v1502 = vrot.slane %v1498, %v1501
      %1504 = vrot.lane.b32.xlu0 %v1502, 32
      %v1505 = vpop.permute.xlu0 %1504
      %v1507 = vmul.f32 %v1359, %v1505
      %v1508 = vmul.f32 %v1360, %v1505
      %v1509 = vld [vmem:[%s10 + $0xf] sm:$0x1]
      %v1510 = vlaneseq
      %v1511 = vshrl.u32 %v1510, 7
      %v1512 = vsub.s32 0, %v1511
      %v1513 = vrot.slane %v1509, %v1512
      %v1514 = vmul.f32 %v1359, %v1513
      %v1515 = vmul.f32 %v1360, %v1513
      %v1516 = vld [vmem:[%s10 + $0x10] sm:$0x1]
      %v1517 = vlaneseq
      %v1518 = vshrl.u32 %v1517, 7
      %v1519 = vsub.s32 0, %v1518
      %v1520 = vrot.slane %v1516, %v1519
      %1522 = vrot.lane.b32.xlu0 %v1520, 8
      %v1523 = vpop.permute.xlu0 %1522
      %v1525 = vmul.f32 %v1359, %v1523
      %v1526 = vmul.f32 %v1360, %v1523
      %v1527 = vld [vmem:[%s10 + $0x11] sm:$0x1]
      %v1528 = vlaneseq
      %v1529 = vshrl.u32 %v1528, 7
      %v1530 = vsub.s32 0, %v1529
      %v1531 = vrot.slane %v1527, %v1530
      %1533 = vrot.lane.b32.xlu0 %v1531, 16
      %v1534 = vpop.permute.xlu0 %1533
      %v1536 = vmul.f32 %v1359, %v1534
      %v1537 = vmul.f32 %v1360, %v1534
      %v1538 = vld [vmem:[%s10 + $0x12] sm:$0x1]
      %v1539 = vlaneseq
      %v1540 = vshrl.u32 %v1539, 7
      %v1541 = vsub.s32 0, %v1540
      %v1542 = vrot.slane %v1538, %v1541
      %1544 = vrot.lane.b32.xlu0 %v1542, 24
      %v1545 = vpop.permute.xlu0 %1544
      %v1547 = vmul.f32 %v1359, %v1545
      %v1548 = vmul.f32 %v1360, %v1545
      %v1549 = vld [vmem:[%s10 + $0x13] sm:$0x1]
      %v1550 = vlaneseq
      %v1551 = vshrl.u32 %v1550, 7
      %v1552 = vsub.s32 0, %v1551
      %v1553 = vrot.slane %v1549, %v1552
      %1555 = vrot.lane.b32.xlu0 %v1553, 32
      %v1556 = vpop.permute.xlu0 %1555
      %v1558 = vmul.f32 %v1359, %v1556
      %v1559 = vmul.f32 %v1360, %v1556
      %v1560 = vld [vmem:[%s10 + $0x14] sm:$0x1]
      %v1561 = vlaneseq
      %v1562 = vshrl.u32 %v1561, 7
      %v1563 = vsub.s32 0, %v1562
      %v1564 = vrot.slane %v1560, %v1563
      %v1565 = vmul.f32 %v1359, %v1564
      %v1566 = vmul.f32 %v1360, %v1564
      %v1567 = vld [vmem:[%s10 + $0x15] sm:$0x1]
      %v1568 = vlaneseq
      %v1569 = vshrl.u32 %v1568, 7
      %v1570 = vsub.s32 0, %v1569
      %v1571 = vrot.slane %v1567, %v1570
      %1573 = vrot.lane.b32.xlu0 %v1571, 8
      %v1574 = vpop.permute.xlu0 %1573
      %v1576 = vmul.f32 %v1359, %v1574
      %v1577 = vmul.f32 %v1360, %v1574
      %v1578 = vld [vmem:[%s10 + $0x16] sm:$0x1]
      %v1579 = vlaneseq
      %v1580 = vshrl.u32 %v1579, 7
      %v1581 = vsub.s32 0, %v1580
      %v1582 = vrot.slane %v1578, %v1581
      %1584 = vrot.lane.b32.xlu0 %v1582, 16
      %v1585 = vpop.permute.xlu0 %1584
      %v1587 = vmul.f32 %v1359, %v1585
      %v1588 = vmul.f32 %v1360, %v1585
      %v1589 = vld [vmem:[%s10 + $0x17] sm:$0x1]
      %v1590 = vlaneseq
      %v1591 = vshrl.u32 %v1590, 7
      %v1592 = vsub.s32 0, %v1591
      %v1593 = vrot.slane %v1589, %v1592
      %1595 = vrot.lane.b32.xlu0 %v1593, 24
      %v1596 = vpop.permute.xlu0 %1595
      %v1598 = vmul.f32 %v1359, %v1596
      %v1599 = vmul.f32 %v1360, %v1596
      %v1600 = vld [vmem:[%s10 + $0x18] sm:$0x1]
      %v1601 = vlaneseq
      %v1602 = vshrl.u32 %v1601, 7
      %v1603 = vsub.s32 0, %v1602
      %v1604 = vrot.slane %v1600, %v1603
      %1606 = vrot.lane.b32.xlu0 %v1604, 32
      %v1607 = vpop.permute.xlu0 %1606
      %v1609 = vmul.f32 %v1359, %v1607
      %v1610 = vmul.f32 %v1360, %v1607
      %1612 = vrot.lane.b32.xlu0 %v1376, 120
      %v1613 = vpop.permute.xlu0 %1612
      %v1615 = vadd.f32 %v1366, %v1613
      %1617 = vrot.lane.b32.xlu0 %v1396, 120
      %v1618 = vpop.permute.xlu0 %1617
      %v1620 = vadd.f32 %v1386, %v1618
      %v1623 = vrot.slane %v1412, 1
      %v1624 = vrot.slane %v1413, 1
      %v1625 = vsel %vm962, %v1623, %v1624
      %1626 = vrot.lane.b32.xlu0 %v1625, 32
      %v1627 = vpop.permute.xlu0 %1626
      %v1629 = vadd.f32 %v1406, %v1627
      %1632 = vrot.lane.b32.xlu0 %v1434, 120
      %v1633 = vpop.permute.xlu0 %1632
      %1634 = vrot.lane.b32.xlu0 %v1435, 120
      %v1635 = vpop.permute.xlu0 %1634
      %v1638 = vadd.f32 %v1423, %v1633
      %v1639 = vadd.f32 %v1424, %v1635
      %1642 = vrot.lane.b32.xlu0 %v1456, 120
      %v1643 = vpop.permute.xlu0 %1642
      %1644 = vrot.lane.b32.xlu0 %v1457, 120
      %v1645 = vpop.permute.xlu0 %1644
      %v1648 = vadd.f32 %v1445, %v1643
      %v1649 = vadd.f32 %v1446, %v1645
      %1652 = vrot.lane.b32.xlu0 %v1474, 120
      %v1653 = vpop.permute.xlu0 %1652
      %1654 = vrot.lane.b32.xlu0 %v1475, 120
      %v1655 = vpop.permute.xlu0 %1654
      %v1658 = vadd.f32 %v1463, %v1653
      %v1659 = vadd.f32 %v1464, %v1655
      %1662 = vrot.lane.b32.xlu0 %v1496, 120
      %v1663 = vpop.permute.xlu0 %1662
      %1664 = vrot.lane.b32.xlu0 %v1497, 120
      %v1665 = vpop.permute.xlu0 %1664
      %v1668 = vadd.f32 %v1485, %v1663
      %v1669 = vadd.f32 %v1486, %v1665
      %v1672 = vrot.slane %v1514, 1
      %v1673 = vrot.slane %v1515, 1
      %v1674 = vsel %vm962, %v1672, %v1673
      %1675 = vrot.lane.b32.xlu0 %v1674, 32
      %v1676 = vpop.permute.xlu0 %1675
      %1677 = vrot.lane.b32.xlu0 %v1673, 32
      %v1678 = vpop.permute.xlu0 %1677
      %v1681 = vadd.f32 %v1507, %v1676
      %v1682 = vadd.f32 %v1508, %v1678
      %1685 = vrot.lane.b32.xlu0 %v1536, 120
      %v1686 = vpop.permute.xlu0 %1685
      %1687 = vrot.lane.b32.xlu0 %v1537, 120
      %v1688 = vpop.permute.xlu0 %1687
      %v1691 = vadd.f32 %v1525, %v1686
      %v1692 = vadd.f32 %v1526, %v1688
      %1695 = vrot.lane.b32.xlu0 %v1558, 120
      %v1696 = vpop.permute.xlu0 %1695
      %1697 = vrot.lane.b32.xlu0 %v1559, 120
      %v1698 = vpop.permute.xlu0 %1697
      %v1701 = vadd.f32 %v1547, %v1696
      %v1702 = vadd.f32 %v1548, %v1698
      %1705 = vrot.lane.b32.xlu0 %v1576, 120
      %v1706 = vpop.permute.xlu0 %1705
      %1707 = vrot.lane.b32.xlu0 %v1577, 120
      %v1708 = vpop.permute.xlu0 %1707
      %v1711 = vadd.f32 %v1565, %v1706
      %v1712 = vadd.f32 %v1566, %v1708
      %1715 = vrot.lane.b32.xlu0 %v1598, 120
      %v1716 = vpop.permute.xlu0 %1715
      %1717 = vrot.lane.b32.xlu0 %v1599, 120
      %v1718 = vpop.permute.xlu0 %1717
      %v1721 = vadd.f32 %v1587, %v1716
      %v1722 = vadd.f32 %v1588, %v1718
      %1724 = vrot.lane.b32.xlu0 %v1620, 112
      %v1725 = vpop.permute.xlu0 %1724
      %v1727 = vadd.f32 %v1615, %v1725
      %v1730 = vrot.slane %v1638, 1
      %v1731 = vrot.slane %v1639, 1
      %v1732 = vsel %vm962, %v1730, %v1731
      %1733 = vrot.lane.b32.xlu0 %v1732, 24
      %v1734 = vpop.permute.xlu0 %1733
      %v1736 = vadd.f32 %v1629, %v1734
      %v1739 = vrot.slane %v1658, 1
      %v1740 = vrot.slane %v1659, 1
      %v1741 = vsel %vm962, %v1739, %v1740
      %1742 = vrot.lane.b32.xlu0 %v1741, 24
      %v1743 = vpop.permute.xlu0 %1742
      %1744 = vrot.lane.b32.xlu0 %v1740, 24
      %v1745 = vpop.permute.xlu0 %1744
      %v1748 = vadd.f32 %v1648, %v1743
      %v1749 = vadd.f32 %v1649, %v1745
      %1752 = vrot.lane.b32.xlu0 %v1681, 112
      %v1753 = vpop.permute.xlu0 %1752
      %1754 = vrot.lane.b32.xlu0 %v1682, 112
      %v1755 = vpop.permute.xlu0 %1754
      %v1758 = vadd.f32 %v1668, %v1753
      %v1759 = vadd.f32 %v1669, %v1755
      %1762 = vrot.lane.b32.xlu0 %v1701, 112
      %v1763 = vpop.permute.xlu0 %1762
      %1764 = vrot.lane.b32.xlu0 %v1702, 112
      %v1765 = vpop.permute.xlu0 %1764
      %v1768 = vadd.f32 %v1691, %v1763
      %v1769 = vadd.f32 %v1692, %v1765
      %1772 = vrot.lane.b32.xlu0 %v1721, 112
      %v1773 = vpop.permute.xlu0 %1772
      %1774 = vrot.lane.b32.xlu0 %v1722, 112
      %v1775 = vpop.permute.xlu0 %1774
      %v1778 = vadd.f32 %v1711, %v1773
      %v1779 = vadd.f32 %v1712, %v1775
      %1781 = vrot.lane.b32.xlu0 %v1736, 96
      %v1782 = vpop.permute.xlu0 %1781
      %v1784 = vadd.f32 %v1727, %v1782
      %v1787 = vrot.slane %v1758, 1
      %v1788 = vrot.slane %v1759, 1
      %v1789 = vsel %vm962, %v1787, %v1788
      %1790 = vrot.lane.b32.xlu0 %v1789, 8
      %v1791 = vpop.permute.xlu0 %1790
      %1792 = vrot.lane.b32.xlu0 %v1788, 8
      %v1793 = vpop.permute.xlu0 %1792
      %v1796 = vadd.f32 %v1748, %v1791
      %v1797 = vadd.f32 %v1749, %v1793
      %v1800 = vrot.slane %v1778, 1
      %v1801 = vrot.slane %v1779, 1
      %v1802 = vsel %vm962, %v1800, %v1801
      %1803 = vrot.lane.b32.xlu0 %v1802, 8
      %v1804 = vpop.permute.xlu0 %1803
      %1805 = vrot.lane.b32.xlu0 %v1801, 8
      %v1806 = vpop.permute.xlu0 %1805
      %v1809 = vadd.f32 %v1768, %v1804
      %v1810 = vadd.f32 %v1769, %v1806
      %v1813 = vrot.slane %v1796, 1
      %v1814 = vrot.slane %v1797, 1
      %v1815 = vsel %vm962, %v1813, %v1814
      %1816 = vrot.lane.b32.xlu0 %v1815, 104
      %v1817 = vpop.permute.xlu0 %1816
      %v1819 = vadd.f32 %v1784, %v1817
      %v1822 = vrot.slane %v1609, 1
      %v1823 = vrot.slane %v1610, 1
      %v1824 = vsel %vm962, %v1822, %v1823
      %1825 = vrot.lane.b32.xlu0 %v1824, 104
      %v1826 = vpop.permute.xlu0 %1825
      %1827 = vrot.lane.b32.xlu0 %v1823, 104
      %v1828 = vpop.permute.xlu0 %1827
      %v1831 = vadd.f32 %v1809, %v1826
      %v1832 = vadd.f32 %v1810, %v1828
      %v1835 = vrot.slane %v1831, 3
      %v1836 = vrot.slane %v1832, 3
      %v1837 = vsel %vm1175, %v1835, %v1836
      %1838 = vrot.lane.b32.xlu0 %v1837, 120
      %v1839 = vpop.permute.xlu0 %1838
      %v1841 = vadd.f32 %v1819, %v1839
      %v1842 = vld [vmem:[%s11] sm:$0x1]
      %v1843 = vlaneseq
      %v1844 = vshrl.u32 %v1843, 7
      %v1845 = vsub.s32 0, %v1844
      %v1846 = vrot.slane %v1842, %v1845
      %v1847 = vmul.f32 %v1194, %v1846
      %v1848 = vld [vmem:[%s11 + $0x1] sm:$0x1]
      %v1849 = vlaneseq
      %v1850 = vshrl.u32 %v1849, 7
      %v1851 = vsub.s32 0, %v1850
      %v1852 = vrot.slane %v1848, %v1851
      %1854 = vrot.lane.b32.xlu0 %v1852, 8
      %v1855 = vpop.permute.xlu0 %1854
      %v1857 = vmul.f32 %v1194, %v1855
      %v1858 = vld [vmem:[%s11 + $0x2] sm:$0x1]
      %v1859 = vlaneseq
      %v1860 = vshrl.u32 %v1859, 7
      %v1861 = vsub.s32 0, %v1860
      %v1862 = vrot.slane %v1858, %v1861
      %1864 = vrot.lane.b32.xlu0 %v1862, 16
      %v1865 = vpop.permute.xlu0 %1864
      %v1867 = vmul.f32 %v1194, %v1865
      %v1868 = vld [vmem:[%s11 + $0x3] sm:$0x1]
      %v1869 = vlaneseq
      %v1870 = vshrl.u32 %v1869, 7
      %v1871 = vsub.s32 0, %v1870
      %v1872 = vrot.slane %v1868, %v1871
      %v1873 = vmul.f32 %v1194, %v1872
      %v1874 = vmul.f32 %v1195, %v1872
      %v1875 = vld [vmem:[%s11 + $0x4] sm:$0x1]
      %v1876 = vlaneseq
      %v1877 = vshrl.u32 %v1876, 7
      %v1878 = vsub.s32 0, %v1877
      %v1879 = vrot.slane %v1875, %v1878
      %1881 = vrot.lane.b32.xlu0 %v1879, 8
      %v1882 = vpop.permute.xlu0 %1881
      %v1884 = vmul.f32 %v1194, %v1882
      %v1885 = vmul.f32 %v1195, %v1882
      %v1886 = vld [vmem:[%s11 + $0x5] sm:$0x1]
      %v1887 = vlaneseq
      %v1888 = vshrl.u32 %v1887, 7
      %v1889 = vsub.s32 0, %v1888
      %v1890 = vrot.slane %v1886, %v1889
      %1892 = vrot.lane.b32.xlu0 %v1890, 16
      %v1893 = vpop.permute.xlu0 %1892
      %v1895 = vmul.f32 %v1194, %v1893
      %v1896 = vmul.f32 %v1195, %v1893
      %v1897 = vld [vmem:[%s11 + $0x6] sm:$0x1]
      %v1898 = vlaneseq
      %v1899 = vshrl.u32 %v1898, 7
      %v1900 = vsub.s32 0, %v1899
      %v1901 = vrot.slane %v1897, %v1900
      %v1902 = vmul.f32 %v1194, %v1901
      %v1903 = vmul.f32 %v1195, %v1901
      %v1904 = vld [vmem:[%s11 + $0x7] sm:$0x1]
      %v1905 = vlaneseq
      %v1906 = vshrl.u32 %v1905, 7
      %v1907 = vsub.s32 0, %v1906
      %v1908 = vrot.slane %v1904, %v1907
      %1910 = vrot.lane.b32.xlu0 %v1908, 8
      %v1911 = vpop.permute.xlu0 %1910
      %v1913 = vmul.f32 %v1194, %v1911
      %v1914 = vmul.f32 %v1195, %v1911
      %v1915 = vld [vmem:[%s11 + $0x8] sm:$0x1]
      %v1916 = vlaneseq
      %v1917 = vshrl.u32 %v1916, 7
      %v1918 = vsub.s32 0, %v1917
      %v1919 = vrot.slane %v1915, %v1918
      %1921 = vrot.lane.b32.xlu0 %v1919, 16
      %v1922 = vpop.permute.xlu0 %1921
      %v1924 = vmul.f32 %v1194, %v1922
      %v1925 = vmul.f32 %v1195, %v1922
      %1927 = vrot.lane.b32.xlu0 %v1857, 120
      %v1928 = vpop.permute.xlu0 %1927
      %v1930 = vadd.f32 %v1847, %v1928
      %v1933 = vrot.slane %v1873, 1
      %v1934 = vrot.slane %v1874, 1
      %v1935 = vsel %vm962, %v1933, %v1934
      %1936 = vrot.lane.b32.xlu0 %v1935, 16
      %v1937 = vpop.permute.xlu0 %1936
      %v1939 = vadd.f32 %v1867, %v1937
      %1942 = vrot.lane.b32.xlu0 %v1895, 120
      %v1943 = vpop.permute.xlu0 %1942
      %1944 = vrot.lane.b32.xlu0 %v1896, 120
      %v1945 = vpop.permute.xlu0 %1944
      %v1948 = vadd.f32 %v1884, %v1943
      %v1949 = vadd.f32 %v1885, %v1945
      %1952 = vrot.lane.b32.xlu0 %v1913, 120
      %v1953 = vpop.permute.xlu0 %1952
      %1954 = vrot.lane.b32.xlu0 %v1914, 120
      %v1955 = vpop.permute.xlu0 %1954
      %v1958 = vadd.f32 %v1902, %v1953
      %v1959 = vadd.f32 %v1903, %v1955
      %1961 = vrot.lane.b32.xlu0 %v1939, 112
      %v1962 = vpop.permute.xlu0 %1961
      %v1964 = vadd.f32 %v1930, %v1962
      %v1967 = vrot.slane %v1958, 1
      %v1968 = vrot.slane %v1959, 1
      %v1969 = vsel %vm962, %v1967, %v1968
      %1970 = vrot.lane.b32.xlu0 %v1969, 8
      %v1971 = vpop.permute.xlu0 %1970
      %1972 = vrot.lane.b32.xlu0 %v1968, 8
      %v1973 = vpop.permute.xlu0 %1972
      %v1976 = vadd.f32 %v1948, %v1971
      %v1977 = vadd.f32 %v1949, %v1973
      %v1980 = vrot.slane %v1976, 1
      %v1981 = vrot.slane %v1977, 1
      %v1982 = vsel %vm962, %v1980, %v1981
      %1983 = vrot.lane.b32.xlu0 %v1982, 120
      %v1984 = vpop.permute.xlu0 %1983
      %v1986 = vadd.f32 %v1964, %v1984
      %v1989 = vrot.slane %v1924, 2
      %v1990 = vrot.slane %v1925, 2
      %v1991 = vsel %vm1343, %v1989, %v1990
      %1992 = vrot.lane.b32.xlu0 %v1991, 112
      %v1993 = vpop.permute.xlu0 %1992
      %v1995 = vadd.f32 %v1986, %v1993
      %1996 = vrot.lane.b32.xlu0 %v685, 8
      %v1997 = vpop.permute.xlu0 %1996
      %v1999 = vsel %vm1186, 0.0, %v1997
      %v2000 = vsel %vm1188, %v1999, 0.0
      %v2002 = vrot.slane %v2000, 7
      %v2004 = vsel %vm1193, 0.0, %v2002
      %v2005 = vsel %vm1193, %v2002, 0.0
      %v2006 = vld [vmem:[%s12] sm:$0x1]
      %v2007 = vlaneseq
      %v2008 = vshrl.u32 %v2007, 7
      %v2009 = vsub.s32 0, %v2008
      %v2010 = vrot.slane %v2006, %v2009
      %v2011 = vmul.f32 %v2004, %v2010
      %v2012 = vld [vmem:[%s12 + $0x1] sm:$0x1]
      %v2013 = vlaneseq
      %v2014 = vshrl.u32 %v2013, 7
      %v2015 = vsub.s32 0, %v2014
      %v2016 = vrot.slane %v2012, %v2015
      %2018 = vrot.lane.b32.xlu0 %v2016, 8
      %v2019 = vpop.permute.xlu0 %2018
      %v2021 = vmul.f32 %v2004, %v2019
      %v2022 = vld [vmem:[%s12 + $0x2] sm:$0x1]
      %v2023 = vlaneseq
      %v2024 = vshrl.u32 %v2023, 7
      %v2025 = vsub.s32 0, %v2024
      %v2026 = vrot.slane %v2022, %v2025
      %2028 = vrot.lane.b32.xlu0 %v2026, 16
      %v2029 = vpop.permute.xlu0 %2028
      %v2031 = vmul.f32 %v2004, %v2029
      %v2032 = vld [vmem:[%s12 + $0x3] sm:$0x1]
      %v2033 = vlaneseq
      %v2034 = vshrl.u32 %v2033, 7
      %v2035 = vsub.s32 0, %v2034
      %v2036 = vrot.slane %v2032, %v2035
      %v2037 = vmul.f32 %v2004, %v2036
      %v2038 = vmul.f32 %v2005, %v2036
      %v2039 = vld [vmem:[%s12 + $0x4] sm:$0x1]
      %v2040 = vlaneseq
      %v2041 = vshrl.u32 %v2040, 7
      %v2042 = vsub.s32 0, %v2041
      %v2043 = vrot.slane %v2039, %v2042
      %2045 = vrot.lane.b32.xlu0 %v2043, 8
      %v2046 = vpop.permute.xlu0 %2045
      %v2048 = vmul.f32 %v2004, %v2046
      %v2049 = vmul.f32 %v2005, %v2046
      %v2050 = vld [vmem:[%s12 + $0x5] sm:$0x1]
      %v2051 = vlaneseq
      %v2052 = vshrl.u32 %v2051, 7
      %v2053 = vsub.s32 0, %v2052
      %v2054 = vrot.slane %v2050, %v2053
      %2056 = vrot.lane.b32.xlu0 %v2054, 16
      %v2057 = vpop.permute.xlu0 %2056
      %v2059 = vmul.f32 %v2004, %v2057
      %v2060 = vmul.f32 %v2005, %v2057
      %v2061 = vld [vmem:[%s12 + $0x6] sm:$0x1]
      %v2062 = vlaneseq
      %v2063 = vshrl.u32 %v2062, 7
      %v2064 = vsub.s32 0, %v2063
      %v2065 = vrot.slane %v2061, %v2064
      %v2066 = vmul.f32 %v2004, %v2065
      %v2067 = vmul.f32 %v2005, %v2065
      %v2068 = vld [vmem:[%s12 + $0x7] sm:$0x1]
      %v2069 = vlaneseq
      %v2070 = vshrl.u32 %v2069, 7
      %v2071 = vsub.s32 0, %v2070
      %v2072 = vrot.slane %v2068, %v2071
      %2074 = vrot.lane.b32.xlu0 %v2072, 8
      %v2075 = vpop.permute.xlu0 %2074
      %v2077 = vmul.f32 %v2004, %v2075
      %v2078 = vmul.f32 %v2005, %v2075
      %v2079 = vld [vmem:[%s12 + $0x8] sm:$0x1]
      %v2080 = vlaneseq
      %v2081 = vshrl.u32 %v2080, 7
      %v2082 = vsub.s32 0, %v2081
      %v2083 = vrot.slane %v2079, %v2082
      %2085 = vrot.lane.b32.xlu0 %v2083, 16
      %v2086 = vpop.permute.xlu0 %2085
      %v2088 = vmul.f32 %v2004, %v2086
      %v2089 = vmul.f32 %v2005, %v2086
      %2091 = vrot.lane.b32.xlu0 %v2021, 120
      %v2092 = vpop.permute.xlu0 %2091
      %v2094 = vadd.f32 %v2011, %v2092
      %v2097 = vrot.slane %v2037, 1
      %v2098 = vrot.slane %v2038, 1
      %v2099 = vsel %vm962, %v2097, %v2098
      %2100 = vrot.lane.b32.xlu0 %v2099, 16
      %v2101 = vpop.permute.xlu0 %2100
      %v2103 = vadd.f32 %v2031, %v2101
      %2106 = vrot.lane.b32.xlu0 %v2059, 120
      %v2107 = vpop.permute.xlu0 %2106
      %2108 = vrot.lane.b32.xlu0 %v2060, 120
      %v2109 = vpop.permute.xlu0 %2108
      %v2112 = vadd.f32 %v2048, %v2107
      %v2113 = vadd.f32 %v2049, %v2109
      %2116 = vrot.lane.b32.xlu0 %v2077, 120
      %v2117 = vpop.permute.xlu0 %2116
      %2118 = vrot.lane.b32.xlu0 %v2078, 120
      %v2119 = vpop.permute.xlu0 %2118
      %v2122 = vadd.f32 %v2066, %v2117
      %v2123 = vadd.f32 %v2067, %v2119
      %2125 = vrot.lane.b32.xlu0 %v2103, 112
      %v2126 = vpop.permute.xlu0 %2125
      %v2128 = vadd.f32 %v2094, %v2126
      %v2131 = vrot.slane %v2122, 1
      %v2132 = vrot.slane %v2123, 1
      %v2133 = vsel %vm962, %v2131, %v2132
      %2134 = vrot.lane.b32.xlu0 %v2133, 8
      %v2135 = vpop.permute.xlu0 %2134
      %2136 = vrot.lane.b32.xlu0 %v2132, 8
      %v2137 = vpop.permute.xlu0 %2136
      %v2140 = vadd.f32 %v2112, %v2135
      %v2141 = vadd.f32 %v2113, %v2137
      %v2144 = vrot.slane %v2140, 1
      %v2145 = vrot.slane %v2141, 1
      %v2146 = vsel %vm962, %v2144, %v2145
      %2147 = vrot.lane.b32.xlu0 %v2146, 120
      %v2148 = vpop.permute.xlu0 %2147
      %v2150 = vadd.f32 %v2128, %v2148
      %v2153 = vrot.slane %v2088, 2
      %v2154 = vrot.slane %v2089, 2
      %v2155 = vsel %vm1343, %v2153, %v2154
      %2156 = vrot.lane.b32.xlu0 %v2155, 112
      %v2157 = vpop.permute.xlu0 %2156
      %v2159 = vadd.f32 %v2150, %v2157
      %2161 = vrot.lane.b32.xlu0 %v1350, 64
      %v2162 = vpop.permute.xlu0 %2161
      %2165 = vrot.lane.b32.xlu0 %v1995, 64
      %v2166 = vpop.permute.xlu0 %2165
      %v2168 = vsel %vm611, %v1182, %v2162
      %v2169 = vsel %vm611, %v1841, %v2166
      %v2170 = vld [vmem:[%s4] sm:$0xff]
      %v2171 = vld [vmem:[%s4 + $0x8] sm:$0xff]
      %v2172 = vld [vmem:[%s4 + $0x10] sm:$0xff]
      %v2173 = vld [vmem:[%s4 + $0x18] sm:$0xff]
      %v2174 = vld [vmem:[%s4 + $0x20] sm:$0xff]
      %v2175 = vld [vmem:[%s4 + $0x28] sm:$0xff]
      %v2176 = vld [vmem:[%s4 + $0x30] sm:$0xff]
      %v2177 = vld [vmem:[%s4 + $0x38] sm:$0xff]
      %v2178 = vld [vmem:[%s4 + $0x40] sm:$0xff]
      %v2179 = vld [vmem:[%s4 + $0x48] sm:$0xff]
      %v2180 = vld [vmem:[%s4 + $0x50] sm:$0xff]
      %v2181 = vld [vmem:[%s4 + $0x58] sm:$0xff]
      %v2182 = vld [vmem:[%s4 + $0x60] sm:$0xff]
      %v2183 = vld [vmem:[%s4 + $0x68] sm:$0xff]
      %v2184 = vld [vmem:[%s4 + $0x70] sm:$0xff]
      %v2185 = vld [vmem:[%s4 + $0x78] sm:$0xff]
      %v2186 = vld [vmem:[%s4 + $0x80] sm:$0xff]
      %v2187 = vld [vmem:[%s4 + $0x88] sm:$0xff]
      %v2188 = vld [vmem:[%s4 + $0x90] sm:$0xff]
      %v2189 = vld [vmem:[%s4 + $0x98] sm:$0xff]
      %v2190 = vld [vmem:[%s4 + $0xa0] sm:$0xff]
      %v2191 = vld [vmem:[%s4 + $0xa8] sm:$0xff]
      %v2192 = vld [vmem:[%s4 + $0xb0] sm:$0xff]
      %v2193 = vld [vmem:[%s4 + $0xb8] sm:$0xff]
      %v2194 = vld [vmem:[%s4 + $0xc0] sm:$0xff]
      %v2195 = vld [vmem:[%s4 + $0xc8] sm:$0xff]
      %v2196 = vld [vmem:[%s4 + $0xd0] sm:$0xff]
      %v2197 = vld [vmem:[%s4 + $0xd8] sm:$0xff]
      %v2198 = vld [vmem:[%s4 + $0xe0] sm:$0xff]
      %v2199 = vld [vmem:[%s4 + $0xe8] sm:$0xff]
      %v2200 = vld [vmem:[%s4 + $0xf0] sm:$0xff]
      %v2201 = vld [vmem:[%s4 + $0xf8] sm:$0xff]
      %v2202 = vld [vmem:[%s4 + $0x100] sm:$0xff]
      %v2203 = vld [vmem:[%s4 + $0x108] sm:$0xff]
      %v2204 = vld [vmem:[%s4 + $0x110] sm:$0xff]
      %v2205 = vld [vmem:[%s4 + $0x118] sm:$0xff]
      %v2206 = vld [vmem:[%s4 + $0x120] sm:$0xff]
      %v2207 = vld [vmem:[%s4 + $0x128] sm:$0xff]
      %v2208 = vld [vmem:[%s4 + $0x130] sm:$0xff]
      %v2209 = vld [vmem:[%s4 + $0x138] sm:$0xff]
      %v2210 = vld [vmem:[%s4 + $0x140] sm:$0xff]
      %v2211 = vld [vmem:[%s4 + $0x148] sm:$0xff]
      %v2212 = vld [vmem:[%s4 + $0x150] sm:$0xff]
      %v2213 = vld [vmem:[%s4 + $0x158] sm:$0xff]
      %v2214 = vld [vmem:[%s4 + $0x160] sm:$0xff]
      %v2215 = vld [vmem:[%s4 + $0x168] sm:$0xff]
      %v2216 = vld [vmem:[%s4 + $0x170] sm:$0xff]
      %v2217 = vld [vmem:[%s4 + $0x178] sm:$0xff]
      %v2218 = vld [vmem:[%s4 + $0x180] sm:$0xff]
      %v2219 = vld [vmem:[%s4 + $0x188] sm:$0xff]
      %v2220 = vld [vmem:[%s4 + $0x190] sm:$0xff]
      %v2221 = vld [vmem:[%s4 + $0x198] sm:$0xff]
      %v2222 = vld [vmem:[%s4 + $0x1a0] sm:$0xff]
      %v2223 = vld [vmem:[%s4 + $0x1a8] sm:$0xff]
      %v2224 = vld [vmem:[%s4 + $0x1b0] sm:$0xff]
      %v2225 = vld [vmem:[%s4 + $0x1b8] sm:$0xff]
      %v2226 = vld [vmem:[%s4 + $0x1c0] sm:$0xff]
      %v2227 = vld [vmem:[%s4 + $0x1c8] sm:$0xff]
      %v2228 = vld [vmem:[%s4 + $0x1d0] sm:$0xff]
      %v2229 = vld [vmem:[%s4 + $0x1d8] sm:$0xff]
      %v2230 = vld [vmem:[%s4 + $0x1e0] sm:$0xff]
      %v2231 = vld [vmem:[%s4 + $0x1e8] sm:$0xff]
      %v2232 = vld [vmem:[%s4 + $0x1f0] sm:$0xff]
      %v2233 = vld [vmem:[%s4 + $0x1f8] sm:$0xff]
      %v2234 = vld [vmem:[%s4 + $0x200] sm:$0xff]
      %v2235 = vld [vmem:[%s4 + $0x208] sm:$0xff]
      %v2236 = vld [vmem:[%s4 + $0x210] sm:$0xff]
      %v2237 = vld [vmem:[%s4 + $0x218] sm:$0xff]
      %v2238 = vld [vmem:[%s4 + $0x220] sm:$0xff]
      %v2239 = vld [vmem:[%s4 + $0x228] sm:$0xff]
      %v2240 = vld [vmem:[%s4 + $0x230] sm:$0xff]
      %v2241 = vld [vmem:[%s4 + $0x238] sm:$0xff]
      %v2242 = vld [vmem:[%s4 + $0x240] sm:$0xff]
      %v2243 = vld [vmem:[%s4 + $0x248] sm:$0xff]
      %v2244 = vld [vmem:[%s4 + $0x250] sm:$0xff]
      %v2245 = vld [vmem:[%s4 + $0x258] sm:$0xff]
      %v2246 = vld [vmem:[%s4 + $0x260] sm:$0xff]
      %v2247 = vld [vmem:[%s4 + $0x268] sm:$0xff]
      %v2248 = vld [vmem:[%s4 + $0x270] sm:$0xff]
      %v2249 = vld [vmem:[%s4 + $0x278] sm:$0xff]
      %v2250 = vld [vmem:[%s4 + $0x280] sm:$0xff]
      %v2251 = vld [vmem:[%s4 + $0x288] sm:$0xff]
      %v2252 = vld [vmem:[%s4 + $0x290] sm:$0xff]
      %v2253 = vld [vmem:[%s4 + $0x298] sm:$0xff]
      %v2254 = vld [vmem:[%s4 + $0x2a0] sm:$0xff]
      %v2255 = vld [vmem:[%s4 + $0x2a8] sm:$0xff]
      %v2256 = vld [vmem:[%s4 + $0x2b0] sm:$0xff]
      %v2257 = vld [vmem:[%s4 + $0x2b8] sm:$0xff]
      %v2258 = vld [vmem:[%s4 + $0x2c0] sm:$0xff]
      %v2259 = vld [vmem:[%s4 + $0x2c8] sm:$0xff]
      %v2260 = vld [vmem:[%s4 + $0x2d0] sm:$0xff]
      %v2261 = vld [vmem:[%s4 + $0x2d8] sm:$0xff]
      %v2262 = vld [vmem:[%s4 + $0x2e0] sm:$0xff]
      %v2263 = vld [vmem:[%s4 + $0x2e8] sm:$0xff]
      %v2264 = vld [vmem:[%s4 + $0x2f0] sm:$0xff]
      %v2265 = vld [vmem:[%s4 + $0x2f8] sm:$0xff]
      %v2266 = vld [vmem:[%s4 + $0x300] sm:$0xff]
      %v2267 = vld [vmem:[%s4 + $0x308] sm:$0xff]
      %v2268 = vld [vmem:[%s4 + $0x310] sm:$0xff]
      %v2269 = vld [vmem:[%s4 + $0x318] sm:$0xff]
      %v2270 = vld [vmem:[%s4 + $0x320] sm:$0xff]
      %v2271 = vld [vmem:[%s4 + $0x328] sm:$0xff]
      %v2272 = vld [vmem:[%s4 + $0x330] sm:$0xff]
      %v2273 = vld [vmem:[%s4 + $0x338] sm:$0xff]
      %v2274 = vld [vmem:[%s4 + $0x340] sm:$0xff]
      %v2275 = vld [vmem:[%s4 + $0x348] sm:$0xff]
      %v2276 = vld [vmem:[%s4 + $0x350] sm:$0xff]
      %v2277 = vld [vmem:[%s4 + $0x358] sm:$0xff]
      %v2278 = vld [vmem:[%s4 + $0x360] sm:$0xff]
      %v2279 = vld [vmem:[%s4 + $0x368] sm:$0xff]
      %v2280 = vld [vmem:[%s4 + $0x370] sm:$0xff]
      %v2281 = vld [vmem:[%s4 + $0x378] sm:$0xff]
      %v2282 = vld [vmem:[%s4 + $0x380] sm:$0xff]
      %v2283 = vld [vmem:[%s4 + $0x388] sm:$0xff]
      %v2284 = vld [vmem:[%s4 + $0x390] sm:$0xff]
      %v2285 = vld [vmem:[%s4 + $0x398] sm:$0xff]
      %v2286 = vld [vmem:[%s4 + $0x3a0] sm:$0xff]
      %v2287 = vld [vmem:[%s4 + $0x3a8] sm:$0xff]
      %v2288 = vld [vmem:[%s4 + $0x3b0] sm:$0xff]
      %v2289 = vld [vmem:[%s4 + $0x3b8] sm:$0xff]
      %v2290 = vld [vmem:[%s5] sm:$0x7]
      %v2292 = vlaneseq
      %v2293 = vshrl.u32 %v2292, 7
      %v2294 = vsub.s32 0, %v2293
      %v2295 = vrot.slane %v2290, %v2294
      %v2296 = vlaneseq
      %v2297 = vshrl.u32 %v2296, 7
      %v2298 = vsub.s32 1, %v2297
      %v2299 = vrot.slane %v2290, %v2298
      %v2300 = vlaneseq
      %v2301 = vshrl.u32 %v2300, 7
      %v2302 = vsub.s32 2, %v2301
      %v2303 = vrot.slane %v2290, %v2302
      %v2308 = vsel %vm611, %v2159, 0
      %2310 = vmatprep.subr.mxu0 %v2171
      %2311 = vmatpush1.msra.mxu0 %v2170
      %2312 = vmatprep.subr.mxu0 %v2174
      %2313 = vmatpush1.msra.mxu0 %v2173
      %2314 = vmatprep.subr.mxu0 %v2177
      %2315 = vmatpush1.msra.mxu0 %v2176
      %2316 = vmatprep.subr.mxu0 %v2180
      %2317 = vmatpush1.msra.mxu0 %v2179
      %2318 = vmatprep.subr.mxu0 %v2183
      %2319 = vmatpush1.msra.mxu0 %v2182
      %2320 = vmatprep.subr.mxu0 %v2186
      %2321 = vmatpush1.msra.mxu0 %v2185
      %2322 = vmatprep.subr.mxu0 %v2189
      %2323 = vmatpush1.msra.mxu0 %v2188
      %2324 = vmatprep.subr.mxu0 %v2192
      %2325 = vmatpush1.msra.mxu0 %v2191
      %2326 = vmatprep.subr.mxu0 %v2195
      %2327 = vmatpush1.msra.mxu0 %v2194
      %2328 = vmatprep.subr.mxu0 %v2198
      %2329 = vmatpush1.msra.mxu0 %v2197
      %2330 = vmatprep.subr.mxu0 %v2201
      %2331 = vmatpush1.msra.mxu0 %v2200
      %2332 = vmatprep.subr.mxu0 %v2204
      %2333 = vmatpush1.msra.mxu0 %v2203
      %2334 = vmatprep.subr.mxu0 %v2207
      %2335 = vmatpush1.msra.mxu0 %v2206
      %2336 = vmatprep.subr.mxu0 %v2210
      %2337 = vmatpush1.msra.mxu0 %v2209
      %2338 = vmatprep.subr.mxu0 %v2213
      %2339 = vmatpush1.msra.mxu0 %v2212
      %2340 = vmatprep.subr.mxu0 %v2216
      %2341 = vmatpush1.msra.mxu0 %v2215
      %2342 = vmatprep.subr.mxu0 %v2219
      %2343 = vmatpush1.msra.mxu0 %v2218
      %2344 = vmatprep.subr.mxu0 %v2222
      %2345 = vmatpush1.msra.mxu0 %v2221
      %2346 = vmatprep.subr.mxu0 %v2225
      %2347 = vmatpush1.msra.mxu0 %v2224
      %2348 = vmatprep.subr.mxu0 %v2228
      %2349 = vmatpush1.msra.mxu0 %v2227
      %2350 = vmatprep.subr.mxu0 %v2231
      %2351 = vmatpush1.msra.mxu0 %v2230
      %2352 = vmatprep.subr.mxu0 %v2234
      %2353 = vmatpush1.msra.mxu0 %v2233
      %2354 = vmatprep.subr.mxu0 %v2237
      %2355 = vmatpush1.msra.mxu0 %v2236
      %2356 = vmatprep.subr.mxu0 %v2240
      %2357 = vmatpush1.msra.mxu0 %v2239
      %2358 = vmatprep.subr.mxu0 %v2243
      %2359 = vmatpush1.msra.mxu0 %v2242
      %2360 = vmatprep.subr.mxu0 %v2246
      %2361 = vmatpush1.msra.mxu0 %v2245
      %2362 = vmatprep.subr.mxu0 %v2249
      %2363 = vmatpush1.msra.mxu0 %v2248
      %2364 = vmatprep.subr.mxu0 %v2252
      %2365 = vmatpush1.msra.mxu0 %v2251
      %2366 = vmatprep.subr.mxu0 %v2255
      %2367 = vmatpush1.msra.mxu0 %v2254
      %2368 = vmatprep.subr.mxu0 %v2258
      %2369 = vmatpush1.msra.mxu0 %v2257
      %2370 = vmatprep.subr.mxu0 %v2261
      %2371 = vmatpush1.msra.mxu0 %v2260
      %2372 = vmatprep.subr.mxu0 %v2264
      %2373 = vmatpush1.msra.mxu0 %v2263
      %2374 = vmatprep.mubr.f32.mxu0 %v2169
      %2375 = vmatmul.mubr.f32.gmra.mrb[0].mxu0 %v2168
      %v2376 = vpop.f32.mrb[0].mxu0
      %v2377 = vadd.f32 %v2295, %v2376
      %v2378 = vpop.f32.mrb[0].mxu0
      %v2379 = vadd.f32 %v2299, %v2378
      %2380 = vdwg.mxu0
      %2381 = vmatprep.subr.mxu0 %v2267
      %2382 = vmatpush1.msra.mxu0 %v2266
      %2383 = vmatprep.subr.mxu0 %v2270
      %2384 = vmatpush1.msra.mxu0 %v2269
      %2385 = vmatprep.subr.mxu0 %v2273
      %2386 = vmatpush1.msra.mxu0 %v2272
      %2387 = vmatprep.subr.mxu0 %v2276
      %2388 = vmatpush1.msra.mxu0 %v2275
      %2389 = vmatprep.subr.mxu0 %v2279
      %2390 = vmatpush1.msra.mxu0 %v2278
      %2391 = vmatprep.subr.mxu0 %v2282
      %2392 = vmatpush1.msra.mxu0 %v2281
      %2393 = vmatprep.subr.mxu0 %v2285
      %2394 = vmatpush1.msra.mxu0 %v2284
      %2395 = vmatprep.subr.mxu0 %v2288
      %2396 = vmatpush1.msra.mxu0 %v2287
      %2397 = vmatprep.subr.mxu0 0.0
      %2398 = vmatpush1.msra.mxu0 0.0
      %2399 = vmatprep.subr.mxu0 0.0
      %2400 = vmatpush1.msra.mxu0 0.0
      %2401 = vmatprep.subr.mxu0 0.0
      %2402 = vmatpush1.msra.mxu0 0.0
      %2403 = vmatprep.subr.mxu0 0.0
      %2404 = vmatpush1.msra.mxu0 0.0
      %2405 = vmatprep.subr.mxu0 0.0
      %2406 = vmatpush1.msra.mxu0 0.0
      %2407 = vmatprep.subr.mxu0 0.0
      %2408 = vmatpush1.msra.mxu0 0.0
      %2409 = vmatprep.subr.mxu0 0.0
      %2410 = vmatpush1.msra.mxu0 0.0
      %2411 = vmatprep.subr.mxu0 0.0
      %2412 = vmatpush1.msra.mxu0 0.0
      %2413 = vmatprep.subr.mxu0 0.0
      %2414 = vmatpush1.msra.mxu0 0.0
      %2415 = vmatprep.subr.mxu0 0.0
      %2416 = vmatpush1.msra.mxu0 0.0
      %2417 = vmatprep.subr.mxu0 0.0
      %2418 = vmatpush1.msra.mxu0 0.0
      %2419 = vmatprep.subr.mxu0 0.0
      %2420 = vmatpush1.msra.mxu0 0.0
      %2421 = vmatprep.subr.mxu0 0.0
      %2422 = vmatpush1.msra.mxu0 0.0
      %2423 = vmatprep.subr.mxu0 0.0
      %2424 = vmatpush1.msra.mxu0 0.0
      %2425 = vmatprep.subr.mxu0 0.0
      %2426 = vmatpush1.msra.mxu0 0.0
      %2427 = vmatprep.subr.mxu0 0.0
      %2428 = vmatpush1.msra.mxu0 0.0
      %2429 = vmatprep.subr.mxu0 0.0
      %2430 = vmatpush1.msra.mxu0 0.0
      %2431 = vmatprep.subr.mxu0 0.0
      %2432 = vmatpush1.msra.mxu0 0.0
      %2433 = vmatprep.subr.mxu0 0.0
      %2434 = vmatpush1.msra.mxu0 0.0
      %2435 = vmatprep.subr.mxu0 0.0
      %2436 = vmatpush1.msra.mxu0 0.0
      %2437 = vmatprep.subr.mxu0 0.0
      %2438 = vmatpush1.msra.mxu0 0.0
      %2439 = vmatprep.subr.mxu0 0.0
      %2440 = vmatpush1.msra.mxu0 0.0
      %2441 = vmatprep.subr.mxu0 0.0
      %2442 = vmatpush1.msra.mxu0 0.0
      %2443 = vmatprep.subr.mxu0 0.0
      %2444 = vmatpush1.msra.mxu0 0.0
      %2445 = vmatprep.mubr.f32.mxu0 0.0
      %2446 = vmatmul.mubr.f32.gmra.mrb[0].mxu0 %v2308
      %v2447 = vpop.f32.mrb[0].mxu0
      %v2448 = vadd.f32 %v2377, %v2447
      %v2449 = vpop.f32.mrb[0].mxu0
      %v2450 = vadd.f32 %v2379, %v2449
      %2451 = vdwg.mxu0
      %2452 = vmatprep.subr.mxu0 0.0
      %2453 = vmatpush1.msra.mxu0 %v2172
      %2454 = vmatprep.subr.mxu0 0.0
      %2455 = vmatpush1.msra.mxu0 %v2175
      %2456 = vmatprep.subr.mxu0 0.0
      %2457 = vmatpush1.msra.mxu0 %v2178
      %2458 = vmatprep.subr.mxu0 0.0
      %2459 = vmatpush1.msra.mxu0 %v2181
      %2460 = vmatprep.subr.mxu0 0.0
      %2461 = vmatpush1.msra.mxu0 %v2184
      %2462 = vmatprep.subr.mxu0 0.0
      %2463 = vmatpush1.msra.mxu0 %v2187
      %2464 = vmatprep.subr.mxu0 0.0
      %2465 = vmatpush1.msra.mxu0 %v2190
      %2466 = vmatprep.subr.mxu0 0.0
      %2467 = vmatpush1.msra.mxu0 %v2193
      %2468 = vmatprep.subr.mxu0 0.0
      %2469 = vmatpush1.msra.mxu0 %v2196
      %2470 = vmatprep.subr.mxu0 0.0
      %2471 = vmatpush1.msra.mxu0 %v2199
      %2472 = vmatprep.subr.mxu0 0.0
      %2473 = vmatpush1.msra.mxu0 %v2202
      %2474 = vmatprep.subr.mxu0 0.0
      %2475 = vmatpush1.msra.mxu0 %v2205
      %2476 = vmatprep.subr.mxu0 0.0
      %2477 = vmatpush1.msra.mxu0 %v2208
      %2478 = vmatprep.subr.mxu0 0.0
      %2479 = vmatpush1.msra.mxu0 %v2211
      %2480 = vmatprep.subr.mxu0 0.0
      %2481 = vmatpush1.msra.mxu0 %v2214
      %2482 = vmatprep.subr.mxu0 0.0
      %2483 = vmatpush1.msra.mxu0 %v2217
      %2484 = vmatprep.subr.mxu0 0.0
      %2485 = vmatpush1.msra.mxu0 %v2220
      %2486 = vmatprep.subr.mxu0 0.0
      %2487 = vmatpush1.msra.mxu0 %v2223
      %2488 = vmatprep.subr.mxu0 0.0
      %2489 = vmatpush1.msra.mxu0 %v2226
      %2490 = vmatprep.subr.mxu0 0.0
      %2491 = vmatpush1.msra.mxu0 %v2229
      %2492 = vmatprep.subr.mxu0 0.0
      %2493 = vmatpush1.msra.mxu0 %v2232
      %2494 = vmatprep.subr.mxu0 0.0
      %2495 = vmatpush1.msra.mxu0 %v2235
      %2496 = vmatprep.subr.mxu0 0.0
      %2497 = vmatpush1.msra.mxu0 %v2238
      %2498 = vmatprep.subr.mxu0 0.0
      %2499 = vmatpush1.msra.mxu0 %v2241
      %2500 = vmatprep.subr.mxu0 0.0
      %2501 = vmatpush1.msra.mxu0 %v2244
      %2502 = vmatprep.subr.mxu0 0.0
      %2503 = vmatpush1.msra.mxu0 %v2247
      %2504 = vmatprep.subr.mxu0 0.0
      %2505 = vmatpush1.msra.mxu0 %v2250
      %2506 = vmatprep.subr.mxu0 0.0
      %2507 = vmatpush1.msra.mxu0 %v2253
      %2508 = vmatprep.subr.mxu0 0.0
      %2509 = vmatpush1.msra.mxu0 %v2256
      %2510 = vmatprep.subr.mxu0 0.0
      %2511 = vmatpush1.msra.mxu0 %v2259
      %2512 = vmatprep.subr.mxu0 0.0
      %2513 = vmatpush1.msra.mxu0 %v2262
      %2514 = vmatprep.subr.mxu0 0.0
      %2515 = vmatpush1.msra.mxu0 %v2265
      %2516 = vmatprep.mubr.f32.mxu0 %v2169
      %2517 = vmatmul.mubr.f32.gmra.mrb[0].mxu0 %v2168
      %v2518 = vpop.f32.mrb[0].mxu0
      %v2519 = vadd.f32 %v2303, %v2518
      %v2520 = vpop.f32.mrb[0].mxu0
      %2521 = vdwg.mxu0
      %2522 = vmatprep.subr.mxu0 0.0
      %2523 = vmatpush1.msra.mxu0 %v2268
      %2524 = vmatprep.subr.mxu0 0.0
      %2525 = vmatpush1.msra.mxu0 %v2271
      %2526 = vmatprep.subr.mxu0 0.0
      %2527 = vmatpush1.msra.mxu0 %v2274
      %2528 = vmatprep.subr.mxu0 0.0
      %2529 = vmatpush1.msra.mxu0 %v2277
      %2530 = vmatprep.subr.mxu0 0.0
      %2531 = vmatpush1.msra.mxu0 %v2280
      %2532 = vmatprep.subr.mxu0 0.0
      %2533 = vmatpush1.msra.mxu0 %v2283
      %2534 = vmatprep.subr.mxu0 0.0
      %2535 = vmatpush1.msra.mxu0 %v2286
      %2536 = vmatprep.subr.mxu0 0.0
      %2537 = vmatpush1.msra.mxu0 %v2289
      %2538 = vmatprep.subr.mxu0 0.0
      %2539 = vmatpush1.msra.mxu0 0.0
      %2540 = vmatprep.subr.mxu0 0.0
      %2541 = vmatpush1.msra.mxu0 0.0
      %2542 = vmatprep.subr.mxu0 0.0
      %2543 = vmatpush1.msra.mxu0 0.0
      %2544 = vmatprep.subr.mxu0 0.0
      %2545 = vmatpush1.msra.mxu0 0.0
      %2546 = vmatprep.subr.mxu0 0.0
      %2547 = vmatpush1.msra.mxu0 0.0
      %2548 = vmatprep.subr.mxu0 0.0
      %2549 = vmatpush1.msra.mxu0 0.0
      %2550 = vmatprep.subr.mxu0 0.0
      %2551 = vmatpush1.msra.mxu0 0.0
      %2552 = vmatprep.subr.mxu0 0.0
      %2553 = vmatpush1.msra.mxu0 0.0
      %2554 = vmatprep.subr.mxu0 0.0
      %2555 = vmatpush1.msra.mxu0 0.0
      %2556 = vmatprep.subr.mxu0 0.0
      %2557 = vmatpush1.msra.mxu0 0.0
      %2558 = vmatprep.subr.mxu0 0.0
      %2559 = vmatpush1.msra.mxu0 0.0
      %2560 = vmatprep.subr.mxu0 0.0
      %2561 = vmatpush1.msra.mxu0 0.0
      %2562 = vmatprep.subr.mxu0 0.0
      %2563 = vmatpush1.msra.mxu0 0.0
      %2564 = vmatprep.subr.mxu0 0.0
      %2565 = vmatpush1.msra.mxu0 0.0
      %2566 = vmatprep.subr.mxu0 0.0
      %2567 = vmatpush1.msra.mxu0 0.0
      %2568 = vmatprep.subr.mxu0 0.0
      %2569 = vmatpush1.msra.mxu0 0.0
      %2570 = vmatprep.subr.mxu0 0.0
      %2571 = vmatpush1.msra.mxu0 0.0
      %2572 = vmatprep.subr.mxu0 0.0
      %2573 = vmatpush1.msra.mxu0 0.0
      %2574 = vmatprep.subr.mxu0 0.0
      %2575 = vmatpush1.msra.mxu0 0.0
      %2576 = vmatprep.subr.mxu0 0.0
      %2577 = vmatpush1.msra.mxu0 0.0
      %2578 = vmatprep.subr.mxu0 0.0
      %2579 = vmatpush1.msra.mxu0 0.0
      %2580 = vmatprep.subr.mxu0 0.0
      %2581 = vmatpush1.msra.mxu0 0.0
      %2582 = vmatprep.subr.mxu0 0.0
      %2583 = vmatpush1.msra.mxu0 0.0
      %2584 = vmatprep.subr.mxu0 0.0
      %2585 = vmatpush1.msra.mxu0 0.0
      %2586 = vmatprep.mubr.f32.mxu0 0.0
      %2587 = vmatmul.mubr.f32.gmra.mrb[0].mxu0 %v2308
      %v2588 = vpop.f32.mrb[0].mxu0
      %v2589 = vadd.f32 %v2519, %v2588
      %v2590 = vpop.f32.mrb[0].mxu0
      %2591 = vdwg.mxu0
      %v2592 = vmax.f32 %v2448, 0.0
      %v2593 = vmax.f32 %v2450, 0.0
      %v2594 = vmax.f32 %v2589, 0.0
      %2596 = vrot.lane.b32.xlu0 %v2592, 16
      %v2597 = vpop.permute.xlu0 %2596
      %v2599 = vsel %vm690, 0.0, %v2597
      %v2600 = vsel %vm692, %v2599, 0.0
      %v2602 = vrot.slane %v2600, 6
      %v2604 = vsel %vm697, 0.0, %v2602
      %v2605 = vsel %vm697, %v2602, 0.0
      %v2606 = vld [vmem:[%s13] sm:$0x1]
      %v2607 = vlaneseq
      %v2608 = vshrl.u32 %v2607, 7
      %v2609 = vsub.s32 0, %v2608
      %v2610 = vrot.slane %v2606, %v2609
      %v2611 = vmul.f32 %v2604, %v2610
      %v2612 = vld [vmem:[%s13 + $0x1] sm:$0x1]
      %v2613 = vlaneseq
      %v2614 = vshrl.u32 %v2613, 7
      %v2615 = vsub.s32 0, %v2614
      %v2616 = vrot.slane %v2612, %v2615
      %2618 = vrot.lane.b32.xlu0 %v2616, 8
      %v2619 = vpop.permute.xlu0 %2618
      %v2621 = vmul.f32 %v2604, %v2619
      %v2622 = vld [vmem:[%s13 + $0x2] sm:$0x1]
      %v2623 = vlaneseq
      %v2624 = vshrl.u32 %v2623, 7
      %v2625 = vsub.s32 0, %v2624
      %v2626 = vrot.slane %v2622, %v2625
      %2628 = vrot.lane.b32.xlu0 %v2626, 16
      %v2629 = vpop.permute.xlu0 %2628
      %v2631 = vmul.f32 %v2604, %v2629
      %v2632 = vld [vmem:[%s13 + $0x3] sm:$0x1]
      %v2633 = vlaneseq
      %v2634 = vshrl.u32 %v2633, 7
      %v2635 = vsub.s32 0, %v2634
      %v2636 = vrot.slane %v2632, %v2635
      %2638 = vrot.lane.b32.xlu0 %v2636, 24
      %v2639 = vpop.permute.xlu0 %2638
      %v2641 = vmul.f32 %v2604, %v2639
      %v2642 = vld [vmem:[%s13 + $0x4] sm:$0x1]
      %v2643 = vlaneseq
      %v2644 = vshrl.u32 %v2643, 7
      %v2645 = vsub.s32 0, %v2644
      %v2646 = vrot.slane %v2642, %v2645
      %2648 = vrot.lane.b32.xlu0 %v2646, 32
      %v2649 = vpop.permute.xlu0 %2648
      %v2651 = vmul.f32 %v2604, %v2649
      %v2652 = vld [vmem:[%s13 + $0x5] sm:$0x1]
      %v2653 = vlaneseq
      %v2654 = vshrl.u32 %v2653, 7
      %v2655 = vsub.s32 0, %v2654
      %v2656 = vrot.slane %v2652, %v2655
      %v2657 = vmul.f32 %v2604, %v2656
      %v2658 = vmul.f32 %v2605, %v2656
      %v2659 = vld [vmem:[%s13 + $0x6] sm:$0x1]
      %v2660 = vlaneseq
      %v2661 = vshrl.u32 %v2660, 7
      %v2662 = vsub.s32 0, %v2661
      %v2663 = vrot.slane %v2659, %v2662
      %2665 = vrot.lane.b32.xlu0 %v2663, 8
      %v2666 = vpop.permute.xlu0 %2665
      %v2668 = vmul.f32 %v2604, %v2666
      %v2669 = vmul.f32 %v2605, %v2666
      %v2670 = vld [vmem:[%s13 + $0x7] sm:$0x1]
      %v2671 = vlaneseq
      %v2672 = vshrl.u32 %v2671, 7
      %v2673 = vsub.s32 0, %v2672
      %v2674 = vrot.slane %v2670, %v2673
      %2676 = vrot.lane.b32.xlu0 %v2674, 16
      %v2677 = vpop.permute.xlu0 %2676
      %v2679 = vmul.f32 %v2604, %v2677
      %v2680 = vmul.f32 %v2605, %v2677
      %v2681 = vld [vmem:[%s13 + $0x8] sm:$0x1]
      %v2682 = vlaneseq
      %v2683 = vshrl.u32 %v2682, 7
      %v2684 = vsub.s32 0, %v2683
      %v2685 = vrot.slane %v2681, %v2684
      %2687 = vrot.lane.b32.xlu0 %v2685, 24
      %v2688 = vpop.permute.xlu0 %2687
      %v2690 = vmul.f32 %v2604, %v2688
      %v2691 = vmul.f32 %v2605, %v2688
      %v2692 = vld [vmem:[%s13 + $0x9] sm:$0x1]
      %v2693 = vlaneseq
      %v2694 = vshrl.u32 %v2693, 7
      %v2695 = vsub.s32 0, %v2694
      %v2696 = vrot.slane %v2692, %v2695
      %2698 = vrot.lane.b32.xlu0 %v2696, 32
      %v2699 = vpop.permute.xlu0 %2698
      %v2701 = vmul.f32 %v2604, %v2699
      %v2702 = vmul.f32 %v2605, %v2699
      %v2703 = vld [vmem:[%s13 + $0xa] sm:$0x1]
      %v2704 = vlaneseq
      %v2705 = vshrl.u32 %v2704, 7
      %v2706 = vsub.s32 0, %v2705
      %v2707 = vrot.slane %v2703, %v2706
      %v2708 = vmul.f32 %v2604, %v2707
      %v2709 = vmul.f32 %v2605, %v2707
      %v2710 = vld [vmem:[%s13 + $0xb] sm:$0x1]
      %v2711 = vlaneseq
      %v2712 = vshrl.u32 %v2711, 7
      %v2713 = vsub.s32 0, %v2712
      %v2714 = vrot.slane %v2710, %v2713
      %2716 = vrot.lane.b32.xlu0 %v2714, 8
      %v2717 = vpop.permute.xlu0 %2716
      %v2719 = vmul.f32 %v2604, %v2717
      %v2720 = vmul.f32 %v2605, %v2717
      %v2721 = vld [vmem:[%s13 + $0xc] sm:$0x1]
      %v2722 = vlaneseq
      %v2723 = vshrl.u32 %v2722, 7
      %v2724 = vsub.s32 0, %v2723
      %v2725 = vrot.slane %v2721, %v2724
      %2727 = vrot.lane.b32.xlu0 %v2725, 16
      %v2728 = vpop.permute.xlu0 %2727
      %v2730 = vmul.f32 %v2604, %v2728
      %v2731 = vmul.f32 %v2605, %v2728
      %v2732 = vld [vmem:[%s13 + $0xd] sm:$0x1]
      %v2733 = vlaneseq
      %v2734 = vshrl.u32 %v2733, 7
      %v2735 = vsub.s32 0, %v2734
      %v2736 = vrot.slane %v2732, %v2735
      %2738 = vrot.lane.b32.xlu0 %v2736, 24
      %v2739 = vpop.permute.xlu0 %2738
      %v2741 = vmul.f32 %v2604, %v2739
      %v2742 = vmul.f32 %v2605, %v2739
      %v2743 = vld [vmem:[%s13 + $0xe] sm:$0x1]
      %v2744 = vlaneseq
      %v2745 = vshrl.u32 %v2744, 7
      %v2746 = vsub.s32 0, %v2745
      %v2747 = vrot.slane %v2743, %v2746
      %2749 = vrot.lane.b32.xlu0 %v2747, 32
      %v2750 = vpop.permute.xlu0 %2749
      %v2752 = vmul.f32 %v2604, %v2750
      %v2753 = vmul.f32 %v2605, %v2750
      %v2754 = vld [vmem:[%s13 + $0xf] sm:$0x1]
      %v2755 = vlaneseq
      %v2756 = vshrl.u32 %v2755, 7
      %v2757 = vsub.s32 0, %v2756
      %v2758 = vrot.slane %v2754, %v2757
      %v2759 = vmul.f32 %v2604, %v2758
      %v2760 = vmul.f32 %v2605, %v2758
      %v2761 = vld [vmem:[%s13 + $0x10] sm:$0x1]
      %v2762 = vlaneseq
      %v2763 = vshrl.u32 %v2762, 7
      %v2764 = vsub.s32 0, %v2763
      %v2765 = vrot.slane %v2761, %v2764
      %2767 = vrot.lane.b32.xlu0 %v2765, 8
      %v2768 = vpop.permute.xlu0 %2767
      %v2770 = vmul.f32 %v2604, %v2768
      %v2771 = vmul.f32 %v2605, %v2768
      %v2772 = vld [vmem:[%s13 + $0x11] sm:$0x1]
      %v2773 = vlaneseq
      %v2774 = vshrl.u32 %v2773, 7
      %v2775 = vsub.s32 0, %v2774
      %v2776 = vrot.slane %v2772, %v2775
      %2778 = vrot.lane.b32.xlu0 %v2776, 16
      %v2779 = vpop.permute.xlu0 %2778
      %v2781 = vmul.f32 %v2604, %v2779
      %v2782 = vmul.f32 %v2605, %v2779
      %v2783 = vld [vmem:[%s13 + $0x12] sm:$0x1]
      %v2784 = vlaneseq
      %v2785 = vshrl.u32 %v2784, 7
      %v2786 = vsub.s32 0, %v2785
      %v2787 = vrot.slane %v2783, %v2786
      %2789 = vrot.lane.b32.xlu0 %v2787, 24
      %v2790 = vpop.permute.xlu0 %2789
      %v2792 = vmul.f32 %v2604, %v2790
      %v2793 = vmul.f32 %v2605, %v2790
      %v2794 = vld [vmem:[%s13 + $0x13] sm:$0x1]
      %v2795 = vlaneseq
      %v2796 = vshrl.u32 %v2795, 7
      %v2797 = vsub.s32 0, %v2796
      %v2798 = vrot.slane %v2794, %v2797
      %2800 = vrot.lane.b32.xlu0 %v2798, 32
      %v2801 = vpop.permute.xlu0 %2800
      %v2803 = vmul.f32 %v2604, %v2801
      %v2804 = vmul.f32 %v2605, %v2801
      %v2805 = vld [vmem:[%s13 + $0x14] sm:$0x1]
      %v2806 = vlaneseq
      %v2807 = vshrl.u32 %v2806, 7
      %v2808 = vsub.s32 0, %v2807
      %v2809 = vrot.slane %v2805, %v2808
      %v2810 = vmul.f32 %v2604, %v2809
      %v2811 = vmul.f32 %v2605, %v2809
      %v2812 = vld [vmem:[%s13 + $0x15] sm:$0x1]
      %v2813 = vlaneseq
      %v2814 = vshrl.u32 %v2813, 7
      %v2815 = vsub.s32 0, %v2814
      %v2816 = vrot.slane %v2812, %v2815
      %2818 = vrot.lane.b32.xlu0 %v2816, 8
      %v2819 = vpop.permute.xlu0 %2818
      %v2821 = vmul.f32 %v2604, %v2819
      %v2822 = vmul.f32 %v2605, %v2819
      %v2823 = vld [vmem:[%s13 + $0x16] sm:$0x1]
      %v2824 = vlaneseq
      %v2825 = vshrl.u32 %v2824, 7
      %v2826 = vsub.s32 0, %v2825
      %v2827 = vrot.slane %v2823, %v2826
      %2829 = vrot.lane.b32.xlu0 %v2827, 16
      %v2830 = vpop.permute.xlu0 %2829
      %v2832 = vmul.f32 %v2604, %v2830
      %v2833 = vmul.f32 %v2605, %v2830
      %v2834 = vld [vmem:[%s13 + $0x17] sm:$0x1]
      %v2835 = vlaneseq
      %v2836 = vshrl.u32 %v2835, 7
      %v2837 = vsub.s32 0, %v2836
      %v2838 = vrot.slane %v2834, %v2837
      %2840 = vrot.lane.b32.xlu0 %v2838, 24
      %v2841 = vpop.permute.xlu0 %2840
      %v2843 = vmul.f32 %v2604, %v2841
      %v2844 = vmul.f32 %v2605, %v2841
      %v2845 = vld [vmem:[%s13 + $0x18] sm:$0x1]
      %v2846 = vlaneseq
      %v2847 = vshrl.u32 %v2846, 7
      %v2848 = vsub.s32 0, %v2847
      %v2849 = vrot.slane %v2845, %v2848
      %2851 = vrot.lane.b32.xlu0 %v2849, 32
      %v2852 = vpop.permute.xlu0 %2851
      %v2854 = vmul.f32 %v2604, %v2852
      %v2855 = vmul.f32 %v2605, %v2852
      %2857 = vrot.lane.b32.xlu0 %v2621, 120
      %v2858 = vpop.permute.xlu0 %2857
      %v2860 = vadd.f32 %v2611, %v2858
      %2862 = vrot.lane.b32.xlu0 %v2641, 120
      %v2863 = vpop.permute.xlu0 %2862
      %v2865 = vadd.f32 %v2631, %v2863
      %v2868 = vrot.slane %v2657, 1
      %v2869 = vrot.slane %v2658, 1
      %v2870 = vsel %vm962, %v2868, %v2869
      %2871 = vrot.lane.b32.xlu0 %v2870, 32
      %v2872 = vpop.permute.xlu0 %2871
      %v2874 = vadd.f32 %v2651, %v2872
      %2877 = vrot.lane.b32.xlu0 %v2679, 120
      %v2878 = vpop.permute.xlu0 %2877
      %2879 = vrot.lane.b32.xlu0 %v2680, 120
      %v2880 = vpop.permute.xlu0 %2879
      %v2883 = vadd.f32 %v2668, %v2878
      %v2884 = vadd.f32 %v2669, %v2880
      %2887 = vrot.lane.b32.xlu0 %v2701, 120
      %v2888 = vpop.permute.xlu0 %2887
      %2889 = vrot.lane.b32.xlu0 %v2702, 120
      %v2890 = vpop.permute.xlu0 %2889
      %v2893 = vadd.f32 %v2690, %v2888
      %v2894 = vadd.f32 %v2691, %v2890
      %2897 = vrot.lane.b32.xlu0 %v2719, 120
      %v2898 = vpop.permute.xlu0 %2897
      %2899 = vrot.lane.b32.xlu0 %v2720, 120
      %v2900 = vpop.permute.xlu0 %2899
      %v2903 = vadd.f32 %v2708, %v2898
      %v2904 = vadd.f32 %v2709, %v2900
      %2907 = vrot.lane.b32.xlu0 %v2741, 120
      %v2908 = vpop.permute.xlu0 %2907
      %2909 = vrot.lane.b32.xlu0 %v2742, 120
      %v2910 = vpop.permute.xlu0 %2909
      %v2913 = vadd.f32 %v2730, %v2908
      %v2914 = vadd.f32 %v2731, %v2910
      %v2917 = vrot.slane %v2759, 1
      %v2918 = vrot.slane %v2760, 1
      %v2919 = vsel %vm962, %v2917, %v2918
      %2920 = vrot.lane.b32.xlu0 %v2919, 32
      %v2921 = vpop.permute.xlu0 %2920
      %2922 = vrot.lane.b32.xlu0 %v2918, 32
      %v2923 = vpop.permute.xlu0 %2922
      %v2926 = vadd.f32 %v2752, %v2921
      %v2927 = vadd.f32 %v2753, %v2923
      %2930 = vrot.lane.b32.xlu0 %v2781, 120
      %v2931 = vpop.permute.xlu0 %2930
      %2932 = vrot.lane.b32.xlu0 %v2782, 120
      %v2933 = vpop.permute.xlu0 %2932
      %v2936 = vadd.f32 %v2770, %v2931
      %v2937 = vadd.f32 %v2771, %v2933
      %2940 = vrot.lane.b32.xlu0 %v2803, 120
      %v2941 = vpop.permute.xlu0 %2940
      %2942 = vrot.lane.b32.xlu0 %v2804, 120
      %v2943 = vpop.permute.xlu0 %2942
      %v2946 = vadd.f32 %v2792, %v2941
      %v2947 = vadd.f32 %v2793, %v2943
      %2950 = vrot.lane.b32.xlu0 %v2821, 120
      %v2951 = vpop.permute.xlu0 %2950
      %2952 = vrot.lane.b32.xlu0 %v2822, 120
      %v2953 = vpop.permute.xlu0 %2952
      %v2956 = vadd.f32 %v2810, %v2951
      %v2957 = vadd.f32 %v2811, %v2953
      %2960 = vrot.lane.b32.xlu0 %v2843, 120
      %v2961 = vpop.permute.xlu0 %2960
      %2962 = vrot.lane.b32.xlu0 %v2844, 120
      %v2963 = vpop.permute.xlu0 %2962
      %v2966 = vadd.f32 %v2832, %v2961
      %v2967 = vadd.f32 %v2833, %v2963
      %2969 = vrot.lane.b32.xlu0 %v2865, 112
      %v2970 = vpop.permute.xlu0 %2969
      %v2972 = vadd.f32 %v2860, %v2970
      %v2975 = vrot.slane %v2883, 1
      %v2976 = vrot.slane %v2884, 1
      %v2977 = vsel %vm962, %v2975, %v2976
      %2978 = vrot.lane.b32.xlu0 %v2977, 24
      %v2979 = vpop.permute.xlu0 %2978
      %v2981 = vadd.f32 %v2874, %v2979
      %v2984 = vrot.slane %v2903, 1
      %v2985 = vrot.slane %v2904, 1
      %v2986 = vsel %vm962, %v2984, %v2985
      %2987 = vrot.lane.b32.xlu0 %v2986, 24
      %v2988 = vpop.permute.xlu0 %2987
      %2989 = vrot.lane.b32.xlu0 %v2985, 24
      %v2990 = vpop.permute.xlu0 %2989
      %v2993 = vadd.f32 %v2893, %v2988
      %v2994 = vadd.f32 %v2894, %v2990
      %2997 = vrot.lane.b32.xlu0 %v2926, 112
      %v2998 = vpop.permute.xlu0 %2997
      %2999 = vrot.lane.b32.xlu0 %v2927, 112
      %v3000 = vpop.permute.xlu0 %2999
      %v3003 = vadd.f32 %v2913, %v2998
      %v3004 = vadd.f32 %v2914, %v3000
      %3007 = vrot.lane.b32.xlu0 %v2946, 112
      %v3008 = vpop.permute.xlu0 %3007
      %3009 = vrot.lane.b32.xlu0 %v2947, 112
      %v3010 = vpop.permute.xlu0 %3009
      %v3013 = vadd.f32 %v2936, %v3008
      %v3014 = vadd.f32 %v2937, %v3010
      %3017 = vrot.lane.b32.xlu0 %v2966, 112
      %v3018 = vpop.permute.xlu0 %3017
      %3019 = vrot.lane.b32.xlu0 %v2967, 112
      %v3020 = vpop.permute.xlu0 %3019
      %v3023 = vadd.f32 %v2956, %v3018
      %v3024 = vadd.f32 %v2957, %v3020
      %3026 = vrot.lane.b32.xlu0 %v2981, 96
      %v3027 = vpop.permute.xlu0 %3026
      %v3029 = vadd.f32 %v2972, %v3027
      %v3032 = vrot.slane %v3003, 1
      %v3033 = vrot.slane %v3004, 1
      %v3034 = vsel %vm962, %v3032, %v3033
      %3035 = vrot.lane.b32.xlu0 %v3034, 8
      %v3036 = vpop.permute.xlu0 %3035
      %3037 = vrot.lane.b32.xlu0 %v3033, 8
      %v3038 = vpop.permute.xlu0 %3037
      %v3041 = vadd.f32 %v2993, %v3036
      %v3042 = vadd.f32 %v2994, %v3038
      %v3045 = vrot.slane %v3023, 1
      %v3046 = vrot.slane %v3024, 1
      %v3047 = vsel %vm962, %v3045, %v3046
      %3048 = vrot.lane.b32.xlu0 %v3047, 8
      %v3049 = vpop.permute.xlu0 %3048
      %3050 = vrot.lane.b32.xlu0 %v3046, 8
      %v3051 = vpop.permute.xlu0 %3050
      %v3054 = vadd.f32 %v3013, %v3049
      %v3055 = vadd.f32 %v3014, %v3051
      %v3058 = vrot.slane %v3041, 1
      %v3059 = vrot.slane %v3042, 1
      %v3060 = vsel %vm962, %v3058, %v3059
      %3061 = vrot.lane.b32.xlu0 %v3060, 104
      %v3062 = vpop.permute.xlu0 %3061
      %v3064 = vadd.f32 %v3029, %v3062
      %v3067 = vrot.slane %v2854, 1
      %v3068 = vrot.slane %v2855, 1
      %v3069 = vsel %vm962, %v3067, %v3068
      %3070 = vrot.lane.b32.xlu0 %v3069, 104
      %v3071 = vpop.permute.xlu0 %3070
      %3072 = vrot.lane.b32.xlu0 %v3068, 104
      %v3073 = vpop.permute.xlu0 %3072
      %v3076 = vadd.f32 %v3054, %v3071
      %v3077 = vadd.f32 %v3055, %v3073
      %v3080 = vrot.slane %v3076, 3
      %v3081 = vrot.slane %v3077, 3
      %v3082 = vsel %vm1175, %v3080, %v3081
      %3083 = vrot.lane.b32.xlu0 %v3082, 120
      %v3084 = vpop.permute.xlu0 %3083
      %v3086 = vadd.f32 %v3064, %v3084
      %3087 = vrot.lane.b32.xlu0 %v2592, 72
      %v3088 = vpop.permute.xlu0 %3087
      %v3090 = vsel %vm1186, 0.0, %v3088
      %v3091 = vsel %vm1188, %v3090, 0.0
      %v3093 = vrot.slane %v3091, 7
      %v3095 = vsel %vm1193, 0.0, %v3093
      %v3096 = vsel %vm1193, %v3093, 0.0
      %v3097 = vld [vmem:[%s14] sm:$0x1]
      %v3098 = vlaneseq
      %v3099 = vshrl.u32 %v3098, 7
      %v3100 = vsub.s32 0, %v3099
      %v3101 = vrot.slane %v3097, %v3100
      %v3102 = vmul.f32 %v3095, %v3101
      %v3103 = vld [vmem:[%s14 + $0x1] sm:$0x1]
      %v3104 = vlaneseq
      %v3105 = vshrl.u32 %v3104, 7
      %v3106 = vsub.s32 0, %v3105
      %v3107 = vrot.slane %v3103, %v3106
      %3109 = vrot.lane.b32.xlu0 %v3107, 8
      %v3110 = vpop.permute.xlu0 %3109
      %v3112 = vmul.f32 %v3095, %v3110
      %v3113 = vld [vmem:[%s14 + $0x2] sm:$0x1]
      %v3114 = vlaneseq
      %v3115 = vshrl.u32 %v3114, 7
      %v3116 = vsub.s32 0, %v3115
      %v3117 = vrot.slane %v3113, %v3116
      %3119 = vrot.lane.b32.xlu0 %v3117, 16
      %v3120 = vpop.permute.xlu0 %3119
      %v3122 = vmul.f32 %v3095, %v3120
      %v3123 = vld [vmem:[%s14 + $0x3] sm:$0x1]
      %v3124 = vlaneseq
      %v3125 = vshrl.u32 %v3124, 7
      %v3126 = vsub.s32 0, %v3125
      %v3127 = vrot.slane %v3123, %v3126
      %v3128 = vmul.f32 %v3095, %v3127
      %v3129 = vmul.f32 %v3096, %v3127
      %v3130 = vld [vmem:[%s14 + $0x4] sm:$0x1]
      %v3131 = vlaneseq
      %v3132 = vshrl.u32 %v3131, 7
      %v3133 = vsub.s32 0, %v3132
      %v3134 = vrot.slane %v3130, %v3133
      %3136 = vrot.lane.b32.xlu0 %v3134, 8
      %v3137 = vpop.permute.xlu0 %3136
      %v3139 = vmul.f32 %v3095, %v3137
      %v3140 = vmul.f32 %v3096, %v3137
      %v3141 = vld [vmem:[%s14 + $0x5] sm:$0x1]
      %v3142 = vlaneseq
      %v3143 = vshrl.u32 %v3142, 7
      %v3144 = vsub.s32 0, %v3143
      %v3145 = vrot.slane %v3141, %v3144
      %3147 = vrot.lane.b32.xlu0 %v3145, 16
      %v3148 = vpop.permute.xlu0 %3147
      %v3150 = vmul.f32 %v3095, %v3148
      %v3151 = vmul.f32 %v3096, %v3148
      %v3152 = vld [vmem:[%s14 + $0x6] sm:$0x1]
      %v3153 = vlaneseq
      %v3154 = vshrl.u32 %v3153, 7
      %v3155 = vsub.s32 0, %v3154
      %v3156 = vrot.slane %v3152, %v3155
      %v3157 = vmul.f32 %v3095, %v3156
      %v3158 = vmul.f32 %v3096, %v3156
      %v3159 = vld [vmem:[%s14 + $0x7] sm:$0x1]
      %v3160 = vlaneseq
      %v3161 = vshrl.u32 %v3160, 7
      %v3162 = vsub.s32 0, %v3161
      %v3163 = vrot.slane %v3159, %v3162
      %3165 = vrot.lane.b32.xlu0 %v3163, 8
      %v3166 = vpop.permute.xlu0 %3165
      %v3168 = vmul.f32 %v3095, %v3166
      %v3169 = vmul.f32 %v3096, %v3166
      %v3170 = vld [vmem:[%s14 + $0x8] sm:$0x1]
      %v3171 = vlaneseq
      %v3172 = vshrl.u32 %v3171, 7
      %v3173 = vsub.s32 0, %v3172
      %v3174 = vrot.slane %v3170, %v3173
      %3176 = vrot.lane.b32.xlu0 %v3174, 16
      %v3177 = vpop.permute.xlu0 %3176
      %v3179 = vmul.f32 %v3095, %v3177
      %v3180 = vmul.f32 %v3096, %v3177
      %3182 = vrot.lane.b32.xlu0 %v3112, 120
      %v3183 = vpop.permute.xlu0 %3182
      %v3185 = vadd.f32 %v3102, %v3183
      %v3188 = vrot.slane %v3128, 1
      %v3189 = vrot.slane %v3129, 1
      %v3190 = vsel %vm962, %v3188, %v3189
      %3191 = vrot.lane.b32.xlu0 %v3190, 16
      %v3192 = vpop.permute.xlu0 %3191
      %v3194 = vadd.f32 %v3122, %v3192
      %3197 = vrot.lane.b32.xlu0 %v3150, 120
      %v3198 = vpop.permute.xlu0 %3197
      %3199 = vrot.lane.b32.xlu0 %v3151, 120
      %v3200 = vpop.permute.xlu0 %3199
      %v3203 = vadd.f32 %v3139, %v3198
      %v3204 = vadd.f32 %v3140, %v3200
      %3207 = vrot.lane.b32.xlu0 %v3168, 120
      %v3208 = vpop.permute.xlu0 %3207
      %3209 = vrot.lane.b32.xlu0 %v3169, 120
      %v3210 = vpop.permute.xlu0 %3209
      %v3213 = vadd.f32 %v3157, %v3208
      %v3214 = vadd.f32 %v3158, %v3210
      %3216 = vrot.lane.b32.xlu0 %v3194, 112
      %v3217 = vpop.permute.xlu0 %3216
      %v3219 = vadd.f32 %v3185, %v3217
      %v3222 = vrot.slane %v3213, 1
      %v3223 = vrot.slane %v3214, 1
      %v3224 = vsel %vm962, %v3222, %v3223
      %3225 = vrot.lane.b32.xlu0 %v3224, 8
      %v3226 = vpop.permute.xlu0 %3225
      %3227 = vrot.lane.b32.xlu0 %v3223, 8
      %v3228 = vpop.permute.xlu0 %3227
      %v3231 = vadd.f32 %v3203, %v3226
      %v3232 = vadd.f32 %v3204, %v3228
      %v3235 = vrot.slane %v3231, 1
      %v3236 = vrot.slane %v3232, 1
      %v3237 = vsel %vm962, %v3235, %v3236
      %3238 = vrot.lane.b32.xlu0 %v3237, 120
      %v3239 = vpop.permute.xlu0 %3238
      %v3241 = vadd.f32 %v3219, %v3239
      %v3244 = vrot.slane %v3179, 2
      %v3245 = vrot.slane %v3180, 2
      %v3246 = vsel %vm1343, %v3244, %v3245
      %3247 = vrot.lane.b32.xlu0 %v3246, 112
      %v3248 = vpop.permute.xlu0 %3247
      %v3250 = vadd.f32 %v3241, %v3248
      %3252 = vrot.lane.b32.xlu0 %v2593, 16
      %v3253 = vpop.permute.xlu0 %3252
      %v3255 = vsel %vm690, 0.0, %v3253
      %v3256 = vsel %vm692, %v3255, 0.0
      %v3258 = vrot.slane %v3256, 6
      %v3260 = vsel %vm697, 0.0, %v3258
      %v3261 = vsel %vm697, %v3258, 0.0
      %v3262 = vld [vmem:[%s15] sm:$0x1]
      %v3263 = vlaneseq
      %v3264 = vshrl.u32 %v3263, 7
      %v3265 = vsub.s32 0, %v3264
      %v3266 = vrot.slane %v3262, %v3265
      %v3267 = vmul.f32 %v3260, %v3266
      %v3268 = vld [vmem:[%s15 + $0x1] sm:$0x1]
      %v3269 = vlaneseq
      %v3270 = vshrl.u32 %v3269, 7
      %v3271 = vsub.s32 0, %v3270
      %v3272 = vrot.slane %v3268, %v3271
      %3274 = vrot.lane.b32.xlu0 %v3272, 8
      %v3275 = vpop.permute.xlu0 %3274
      %v3277 = vmul.f32 %v3260, %v3275
      %v3278 = vld [vmem:[%s15 + $0x2] sm:$0x1]
      %v3279 = vlaneseq
      %v3280 = vshrl.u32 %v3279, 7
      %v3281 = vsub.s32 0, %v3280
      %v3282 = vrot.slane %v3278, %v3281
      %3284 = vrot.lane.b32.xlu0 %v3282, 16
      %v3285 = vpop.permute.xlu0 %3284
      %v3287 = vmul.f32 %v3260, %v3285
      %v3288 = vld [vmem:[%s15 + $0x3] sm:$0x1]
      %v3289 = vlaneseq
      %v3290 = vshrl.u32 %v3289, 7
      %v3291 = vsub.s32 0, %v3290
      %v3292 = vrot.slane %v3288, %v3291
      %3294 = vrot.lane.b32.xlu0 %v3292, 24
      %v3295 = vpop.permute.xlu0 %3294
      %v3297 = vmul.f32 %v3260, %v3295
      %v3298 = vld [vmem:[%s15 + $0x4] sm:$0x1]
      %v3299 = vlaneseq
      %v3300 = vshrl.u32 %v3299, 7
      %v3301 = vsub.s32 0, %v3300
      %v3302 = vrot.slane %v3298, %v3301
      %3304 = vrot.lane.b32.xlu0 %v3302, 32
      %v3305 = vpop.permute.xlu0 %3304
      %v3307 = vmul.f32 %v3260, %v3305
      %v3308 = vld [vmem:[%s15 + $0x5] sm:$0x1]
      %v3309 = vlaneseq
      %v3310 = vshrl.u32 %v3309, 7
      %v3311 = vsub.s32 0, %v3310
      %v3312 = vrot.slane %v3308, %v3311
      %v3313 = vmul.f32 %v3260, %v3312
      %v3314 = vmul.f32 %v3261, %v3312
      %v3315 = vld [vmem:[%s15 + $0x6] sm:$0x1]
      %v3316 = vlaneseq
      %v3317 = vshrl.u32 %v3316, 7
      %v3318 = vsub.s32 0, %v3317
      %v3319 = vrot.slane %v3315, %v3318
      %3321 = vrot.lane.b32.xlu0 %v3319, 8
      %v3322 = vpop.permute.xlu0 %3321
      %v3324 = vmul.f32 %v3260, %v3322
      %v3325 = vmul.f32 %v3261, %v3322
      %v3326 = vld [vmem:[%s15 + $0x7] sm:$0x1]
      %v3327 = vlaneseq
      %v3328 = vshrl.u32 %v3327, 7
      %v3329 = vsub.s32 0, %v3328
      %v3330 = vrot.slane %v3326, %v3329
      %3332 = vrot.lane.b32.xlu0 %v3330, 16
      %v3333 = vpop.permute.xlu0 %3332
      %v3335 = vmul.f32 %v3260, %v3333
      %v3336 = vmul.f32 %v3261, %v3333
      %v3337 = vld [vmem:[%s15 + $0x8] sm:$0x1]
      %v3338 = vlaneseq
      %v3339 = vshrl.u32 %v3338, 7
      %v3340 = vsub.s32 0, %v3339
      %v3341 = vrot.slane %v3337, %v3340
      %3343 = vrot.lane.b32.xlu0 %v3341, 24
      %v3344 = vpop.permute.xlu0 %3343
      %v3346 = vmul.f32 %v3260, %v3344
      %v3347 = vmul.f32 %v3261, %v3344
      %v3348 = vld [vmem:[%s15 + $0x9] sm:$0x1]
      %v3349 = vlaneseq
      %v3350 = vshrl.u32 %v3349, 7
      %v3351 = vsub.s32 0, %v3350
      %v3352 = vrot.slane %v3348, %v3351
      %3354 = vrot.lane.b32.xlu0 %v3352, 32
      %v3355 = vpop.permute.xlu0 %3354
      %v3357 = vmul.f32 %v3260, %v3355
      %v3358 = vmul.f32 %v3261, %v3355
      %v3359 = vld [vmem:[%s15 + $0xa] sm:$0x1]
      %v3360 = vlaneseq
      %v3361 = vshrl.u32 %v3360, 7
      %v3362 = vsub.s32 0, %v3361
      %v3363 = vrot.slane %v3359, %v3362
      %v3364 = vmul.f32 %v3260, %v3363
      %v3365 = vmul.f32 %v3261, %v3363
      %v3366 = vld [vmem:[%s15 + $0xb] sm:$0x1]
      %v3367 = vlaneseq
      %v3368 = vshrl.u32 %v3367, 7
      %v3369 = vsub.s32 0, %v3368
      %v3370 = vrot.slane %v3366, %v3369
      %3372 = vrot.lane.b32.xlu0 %v3370, 8
      %v3373 = vpop.permute.xlu0 %3372
      %v3375 = vmul.f32 %v3260, %v3373
      %v3376 = vmul.f32 %v3261, %v3373
      %v3377 = vld [vmem:[%s15 + $0xc] sm:$0x1]
      %v3378 = vlaneseq
      %v3379 = vshrl.u32 %v3378, 7
      %v3380 = vsub.s32 0, %v3379
      %v3381 = vrot.slane %v3377, %v3380
      %3383 = vrot.lane.b32.xlu0 %v3381, 16
      %v3384 = vpop.permute.xlu0 %3383
      %v3386 = vmul.f32 %v3260, %v3384
      %v3387 = vmul.f32 %v3261, %v3384
      %v3388 = vld [vmem:[%s15 + $0xd] sm:$0x1]
      %v3389 = vlaneseq
      %v3390 = vshrl.u32 %v3389, 7
      %v3391 = vsub.s32 0, %v3390
      %v3392 = vrot.slane %v3388, %v3391
      %3394 = vrot.lane.b32.xlu0 %v3392, 24
      %v3395 = vpop.permute.xlu0 %3394
      %v3397 = vmul.f32 %v3260, %v3395
      %v3398 = vmul.f32 %v3261, %v3395
      %v3399 = vld [vmem:[%s15 + $0xe] sm:$0x1]
      %v3400 = vlaneseq
      %v3401 = vshrl.u32 %v3400, 7
      %v3402 = vsub.s32 0, %v3401
      %v3403 = vrot.slane %v3399, %v3402
      %3405 = vrot.lane.b32.xlu0 %v3403, 32
      %v3406 = vpop.permute.xlu0 %3405
      %v3408 = vmul.f32 %v3260, %v3406
      %v3409 = vmul.f32 %v3261, %v3406
      %v3410 = vld [vmem:[%s15 + $0xf] sm:$0x1]
      %v3411 = vlaneseq
      %v3412 = vshrl.u32 %v3411, 7
      %v3413 = vsub.s32 0, %v3412
      %v3414 = vrot.slane %v3410, %v3413
      %v3415 = vmul.f32 %v3260, %v3414
      %v3416 = vmul.f32 %v3261, %v3414
      %v3417 = vld [vmem:[%s15 + $0x10] sm:$0x1]
      %v3418 = vlaneseq
      %v3419 = vshrl.u32 %v3418, 7
      %v3420 = vsub.s32 0, %v3419
      %v3421 = vrot.slane %v3417, %v3420
      %3423 = vrot.lane.b32.xlu0 %v3421, 8
      %v3424 = vpop.permute.xlu0 %3423
      %v3426 = vmul.f32 %v3260, %v3424
      %v3427 = vmul.f32 %v3261, %v3424
      %v3428 = vld [vmem:[%s15 + $0x11] sm:$0x1]
      %v3429 = vlaneseq
      %v3430 = vshrl.u32 %v3429, 7
      %v3431 = vsub.s32 0, %v3430
      %v3432 = vrot.slane %v3428, %v3431
      %3434 = vrot.lane.b32.xlu0 %v3432, 16
      %v3435 = vpop.permute.xlu0 %3434
      %v3437 = vmul.f32 %v3260, %v3435
      %v3438 = vmul.f32 %v3261, %v3435
      %v3439 = vld [vmem:[%s15 + $0x12] sm:$0x1]
      %v3440 = vlaneseq
      %v3441 = vshrl.u32 %v3440, 7
      %v3442 = vsub.s32 0, %v3441
      %v3443 = vrot.slane %v3439, %v3442
      %3445 = vrot.lane.b32.xlu0 %v3443, 24
      %v3446 = vpop.permute.xlu0 %3445
      %v3448 = vmul.f32 %v3260, %v3446
      %v3449 = vmul.f32 %v3261, %v3446
      %v3450 = vld [vmem:[%s15 + $0x13] sm:$0x1]
      %v3451 = vlaneseq
      %v3452 = vshrl.u32 %v3451, 7
      %v3453 = vsub.s32 0, %v3452
      %v3454 = vrot.slane %v3450, %v3453
      %3456 = vrot.lane.b32.xlu0 %v3454, 32
      %v3457 = vpop.permute.xlu0 %3456
      %v3459 = vmul.f32 %v3260, %v3457
      %v3460 = vmul.f32 %v3261, %v3457
      %v3461 = vld [vmem:[%s15 + $0x14] sm:$0x1]
      %v3462 = vlaneseq
      %v3463 = vshrl.u32 %v3462, 7
      %v3464 = vsub.s32 0, %v3463
      %v3465 = vrot.slane %v3461, %v3464
      %v3466 = vmul.f32 %v3260, %v3465
      %v3467 = vmul.f32 %v3261, %v3465
      %v3468 = vld [vmem:[%s15 + $0x15] sm:$0x1]
      %v3469 = vlaneseq
      %v3470 = vshrl.u32 %v3469, 7
      %v3471 = vsub.s32 0, %v3470
      %v3472 = vrot.slane %v3468, %v3471
      %3474 = vrot.lane.b32.xlu0 %v3472, 8
      %v3475 = vpop.permute.xlu0 %3474
      %v3477 = vmul.f32 %v3260, %v3475
      %v3478 = vmul.f32 %v3261, %v3475
      %v3479 = vld [vmem:[%s15 + $0x16] sm:$0x1]
      %v3480 = vlaneseq
      %v3481 = vshrl.u32 %v3480, 7
      %v3482 = vsub.s32 0, %v3481
      %v3483 = vrot.slane %v3479, %v3482
      %3485 = vrot.lane.b32.xlu0 %v3483, 16
      %v3486 = vpop.permute.xlu0 %3485
      %v3488 = vmul.f32 %v3260, %v3486
      %v3489 = vmul.f32 %v3261, %v3486
      %v3490 = vld [vmem:[%s15 + $0x17] sm:$0x1]
      %v3491 = vlaneseq
      %v3492 = vshrl.u32 %v3491, 7
      %v3493 = vsub.s32 0, %v3492
      %v3494 = vrot.slane %v3490, %v3493
      %3496 = vrot.lane.b32.xlu0 %v3494, 24
      %v3497 = vpop.permute.xlu0 %3496
      %v3499 = vmul.f32 %v3260, %v3497
      %v3500 = vmul.f32 %v3261, %v3497
      %v3501 = vld [vmem:[%s15 + $0x18] sm:$0x1]
      %v3502 = vlaneseq
      %v3503 = vshrl.u32 %v3502, 7
      %v3504 = vsub.s32 0, %v3503
      %v3505 = vrot.slane %v3501, %v3504
      %3507 = vrot.lane.b32.xlu0 %v3505, 32
      %v3508 = vpop.permute.xlu0 %3507
      %v3510 = vmul.f32 %v3260, %v3508
      %v3511 = vmul.f32 %v3261, %v3508
      %3513 = vrot.lane.b32.xlu0 %v3277, 120
      %v3514 = vpop.permute.xlu0 %3513
      %v3516 = vadd.f32 %v3267, %v3514
      %3518 = vrot.lane.b32.xlu0 %v3297, 120
      %v3519 = vpop.permute.xlu0 %3518
      %v3521 = vadd.f32 %v3287, %v3519
      %v3524 = vrot.slane %v3313, 1
      %v3525 = vrot.slane %v3314, 1
      %v3526 = vsel %vm962, %v3524, %v3525
      %3527 = vrot.lane.b32.xlu0 %v3526, 32
      %v3528 = vpop.permute.xlu0 %3527
      %v3530 = vadd.f32 %v3307, %v3528
      %3533 = vrot.lane.b32.xlu0 %v3335, 120
      %v3534 = vpop.permute.xlu0 %3533
      %3535 = vrot.lane.b32.xlu0 %v3336, 120
      %v3536 = vpop.permute.xlu0 %3535
      %v3539 = vadd.f32 %v3324, %v3534
      %v3540 = vadd.f32 %v3325, %v3536
      %3543 = vrot.lane.b32.xlu0 %v3357, 120
      %v3544 = vpop.permute.xlu0 %3543
      %3545 = vrot.lane.b32.xlu0 %v3358, 120
      %v3546 = vpop.permute.xlu0 %3545
      %v3549 = vadd.f32 %v3346, %v3544
      %v3550 = vadd.f32 %v3347, %v3546
      %3553 = vrot.lane.b32.xlu0 %v3375, 120
      %v3554 = vpop.permute.xlu0 %3553
      %3555 = vrot.lane.b32.xlu0 %v3376, 120
      %v3556 = vpop.permute.xlu0 %3555
      %v3559 = vadd.f32 %v3364, %v3554
      %v3560 = vadd.f32 %v3365, %v3556
      %3563 = vrot.lane.b32.xlu0 %v3397, 120
      %v3564 = vpop.permute.xlu0 %3563
      %3565 = vrot.lane.b32.xlu0 %v3398, 120
      %v3566 = vpop.permute.xlu0 %3565
      %v3569 = vadd.f32 %v3386, %v3564
      %v3570 = vadd.f32 %v3387, %v3566
      %v3573 = vrot.slane %v3415, 1
      %v3574 = vrot.slane %v3416, 1
      %v3575 = vsel %vm962, %v3573, %v3574
      %3576 = vrot.lane.b32.xlu0 %v3575, 32
      %v3577 = vpop.permute.xlu0 %3576
      %3578 = vrot.lane.b32.xlu0 %v3574, 32
      %v3579 = vpop.permute.xlu0 %3578
      %v3582 = vadd.f32 %v3408, %v3577
      %v3583 = vadd.f32 %v3409, %v3579
      %3586 = vrot.lane.b32.xlu0 %v3437, 120
      %v3587 = vpop.permute.xlu0 %3586
      %3588 = vrot.lane.b32.xlu0 %v3438, 120
      %v3589 = vpop.permute.xlu0 %3588
      %v3592 = vadd.f32 %v3426, %v3587
      %v3593 = vadd.f32 %v3427, %v3589
      %3596 = vrot.lane.b32.xlu0 %v3459, 120
      %v3597 = vpop.permute.xlu0 %3596
      %3598 = vrot.lane.b32.xlu0 %v3460, 120
      %v3599 = vpop.permute.xlu0 %3598
      %v3602 = vadd.f32 %v3448, %v3597
      %v3603 = vadd.f32 %v3449, %v3599
      %3606 = vrot.lane.b32.xlu0 %v3477, 120
      %v3607 = vpop.permute.xlu0 %3606
      %3608 = vrot.lane.b32.xlu0 %v3478, 120
      %v3609 = vpop.permute.xlu0 %3608
      %v3612 = vadd.f32 %v3466, %v3607
      %v3613 = vadd.f32 %v3467, %v3609
      %3616 = vrot.lane.b32.xlu0 %v3499, 120
      %v3617 = vpop.permute.xlu0 %3616
      %3618 = vrot.lane.b32.xlu0 %v3500, 120
      %v3619 = vpop.permute.xlu0 %3618
      %v3622 = vadd.f32 %v3488, %v3617
      %v3623 = vadd.f32 %v3489, %v3619
      %3625 = vrot.lane.b32.xlu0 %v3521, 112
      %v3626 = vpop.permute.xlu0 %3625
      %v3628 = vadd.f32 %v3516, %v3626
      %v3631 = vrot.slane %v3539, 1
      %v3632 = vrot.slane %v3540, 1
      %v3633 = vsel %vm962, %v3631, %v3632
      %3634 = vrot.lane.b32.xlu0 %v3633, 24
      %v3635 = vpop.permute.xlu0 %3634
      %v3637 = vadd.f32 %v3530, %v3635
      %v3640 = vrot.slane %v3559, 1
      %v3641 = vrot.slane %v3560, 1
      %v3642 = vsel %vm962, %v3640, %v3641
      %3643 = vrot.lane.b32.xlu0 %v3642, 24
      %v3644 = vpop.permute.xlu0 %3643
      %3645 = vrot.lane.b32.xlu0 %v3641, 24
      %v3646 = vpop.permute.xlu0 %3645
      %v3649 = vadd.f32 %v3549, %v3644
      %v3650 = vadd.f32 %v3550, %v3646
      %3653 = vrot.lane.b32.xlu0 %v3582, 112
      %v3654 = vpop.permute.xlu0 %3653
      %3655 = vrot.lane.b32.xlu0 %v3583, 112
      %v3656 = vpop.permute.xlu0 %3655
      %v3659 = vadd.f32 %v3569, %v3654
      %v3660 = vadd.f32 %v3570, %v3656
      %3663 = vrot.lane.b32.xlu0 %v3602, 112
      %v3664 = vpop.permute.xlu0 %3663
      %3665 = vrot.lane.b32.xlu0 %v3603, 112
      %v3666 = vpop.permute.xlu0 %3665
      %v3669 = vadd.f32 %v3592, %v3664
      %v3670 = vadd.f32 %v3593, %v3666
      %3673 = vrot.lane.b32.xlu0 %v3622, 112
      %v3674 = vpop.permute.xlu0 %3673
      %3675 = vrot.lane.b32.xlu0 %v3623, 112
      %v3676 = vpop.permute.xlu0 %3675
      %v3679 = vadd.f32 %v3612, %v3674
      %v3680 = vadd.f32 %v3613, %v3676
      %3682 = vrot.lane.b32.xlu0 %v3637, 96
      %v3683 = vpop.permute.xlu0 %3682
      %v3685 = vadd.f32 %v3628, %v3683
      %v3688 = vrot.slane %v3659, 1
      %v3689 = vrot.slane %v3660, 1
      %v3690 = vsel %vm962, %v3688, %v3689
      %3691 = vrot.lane.b32.xlu0 %v3690, 8
      %v3692 = vpop.permute.xlu0 %3691
      %3693 = vrot.lane.b32.xlu0 %v3689, 8
      %v3694 = vpop.permute.xlu0 %3693
      %v3697 = vadd.f32 %v3649, %v3692
      %v3698 = vadd.f32 %v3650, %v3694
      %v3701 = vrot.slane %v3679, 1
      %v3702 = vrot.slane %v3680, 1
      %v3703 = vsel %vm962, %v3701, %v3702
      %3704 = vrot.lane.b32.xlu0 %v3703, 8
      %v3705 = vpop.permute.xlu0 %3704
      %3706 = vrot.lane.b32.xlu0 %v3702, 8
      %v3707 = vpop.permute.xlu0 %3706
      %v3710 = vadd.f32 %v3669, %v3705
      %v3711 = vadd.f32 %v3670, %v3707
      %v3714 = vrot.slane %v3697, 1
      %v3715 = vrot.slane %v3698, 1
      %v3716 = vsel %vm962, %v3714, %v3715
      %3717 = vrot.lane.b32.xlu0 %v3716, 104
      %v3718 = vpop.permute.xlu0 %3717
      %v3720 = vadd.f32 %v3685, %v3718
      %v3723 = vrot.slane %v3510, 1
      %v3724 = vrot.slane %v3511, 1
      %v3725 = vsel %vm962, %v3723, %v3724
      %3726 = vrot.lane.b32.xlu0 %v3725, 104
      %v3727 = vpop.permute.xlu0 %3726
      %3728 = vrot.lane.b32.xlu0 %v3724, 104
      %v3729 = vpop.permute.xlu0 %3728
      %v3732 = vadd.f32 %v3710, %v3727
      %v3733 = vadd.f32 %v3711, %v3729
      %v3736 = vrot.slane %v3732, 3
      %v3737 = vrot.slane %v3733, 3
      %v3738 = vsel %vm1175, %v3736, %v3737
      %3739 = vrot.lane.b32.xlu0 %v3738, 120
      %v3740 = vpop.permute.xlu0 %3739
      %v3742 = vadd.f32 %v3720, %v3740
      %3743 = vrot.lane.b32.xlu0 %v2593, 72
      %v3744 = vpop.permute.xlu0 %3743
      %v3746 = vsel %vm1186, 0.0, %v3744
      %v3747 = vsel %vm1188, %v3746, 0.0
      %v3749 = vrot.slane %v3747, 7
      %v3751 = vsel %vm1193, 0.0, %v3749
      %v3752 = vsel %vm1193, %v3749, 0.0
      %v3753 = vld [vmem:[%s16] sm:$0x1]
      %v3754 = vlaneseq
      %v3755 = vshrl.u32 %v3754, 7
      %v3756 = vsub.s32 0, %v3755
      %v3757 = vrot.slane %v3753, %v3756
      %v3758 = vmul.f32 %v3751, %v3757
      %v3759 = vld [vmem:[%s16 + $0x1] sm:$0x1]
      %v3760 = vlaneseq
      %v3761 = vshrl.u32 %v3760, 7
      %v3762 = vsub.s32 0, %v3761
      %v3763 = vrot.slane %v3759, %v3762
      %3765 = vrot.lane.b32.xlu0 %v3763, 8
      %v3766 = vpop.permute.xlu0 %3765
      %v3768 = vmul.f32 %v3751, %v3766
      %v3769 = vld [vmem:[%s16 + $0x2] sm:$0x1]
      %v3770 = vlaneseq
      %v3771 = vshrl.u32 %v3770, 7
      %v3772 = vsub.s32 0, %v3771
      %v3773 = vrot.slane %v3769, %v3772
      %3775 = vrot.lane.b32.xlu0 %v3773, 16
      %v3776 = vpop.permute.xlu0 %3775
      %v3778 = vmul.f32 %v3751, %v3776
      %v3779 = vld [vmem:[%s16 + $0x3] sm:$0x1]
      %v3780 = vlaneseq
      %v3781 = vshrl.u32 %v3780, 7
      %v3782 = vsub.s32 0, %v3781
      %v3783 = vrot.slane %v3779, %v3782
      %v3784 = vmul.f32 %v3751, %v3783
      %v3785 = vmul.f32 %v3752, %v3783
      %v3786 = vld [vmem:[%s16 + $0x4] sm:$0x1]
      %v3787 = vlaneseq
      %v3788 = vshrl.u32 %v3787, 7
      %v3789 = vsub.s32 0, %v3788
      %v3790 = vrot.slane %v3786, %v3789
      %3792 = vrot.lane.b32.xlu0 %v3790, 8
      %v3793 = vpop.permute.xlu0 %3792
      %v3795 = vmul.f32 %v3751, %v3793
      %v3796 = vmul.f32 %v3752, %v3793
      %v3797 = vld [vmem:[%s16 + $0x5] sm:$0x1]
      %v3798 = vlaneseq
      %v3799 = vshrl.u32 %v3798, 7
      %v3800 = vsub.s32 0, %v3799
      %v3801 = vrot.slane %v3797, %v3800
      %3803 = vrot.lane.b32.xlu0 %v3801, 16
      %v3804 = vpop.permute.xlu0 %3803
      %v3806 = vmul.f32 %v3751, %v3804
      %v3807 = vmul.f32 %v3752, %v3804
      %v3808 = vld [vmem:[%s16 + $0x6] sm:$0x1]
      %v3809 = vlaneseq
      %v3810 = vshrl.u32 %v3809, 7
      %v3811 = vsub.s32 0, %v3810
      %v3812 = vrot.slane %v3808, %v3811
      %v3813 = vmul.f32 %v3751, %v3812
      %v3814 = vmul.f32 %v3752, %v3812
      %v3815 = vld [vmem:[%s16 + $0x7] sm:$0x1]
      %v3816 = vlaneseq
      %v3817 = vshrl.u32 %v3816, 7
      %v3818 = vsub.s32 0, %v3817
      %v3819 = vrot.slane %v3815, %v3818
      %3821 = vrot.lane.b32.xlu0 %v3819, 8
      %v3822 = vpop.permute.xlu0 %3821
      %v3824 = vmul.f32 %v3751, %v3822
      %v3825 = vmul.f32 %v3752, %v3822
      %v3826 = vld [vmem:[%s16 + $0x8] sm:$0x1]
      %v3827 = vlaneseq
      %v3828 = vshrl.u32 %v3827, 7
      %v3829 = vsub.s32 0, %v3828
      %v3830 = vrot.slane %v3826, %v3829
      %3832 = vrot.lane.b32.xlu0 %v3830, 16
      %v3833 = vpop.permute.xlu0 %3832
      %v3835 = vmul.f32 %v3751, %v3833
      %v3836 = vmul.f32 %v3752, %v3833
      %3838 = vrot.lane.b32.xlu0 %v3768, 120
      %v3839 = vpop.permute.xlu0 %3838
      %v3841 = vadd.f32 %v3758, %v3839
      %v3844 = vrot.slane %v3784, 1
      %v3845 = vrot.slane %v3785, 1
      %v3846 = vsel %vm962, %v3844, %v3845
      %3847 = vrot.lane.b32.xlu0 %v3846, 16
      %v3848 = vpop.permute.xlu0 %3847
      %v3850 = vadd.f32 %v3778, %v3848
      %3853 = vrot.lane.b32.xlu0 %v3806, 120
      %v3854 = vpop.permute.xlu0 %3853
      %3855 = vrot.lane.b32.xlu0 %v3807, 120
      %v3856 = vpop.permute.xlu0 %3855
      %v3859 = vadd.f32 %v3795, %v3854
      %v3860 = vadd.f32 %v3796, %v3856
      %3863 = vrot.lane.b32.xlu0 %v3824, 120
      %v3864 = vpop.permute.xlu0 %3863
      %3865 = vrot.lane.b32.xlu0 %v3825, 120
      %v3866 = vpop.permute.xlu0 %3865
      %v3869 = vadd.f32 %v3813, %v3864
      %v3870 = vadd.f32 %v3814, %v3866
      %3872 = vrot.lane.b32.xlu0 %v3850, 112
      %v3873 = vpop.permute.xlu0 %3872
      %v3875 = vadd.f32 %v3841, %v3873
      %v3878 = vrot.slane %v3869, 1
      %v3879 = vrot.slane %v3870, 1
      %v3880 = vsel %vm962, %v3878, %v3879
      %3881 = vrot.lane.b32.xlu0 %v3880, 8
      %v3882 = vpop.permute.xlu0 %3881
      %3883 = vrot.lane.b32.xlu0 %v3879, 8
      %v3884 = vpop.permute.xlu0 %3883
      %v3887 = vadd.f32 %v3859, %v3882
      %v3888 = vadd.f32 %v3860, %v3884
      %v3891 = vrot.slane %v3887, 1
      %v3892 = vrot.slane %v3888, 1
      %v3893 = vsel %vm962, %v3891, %v3892
      %3894 = vrot.lane.b32.xlu0 %v3893, 120
      %v3895 = vpop.permute.xlu0 %3894
      %v3897 = vadd.f32 %v3875, %v3895
      %v3900 = vrot.slane %v3835, 2
      %v3901 = vrot.slane %v3836, 2
      %v3902 = vsel %vm1343, %v3900, %v3901
      %3903 = vrot.lane.b32.xlu0 %v3902, 112
      %v3904 = vpop.permute.xlu0 %3903
      %v3906 = vadd.f32 %v3897, %v3904
      %3908 = vrot.lane.b32.xlu0 %v2594, 8
      %v3909 = vpop.permute.xlu0 %3908
      %v3911 = vsel %vm1186, 0.0, %v3909
      %v3912 = vsel %vm1188, %v3911, 0.0
      %v3914 = vrot.slane %v3912, 7
      %v3916 = vsel %vm1193, 0.0, %v3914
      %v3917 = vsel %vm1193, %v3914, 0.0
      %v3918 = vld [vmem:[%s17] sm:$0x1]
      %v3919 = vlaneseq
      %v3920 = vshrl.u32 %v3919, 7
      %v3921 = vsub.s32 0, %v3920
      %v3922 = vrot.slane %v3918, %v3921
      %v3923 = vmul.f32 %v3916, %v3922
      %v3924 = vld [vmem:[%s17 + $0x1] sm:$0x1]
      %v3925 = vlaneseq
      %v3926 = vshrl.u32 %v3925, 7
      %v3927 = vsub.s32 0, %v3926
      %v3928 = vrot.slane %v3924, %v3927
      %3930 = vrot.lane.b32.xlu0 %v3928, 8
      %v3931 = vpop.permute.xlu0 %3930
      %v3933 = vmul.f32 %v3916, %v3931
      %v3934 = vld [vmem:[%s17 + $0x2] sm:$0x1]
      %v3935 = vlaneseq
      %v3936 = vshrl.u32 %v3935, 7
      %v3937 = vsub.s32 0, %v3936
      %v3938 = vrot.slane %v3934, %v3937
      %3940 = vrot.lane.b32.xlu0 %v3938, 16
      %v3941 = vpop.permute.xlu0 %3940
      %v3943 = vmul.f32 %v3916, %v3941
      %v3944 = vld [vmem:[%s17 + $0x3] sm:$0x1]
      %v3945 = vlaneseq
      %v3946 = vshrl.u32 %v3945, 7
      %v3947 = vsub.s32 0, %v3946
      %v3948 = vrot.slane %v3944, %v3947
      %v3949 = vmul.f32 %v3916, %v3948
      %v3950 = vmul.f32 %v3917, %v3948
      %v3951 = vld [vmem:[%s17 + $0x4] sm:$0x1]
      %v3952 = vlaneseq
      %v3953 = vshrl.u32 %v3952, 7
      %v3954 = vsub.s32 0, %v3953
      %v3955 = vrot.slane %v3951, %v3954
      %3957 = vrot.lane.b32.xlu0 %v3955, 8
      %v3958 = vpop.permute.xlu0 %3957
      %v3960 = vmul.f32 %v3916, %v3958
      %v3961 = vmul.f32 %v3917, %v3958
      %v3962 = vld [vmem:[%s17 + $0x5] sm:$0x1]
      %v3963 = vlaneseq
      %v3964 = vshrl.u32 %v3963, 7
      %v3965 = vsub.s32 0, %v3964
      %v3966 = vrot.slane %v3962, %v3965
      %3968 = vrot.lane.b32.xlu0 %v3966, 16
      %v3969 = vpop.permute.xlu0 %3968
      %v3971 = vmul.f32 %v3916, %v3969
      %v3972 = vmul.f32 %v3917, %v3969
      %v3973 = vld [vmem:[%s17 + $0x6] sm:$0x1]
      %v3974 = vlaneseq
      %v3975 = vshrl.u32 %v3974, 7
      %v3976 = vsub.s32 0, %v3975
      %v3977 = vrot.slane %v3973, %v3976
      %v3978 = vmul.f32 %v3916, %v3977
      %v3979 = vmul.f32 %v3917, %v3977
      %v3980 = vld [vmem:[%s17 + $0x7] sm:$0x1]
      %v3981 = vlaneseq
      %v3982 = vshrl.u32 %v3981, 7
      %v3983 = vsub.s32 0, %v3982
      %v3984 = vrot.slane %v3980, %v3983
      %3986 = vrot.lane.b32.xlu0 %v3984, 8
      %v3987 = vpop.permute.xlu0 %3986
      %v3989 = vmul.f32 %v3916, %v3987
      %v3990 = vmul.f32 %v3917, %v3987
      %v3991 = vld [vmem:[%s17 + $0x8] sm:$0x1]
      %v3992 = vlaneseq
      %v3993 = vshrl.u32 %v3992, 7
      %v3994 = vsub.s32 0, %v3993
      %v3995 = vrot.slane %v3991, %v3994
      %3997 = vrot.lane.b32.xlu0 %v3995, 16
      %v3998 = vpop.permute.xlu0 %3997
      %v4000 = vmul.f32 %v3916, %v3998
      %v4001 = vmul.f32 %v3917, %v3998
      %4003 = vrot.lane.b32.xlu0 %v3933, 120
      %v4004 = vpop.permute.xlu0 %4003
      %v4006 = vadd.f32 %v3923, %v4004
      %v4009 = vrot.slane %v3949, 1
      %v4010 = vrot.slane %v3950, 1
      %v4011 = vsel %vm962, %v4009, %v4010
      %4012 = vrot.lane.b32.xlu0 %v4011, 16
      %v4013 = vpop.permute.xlu0 %4012
      %v4015 = vadd.f32 %v3943, %v4013
      %4018 = vrot.lane.b32.xlu0 %v3971, 120
      %v4019 = vpop.permute.xlu0 %4018
      %4020 = vrot.lane.b32.xlu0 %v3972, 120
      %v4021 = vpop.permute.xlu0 %4020
      %v4024 = vadd.f32 %v3960, %v4019
      %v4025 = vadd.f32 %v3961, %v4021
      %4028 = vrot.lane.b32.xlu0 %v3989, 120
      %v4029 = vpop.permute.xlu0 %4028
      %4030 = vrot.lane.b32.xlu0 %v3990, 120
      %v4031 = vpop.permute.xlu0 %4030
      %v4034 = vadd.f32 %v3978, %v4029
      %v4035 = vadd.f32 %v3979, %v4031
      %4037 = vrot.lane.b32.xlu0 %v4015, 112
      %v4038 = vpop.permute.xlu0 %4037
      %v4040 = vadd.f32 %v4006, %v4038
      %v4043 = vrot.slane %v4034, 1
      %v4044 = vrot.slane %v4035, 1
      %v4045 = vsel %vm962, %v4043, %v4044
      %4046 = vrot.lane.b32.xlu0 %v4045, 8
      %v4047 = vpop.permute.xlu0 %4046
      %4048 = vrot.lane.b32.xlu0 %v4044, 8
      %v4049 = vpop.permute.xlu0 %4048
      %v4052 = vadd.f32 %v4024, %v4047
      %v4053 = vadd.f32 %v4025, %v4049
      %v4056 = vrot.slane %v4052, 1
      %v4057 = vrot.slane %v4053, 1
      %v4058 = vsel %vm962, %v4056, %v4057
      %4059 = vrot.lane.b32.xlu0 %v4058, 120
      %v4060 = vpop.permute.xlu0 %4059
      %v4062 = vadd.f32 %v4040, %v4060
      %v4065 = vrot.slane %v4000, 2
      %v4066 = vrot.slane %v4001, 2
      %v4067 = vsel %vm1343, %v4065, %v4066
      %4068 = vrot.lane.b32.xlu0 %v4067, 112
      %v4069 = vpop.permute.xlu0 %4068
      %v4071 = vadd.f32 %v4062, %v4069
      %4073 = vrot.lane.b32.xlu0 %v3250, 64
      %v4074 = vpop.permute.xlu0 %4073
      %4077 = vrot.lane.b32.xlu0 %v3906, 64
      %v4078 = vpop.permute.xlu0 %4077
      %v4080 = vsel %vm611, %v3086, %v4074
      %v4081 = vsel %vm611, %v3742, %v4078
      %v4082 = vld [vmem:[%s6] sm:$0xff]
      %v4083 = vld [vmem:[%s6 + $0x8] sm:$0xff]
      %v4084 = vld [vmem:[%s6 + $0x10] sm:$0xff]
      %v4085 = vld [vmem:[%s6 + $0x18] sm:$0xff]
      %v4086 = vld [vmem:[%s6 + $0x20] sm:$0xff]
      %v4087 = vld [vmem:[%s6 + $0x28] sm:$0xff]
      %v4088 = vld [vmem:[%s6 + $0x30] sm:$0xff]
      %v4089 = vld [vmem:[%s6 + $0x38] sm:$0xff]
      %v4090 = vld [vmem:[%s6 + $0x40] sm:$0xff]
      %v4091 = vld [vmem:[%s6 + $0x48] sm:$0xff]
      %v4092 = vld [vmem:[%s6 + $0x50] sm:$0xff]
      %v4093 = vld [vmem:[%s6 + $0x58] sm:$0xff]
      %v4094 = vld [vmem:[%s6 + $0x60] sm:$0xff]
      %v4095 = vld [vmem:[%s6 + $0x68] sm:$0xff]
      %v4096 = vld [vmem:[%s6 + $0x70] sm:$0xff]
      %v4097 = vld [vmem:[%s6 + $0x78] sm:$0xff]
      %v4098 = vld [vmem:[%s6 + $0x80] sm:$0xff]
      %v4099 = vld [vmem:[%s6 + $0x88] sm:$0xff]
      %v4100 = vld [vmem:[%s6 + $0x90] sm:$0xff]
      %v4101 = vld [vmem:[%s6 + $0x98] sm:$0xff]
      %v4102 = vld [vmem:[%s6 + $0xa0] sm:$0xff]
      %v4103 = vld [vmem:[%s6 + $0xa8] sm:$0xff]
      %v4104 = vld [vmem:[%s6 + $0xb0] sm:$0xff]
      %v4105 = vld [vmem:[%s6 + $0xb8] sm:$0xff]
      %v4106 = vld [vmem:[%s6 + $0xc0] sm:$0xff]
      %v4107 = vld [vmem:[%s6 + $0xc8] sm:$0xff]
      %v4108 = vld [vmem:[%s6 + $0xd0] sm:$0xff]
      %v4109 = vld [vmem:[%s6 + $0xd8] sm:$0xff]
      %v4110 = vld [vmem:[%s6 + $0xe0] sm:$0xff]
      %v4111 = vld [vmem:[%s6 + $0xe8] sm:$0xff]
      %v4112 = vld [vmem:[%s6 + $0xf0] sm:$0xff]
      %v4113 = vld [vmem:[%s6 + $0xf8] sm:$0xff]
      %v4114 = vld [vmem:[%s6 + $0x100] sm:$0xff]
      %v4115 = vld [vmem:[%s6 + $0x108] sm:$0xff]
      %v4116 = vld [vmem:[%s6 + $0x110] sm:$0xff]
      %v4117 = vld [vmem:[%s6 + $0x118] sm:$0xff]
      %v4118 = vld [vmem:[%s6 + $0x120] sm:$0xff]
      %v4119 = vld [vmem:[%s6 + $0x128] sm:$0xff]
      %v4120 = vld [vmem:[%s6 + $0x130] sm:$0xff]
      %v4121 = vld [vmem:[%s6 + $0x138] sm:$0xff]
      %v4122 = vld [vmem:[%s6 + $0x140] sm:$0xff]
      %v4123 = vld [vmem:[%s6 + $0x148] sm:$0xff]
      %v4124 = vld [vmem:[%s6 + $0x150] sm:$0xff]
      %v4125 = vld [vmem:[%s6 + $0x158] sm:$0xff]
      %v4126 = vld [vmem:[%s6 + $0x160] sm:$0xff]
      %v4127 = vld [vmem:[%s6 + $0x168] sm:$0xff]
      %v4128 = vld [vmem:[%s6 + $0x170] sm:$0xff]
      %v4129 = vld [vmem:[%s6 + $0x178] sm:$0xff]
      %v4130 = vld [vmem:[%s6 + $0x180] sm:$0xff]
      %v4131 = vld [vmem:[%s6 + $0x188] sm:$0xff]
      %v4132 = vld [vmem:[%s6 + $0x190] sm:$0xff]
      %v4133 = vld [vmem:[%s6 + $0x198] sm:$0xff]
      %v4134 = vld [vmem:[%s6 + $0x1a0] sm:$0xff]
      %v4135 = vld [vmem:[%s6 + $0x1a8] sm:$0xff]
      %v4136 = vld [vmem:[%s6 + $0x1b0] sm:$0xff]
      %v4137 = vld [vmem:[%s6 + $0x1b8] sm:$0xff]
      %v4138 = vld [vmem:[%s6 + $0x1c0] sm:$0xff]
      %v4139 = vld [vmem:[%s6 + $0x1c8] sm:$0xff]
      %v4140 = vld [vmem:[%s6 + $0x1d0] sm:$0xff]
      %v4141 = vld [vmem:[%s6 + $0x1d8] sm:$0xff]
      %v4142 = vld [vmem:[%s6 + $0x1e0] sm:$0xff]
      %v4143 = vld [vmem:[%s6 + $0x1e8] sm:$0xff]
      %v4144 = vld [vmem:[%s6 + $0x1f0] sm:$0xff]
      %v4145 = vld [vmem:[%s6 + $0x1f8] sm:$0xff]
      %v4146 = vld [vmem:[%s6 + $0x200] sm:$0xff]
      %v4147 = vld [vmem:[%s6 + $0x208] sm:$0xff]
      %v4148 = vld [vmem:[%s6 + $0x210] sm:$0xff]
      %v4149 = vld [vmem:[%s6 + $0x218] sm:$0xff]
      %v4150 = vld [vmem:[%s6 + $0x220] sm:$0xff]
      %v4151 = vld [vmem:[%s6 + $0x228] sm:$0xff]
      %v4152 = vld [vmem:[%s6 + $0x230] sm:$0xff]
      %v4153 = vld [vmem:[%s6 + $0x238] sm:$0xff]
      %v4154 = vld [vmem:[%s6 + $0x240] sm:$0xff]
      %v4155 = vld [vmem:[%s6 + $0x248] sm:$0xff]
      %v4156 = vld [vmem:[%s6 + $0x250] sm:$0xff]
      %v4157 = vld [vmem:[%s6 + $0x258] sm:$0xff]
      %v4158 = vld [vmem:[%s6 + $0x260] sm:$0xff]
      %v4159 = vld [vmem:[%s6 + $0x268] sm:$0xff]
      %v4160 = vld [vmem:[%s6 + $0x270] sm:$0xff]
      %v4161 = vld [vmem:[%s6 + $0x278] sm:$0xff]
      %v4162 = vld [vmem:[%s6 + $0x280] sm:$0xff]
      %v4163 = vld [vmem:[%s6 + $0x288] sm:$0xff]
      %v4164 = vld [vmem:[%s6 + $0x290] sm:$0xff]
      %v4165 = vld [vmem:[%s6 + $0x298] sm:$0xff]
      %v4166 = vld [vmem:[%s6 + $0x2a0] sm:$0xff]
      %v4167 = vld [vmem:[%s6 + $0x2a8] sm:$0xff]
      %v4168 = vld [vmem:[%s6 + $0x2b0] sm:$0xff]
      %v4169 = vld [vmem:[%s6 + $0x2b8] sm:$0xff]
      %v4170 = vld [vmem:[%s6 + $0x2c0] sm:$0xff]
      %v4171 = vld [vmem:[%s6 + $0x2c8] sm:$0xff]
      %v4172 = vld [vmem:[%s6 + $0x2d0] sm:$0xff]
      %v4173 = vld [vmem:[%s6 + $0x2d8] sm:$0xff]
      %v4174 = vld [vmem:[%s6 + $0x2e0] sm:$0xff]
      %v4175 = vld [vmem:[%s6 + $0x2e8] sm:$0xff]
      %v4176 = vld [vmem:[%s6 + $0x2f0] sm:$0xff]
      %v4177 = vld [vmem:[%s6 + $0x2f8] sm:$0xff]
      %v4178 = vld [vmem:[%s6 + $0x300] sm:$0xff]
      %v4179 = vld [vmem:[%s6 + $0x308] sm:$0xff]
      %v4180 = vld [vmem:[%s6 + $0x310] sm:$0xff]
      %v4181 = vld [vmem:[%s6 + $0x318] sm:$0xff]
      %v4182 = vld [vmem:[%s6 + $0x320] sm:$0xff]
      %v4183 = vld [vmem:[%s6 + $0x328] sm:$0xff]
      %v4184 = vld [vmem:[%s6 + $0x330] sm:$0xff]
      %v4185 = vld [vmem:[%s6 + $0x338] sm:$0xff]
      %v4186 = vld [vmem:[%s6 + $0x340] sm:$0xff]
      %v4187 = vld [vmem:[%s6 + $0x348] sm:$0xff]
      %v4188 = vld [vmem:[%s6 + $0x350] sm:$0xff]
      %v4189 = vld [vmem:[%s6 + $0x358] sm:$0xff]
      %v4190 = vld [vmem:[%s6 + $0x360] sm:$0xff]
      %v4191 = vld [vmem:[%s6 + $0x368] sm:$0xff]
      %v4192 = vld [vmem:[%s6 + $0x370] sm:$0xff]
      %v4193 = vld [vmem:[%s6 + $0x378] sm:$0xff]
      %v4194 = vld [vmem:[%s6 + $0x380] sm:$0xff]
      %v4195 = vld [vmem:[%s6 + $0x388] sm:$0xff]
      %v4196 = vld [vmem:[%s6 + $0x390] sm:$0xff]
      %v4197 = vld [vmem:[%s6 + $0x398] sm:$0xff]
      %v4198 = vld [vmem:[%s6 + $0x3a0] sm:$0xff]
      %v4199 = vld [vmem:[%s6 + $0x3a8] sm:$0xff]
      %v4200 = vld [vmem:[%s6 + $0x3b0] sm:$0xff]
      %v4201 = vld [vmem:[%s6 + $0x3b8] sm:$0xff]
      %v4202 = vld [vmem:[%s7] sm:$0x7]
      %v4204 = vlaneseq
      %v4205 = vshrl.u32 %v4204, 7
      %v4206 = vsub.s32 0, %v4205
      %v4207 = vrot.slane %v4202, %v4206
      %v4208 = vlaneseq
      %v4209 = vshrl.u32 %v4208, 7
      %v4210 = vsub.s32 1, %v4209
      %v4211 = vrot.slane %v4202, %v4210
      %v4212 = vlaneseq
      %v4213 = vshrl.u32 %v4212, 7
      %v4214 = vsub.s32 2, %v4213
      %v4215 = vrot.slane %v4202, %v4214
      %v4220 = vsel %vm611, %v4071, 0
      %4222 = vmatprep.subr.mxu0 %v4083
      %4223 = vmatpush1.msra.mxu0 %v4082
      %4224 = vmatprep.subr.mxu0 %v4086
      %4225 = vmatpush1.msra.mxu0 %v4085
      %4226 = vmatprep.subr.mxu0 %v4089
      %4227 = vmatpush1.msra.mxu0 %v4088
      %4228 = vmatprep.subr.mxu0 %v4092
      %4229 = vmatpush1.msra.mxu0 %v4091
      %4230 = vmatprep.subr.mxu0 %v4095
      %4231 = vmatpush1.msra.mxu0 %v4094
      %4232 = vmatprep.subr.mxu0 %v4098
      %4233 = vmatpush1.msra.mxu0 %v4097
      %4234 = vmatprep.subr.mxu0 %v4101
      %4235 = vmatpush1.msra.mxu0 %v4100
      %4236 = vmatprep.subr.mxu0 %v4104
      %4237 = vmatpush1.msra.mxu0 %v4103
      %4238 = vmatprep.subr.mxu0 %v4107
      %4239 = vmatpush1.msra.mxu0 %v4106
      %4240 = vmatprep.subr.mxu0 %v4110
      %4241 = vmatpush1.msra.mxu0 %v4109
      %4242 = vmatprep.subr.mxu0 %v4113
      %4243 = vmatpush1.msra.mxu0 %v4112
      %4244 = vmatprep.subr.mxu0 %v4116
      %4245 = vmatpush1.msra.mxu0 %v4115
      %4246 = vmatprep.subr.mxu0 %v4119
      %4247 = vmatpush1.msra.mxu0 %v4118
      %4248 = vmatprep.subr.mxu0 %v4122
      %4249 = vmatpush1.msra.mxu0 %v4121
      %4250 = vmatprep.subr.mxu0 %v4125
      %4251 = vmatpush1.msra.mxu0 %v4124
      %4252 = vmatprep.subr.mxu0 %v4128
      %4253 = vmatpush1.msra.mxu0 %v4127
      %4254 = vmatprep.subr.mxu0 %v4131
      %4255 = vmatpush1.msra.mxu0 %v4130
      %4256 = vmatprep.subr.mxu0 %v4134
      %4257 = vmatpush1.msra.mxu0 %v4133
      %4258 = vmatprep.subr.mxu0 %v4137
      %4259 = vmatpush1.msra.mxu0 %v4136
      %4260 = vmatprep.subr.mxu0 %v4140
      %4261 = vmatpush1.msra.mxu0 %v4139
      %4262 = vmatprep.subr.mxu0 %v4143
      %4263 = vmatpush1.msra.mxu0 %v4142
      %4264 = vmatprep.subr.mxu0 %v4146
      %4265 = vmatpush1.msra.mxu0 %v4145
      %4266 = vmatprep.subr.mxu0 %v4149
      %4267 = vmatpush1.msra.mxu0 %v4148
      %4268 = vmatprep.subr.mxu0 %v4152
      %4269 = vmatpush1.msra.mxu0 %v4151
      %4270 = vmatprep.subr.mxu0 %v4155
      %4271 = vmatpush1.msra.mxu0 %v4154
      %4272 = vmatprep.subr.mxu0 %v4158
      %4273 = vmatpush1.msra.mxu0 %v4157
      %4274 = vmatprep.subr.mxu0 %v4161
      %4275 = vmatpush1.msra.mxu0 %v4160
      %4276 = vmatprep.subr.mxu0 %v4164
      %4277 = vmatpush1.msra.mxu0 %v4163
      %4278 = vmatprep.subr.mxu0 %v4167
      %4279 = vmatpush1.msra.mxu0 %v4166
      %4280 = vmatprep.subr.mxu0 %v4170
      %4281 = vmatpush1.msra.mxu0 %v4169
      %4282 = vmatprep.subr.mxu0 %v4173
      %4283 = vmatpush1.msra.mxu0 %v4172
      %4284 = vmatprep.subr.mxu0 %v4176
      %4285 = vmatpush1.msra.mxu0 %v4175
      %4286 = vmatprep.mubr.f32.mxu0 %v4081
      %4287 = vmatmul.mubr.f32.gmra.mrb[0].mxu0 %v4080
      %v4288 = vpop.f32.mrb[0].mxu0
      %v4289 = vadd.f32 %v4207, %v4288
      %v4290 = vpop.f32.mrb[0].mxu0
      %v4291 = vadd.f32 %v4211, %v4290
      %4292 = vdwg.mxu0
      %4293 = vmatprep.subr.mxu0 %v4179
      %4294 = vmatpush1.msra.mxu0 %v4178
      %4295 = vmatprep.subr.mxu0 %v4182
      %4296 = vmatpush1.msra.mxu0 %v4181
      %4297 = vmatprep.subr.mxu0 %v4185
      %4298 = vmatpush1.msra.mxu0 %v4184
      %4299 = vmatprep.subr.mxu0 %v4188
      %4300 = vmatpush1.msra.mxu0 %v4187
      %4301 = vmatprep.subr.mxu0 %v4191
      %4302 = vmatpush1.msra.mxu0 %v4190
      %4303 = vmatprep.subr.mxu0 %v4194
      %4304 = vmatpush1.msra.mxu0 %v4193
      %4305 = vmatprep.subr.mxu0 %v4197
      %4306 = vmatpush1.msra.mxu0 %v4196
      %4307 = vmatprep.subr.mxu0 %v4200
      %4308 = vmatpush1.msra.mxu0 %v4199
      %4309 = vmatprep.subr.mxu0 0.0
      %4310 = vmatpush1.msra.mxu0 0.0
      %4311 = vmatprep.subr.mxu0 0.0
      %4312 = vmatpush1.msra.mxu0 0.0
      %4313 = vmatprep.subr.mxu0 0.0
      %4314 = vmatpush1.msra.mxu0 0.0
      %4315 = vmatprep.subr.mxu0 0.0
      %4316 = vmatpush1.msra.mxu0 0.0
      %4317 = vmatprep.subr.mxu0 0.0
      %4318 = vmatpush1.msra.mxu0 0.0
      %4319 = vmatprep.subr.mxu0 0.0
      %4320 = vmatpush1.msra.mxu0 0.0
      %4321 = vmatprep.subr.mxu0 0.0
      %4322 = vmatpush1.msra.mxu0 0.0
      %4323 = vmatprep.subr.mxu0 0.0
      %4324 = vmatpush1.msra.mxu0 0.0
      %4325 = vmatprep.subr.mxu0 0.0
      %4326 = vmatpush1.msra.mxu0 0.0
      %4327 = vmatprep.subr.mxu0 0.0
      %4328 = vmatpush1.msra.mxu0 0.0
      %4329 = vmatprep.subr.mxu0 0.0
      %4330 = vmatpush1.msra.mxu0 0.0
      %4331 = vmatprep.subr.mxu0 0.0
      %4332 = vmatpush1.msra.mxu0 0.0
      %4333 = vmatprep.subr.mxu0 0.0
      %4334 = vmatpush1.msra.mxu0 0.0
      %4335 = vmatprep.subr.mxu0 0.0
      %4336 = vmatpush1.msra.mxu0 0.0
      %4337 = vmatprep.subr.mxu0 0.0
      %4338 = vmatpush1.msra.mxu0 0.0
      %4339 = vmatprep.subr.mxu0 0.0
      %4340 = vmatpush1.msra.mxu0 0.0
      %4341 = vmatprep.subr.mxu0 0.0
      %4342 = vmatpush1.msra.mxu0 0.0
      %4343 = vmatprep.subr.mxu0 0.0
      %4344 = vmatpush1.msra.mxu0 0.0
      %4345 = vmatprep.subr.mxu0 0.0
      %4346 = vmatpush1.msra.mxu0 0.0
      %4347 = vmatprep.subr.mxu0 0.0
      %4348 = vmatpush1.msra.mxu0 0.0
      %4349 = vmatprep.subr.mxu0 0.0
      %4350 = vmatpush1.msra.mxu0 0.0
      %4351 = vmatprep.subr.mxu0 0.0
      %4352 = vmatpush1.msra.mxu0 0.0
      %4353 = vmatprep.subr.mxu0 0.0
      %4354 = vmatpush1.msra.mxu0 0.0
      %4355 = vmatprep.subr.mxu0 0.0
      %4356 = vmatpush1.msra.mxu0 0.0
      %4357 = vmatprep.mubr.f32.mxu0 0.0
      %4358 = vmatmul.mubr.f32.gmra.mrb[0].mxu0 %v4220
      %v4359 = vpop.f32.mrb[0].mxu0
      %v4360 = vadd.f32 %v4289, %v4359
      %v4361 = vpop.f32.mrb[0].mxu0
      %v4362 = vadd.f32 %v4291, %v4361
      %4363 = vdwg.mxu0
      %4364 = vmatprep.subr.mxu0 0.0
      %4365 = vmatpush1.msra.mxu0 %v4084
      %4366 = vmatprep.subr.mxu0 0.0
      %4367 = vmatpush1.msra.mxu0 %v4087
      %4368 = vmatprep.subr.mxu0 0.0
      %4369 = vmatpush1.msra.mxu0 %v4090
      %4370 = vmatprep.subr.mxu0 0.0
      %4371 = vmatpush1.msra.mxu0 %v4093
      %4372 = vmatprep.subr.mxu0 0.0
      %4373 = vmatpush1.msra.mxu0 %v4096
      %4374 = vmatprep.subr.mxu0 0.0
      %4375 = vmatpush1.msra.mxu0 %v4099
      %4376 = vmatprep.subr.mxu0 0.0
      %4377 = vmatpush1.msra.mxu0 %v4102
      %4378 = vmatprep.subr.mxu0 0.0
      %4379 = vmatpush1.msra.mxu0 %v4105
      %4380 = vmatprep.subr.mxu0 0.0
      %4381 = vmatpush1.msra.mxu0 %v4108
      %4382 = vmatprep.subr.mxu0 0.0
      %4383 = vmatpush1.msra.mxu0 %v4111
      %4384 = vmatprep.subr.mxu0 0.0
      %4385 = vmatpush1.msra.mxu0 %v4114
      %4386 = vmatprep.subr.mxu0 0.0
      %4387 = vmatpush1.msra.mxu0 %v4117
      %4388 = vmatprep.subr.mxu0 0.0
      %4389 = vmatpush1.msra.mxu0 %v4120
      %4390 = vmatprep.subr.mxu0 0.0
      %4391 = vmatpush1.msra.mxu0 %v4123
      %4392 = vmatprep.subr.mxu0 0.0
      %4393 = vmatpush1.msra.mxu0 %v4126
      %4394 = vmatprep.subr.mxu0 0.0
      %4395 = vmatpush1.msra.mxu0 %v4129
      %4396 = vmatprep.subr.mxu0 0.0
      %4397 = vmatpush1.msra.mxu0 %v4132
      %4398 = vmatprep.subr.mxu0 0.0
      %4399 = vmatpush1.msra.mxu0 %v4135
      %4400 = vmatprep.subr.mxu0 0.0
      %4401 = vmatpush1.msra.mxu0 %v4138
      %4402 = vmatprep.subr.mxu0 0.0
      %4403 = vmatpush1.msra.mxu0 %v4141
      %4404 = vmatprep.subr.mxu0 0.0
      %4405 = vmatpush1.msra.mxu0 %v4144
      %4406 = vmatprep.subr.mxu0 0.0
      %4407 = vmatpush1.msra.mxu0 %v4147
      %4408 = vmatprep.subr.mxu0 0.0
      %4409 = vmatpush1.msra.mxu0 %v4150
      %4410 = vmatprep.subr.mxu0 0.0
      %4411 = vmatpush1.msra.mxu0 %v4153
      %4412 = vmatprep.subr.mxu0 0.0
      %4413 = vmatpush1.msra.mxu0 %v4156
      %4414 = vmatprep.subr.mxu0 0.0
      %4415 = vmatpush1.msra.mxu0 %v4159
      %4416 = vmatprep.subr.mxu0 0.0
      %4417 = vmatpush1.msra.mxu0 %v4162
      %4418 = vmatprep.subr.mxu0 0.0
      %4419 = vmatpush1.msra.mxu0 %v4165
      %4420 = vmatprep.subr.mxu0 0.0
      %4421 = vmatpush1.msra.mxu0 %v4168
      %4422 = vmatprep.subr.mxu0 0.0
      %4423 = vmatpush1.msra.mxu0 %v4171
      %4424 = vmatprep.subr.mxu0 0.0
      %4425 = vmatpush1.msra.mxu0 %v4174
      %4426 = vmatprep.subr.mxu0 0.0
      %4427 = vmatpush1.msra.mxu0 %v4177
      %4428 = vmatprep.mubr.f32.mxu0 %v4081
      %4429 = vmatmul.mubr.f32.gmra.mrb[0].mxu0 %v4080
      %v4430 = vpop.f32.mrb[0].mxu0
      %v4431 = vadd.f32 %v4215, %v4430
      %v4432 = vpop.f32.mrb[0].mxu0
      %4433 = vdwg.mxu0
      %4434 = vmatprep.subr.mxu0 0.0
      %4435 = vmatpush1.msra.mxu0 %v4180
      %4436 = vmatprep.subr.mxu0 0.0
      %4437 = vmatpush1.msra.mxu0 %v4183
      %4438 = vmatprep.subr.mxu0 0.0
      %4439 = vmatpush1.msra.mxu0 %v4186
      %4440 = vmatprep.subr.mxu0 0.0
      %4441 = vmatpush1.msra.mxu0 %v4189
      %4442 = vmatprep.subr.mxu0 0.0
      %4443 = vmatpush1.msra.mxu0 %v4192
      %4444 = vmatprep.subr.mxu0 0.0
      %4445 = vmatpush1.msra.mxu0 %v4195
      %4446 = vmatprep.subr.mxu0 0.0
      %4447 = vmatpush1.msra.mxu0 %v4198
      %4448 = vmatprep.subr.mxu0 0.0
      %4449 = vmatpush1.msra.mxu0 %v4201
      %4450 = vmatprep.subr.mxu0 0.0
      %4451 = vmatpush1.msra.mxu0 0.0
      %4452 = vmatprep.subr.mxu0 0.0
      %4453 = vmatpush1.msra.mxu0 0.0
      %4454 = vmatprep.subr.mxu0 0.0
      %4455 = vmatpush1.msra.mxu0 0.0
      %4456 = vmatprep.subr.mxu0 0.0
      %4457 = vmatpush1.msra.mxu0 0.0
      %4458 = vmatprep.subr.mxu0 0.0
      %4459 = vmatpush1.msra.mxu0 0.0
      %4460 = vmatprep.subr.mxu0 0.0
      %4461 = vmatpush1.msra.mxu0 0.0
      %4462 = vmatprep.subr.mxu0 0.0
      %4463 = vmatpush1.msra.mxu0 0.0
      %4464 = vmatprep.subr.mxu0 0.0
      %4465 = vmatpush1.msra.mxu0 0.0
      %4466 = vmatprep.subr.mxu0 0.0
      %4467 = vmatpush1.msra.mxu0 0.0
      %4468 = vmatprep.subr.mxu0 0.0
      %4469 = vmatpush1.msra.mxu0 0.0
      %4470 = vmatprep.subr.mxu0 0.0
      %4471 = vmatpush1.msra.mxu0 0.0
      %4472 = vmatprep.subr.mxu0 0.0
      %4473 = vmatpush1.msra.mxu0 0.0
      %4474 = vmatprep.subr.mxu0 0.0
      %4475 = vmatpush1.msra.mxu0 0.0
      %4476 = vmatprep.subr.mxu0 0.0
      %4477 = vmatpush1.msra.mxu0 0.0
      %4478 = vmatprep.subr.mxu0 0.0
      %4479 = vmatpush1.msra.mxu0 0.0
      %4480 = vmatprep.subr.mxu0 0.0
      %4481 = vmatpush1.msra.mxu0 0.0
      %4482 = vmatprep.subr.mxu0 0.0
      %4483 = vmatpush1.msra.mxu0 0.0
      %4484 = vmatprep.subr.mxu0 0.0
      %4485 = vmatpush1.msra.mxu0 0.0
      %4486 = vmatprep.subr.mxu0 0.0
      %4487 = vmatpush1.msra.mxu0 0.0
      %4488 = vmatprep.subr.mxu0 0.0
      %4489 = vmatpush1.msra.mxu0 0.0
      %4490 = vmatprep.subr.mxu0 0.0
      %4491 = vmatpush1.msra.mxu0 0.0
      %4492 = vmatprep.subr.mxu0 0.0
      %4493 = vmatpush1.msra.mxu0 0.0
      %4494 = vmatprep.subr.mxu0 0.0
      %4495 = vmatpush1.msra.mxu0 0.0
      %4496 = vmatprep.subr.mxu0 0.0
      %4497 = vmatpush1.msra.mxu0 0.0
      %4498 = vmatprep.mubr.f32.mxu0 0.0
      %4499 = vmatmul.mubr.f32.gmra.mrb[0].mxu0 %v4220
      %v4500 = vpop.f32.mrb[0].mxu0
      %v4501 = vadd.f32 %v4431, %v4500
      %v4502 = vpop.f32.mrb[0].mxu0
      %4503 = vdwg.mxu0
      %4505 = vrot.lane.b32.xlu0 %v682, 8
      %v4506 = vpop.permute.xlu0 %4505
      %v4508 = vsel %vm1186, 0.0, %v4506
      %v4509 = vsel %vm1188, %v4508, 0.0
      %v4511 = vrot.slane %v4509, 7
      %v4513 = vsel %vm1193, 0.0, %v4511
      %v4514 = vsel %vm1193, %v4511, 0.0
      %4516 = vrot.lane.b32.xlu0 %v4513, 120
      %v4517 = vpop.permute.xlu0 %4516
      %v4519 = vadd.f32 %v4513, %v4517
      %v4521 = vrot.slane %v4513, 1
      %v4522 = vrot.slane %v4514, 1
      %v4523 = vsel %vm962, %v4521, %v4522
      %4524 = vrot.lane.b32.xlu0 %v4523, 16
      %v4525 = vpop.permute.xlu0 %4524
      %v4527 = vadd.f32 %v4513, %v4525
      %4528 = vrot.lane.b32.xlu0 %v4514, 120
      %v4529 = vpop.permute.xlu0 %4528
      %v4531 = vadd.f32 %v4514, %v4529
      %4533 = vrot.lane.b32.xlu0 %v4527, 112
      %v4534 = vpop.permute.xlu0 %4533
      %v4536 = vadd.f32 %v4519, %v4534
      %v4539 = vrot.slane %v4519, 1
      %v4540 = vrot.slane %v4531, 1
      %v4541 = vsel %vm962, %v4539, %v4540
      %4542 = vrot.lane.b32.xlu0 %v4541, 8
      %v4543 = vpop.permute.xlu0 %4542
      %4544 = vrot.lane.b32.xlu0 %v4540, 8
      %v4545 = vpop.permute.xlu0 %4544
      %v4548 = vadd.f32 %v4519, %v4543
      %v4549 = vadd.f32 %v4531, %v4545
      %v4552 = vrot.slane %v4548, 1
      %v4553 = vrot.slane %v4549, 1
      %v4554 = vsel %vm962, %v4552, %v4553
      %4555 = vrot.lane.b32.xlu0 %v4554, 120
      %v4556 = vpop.permute.xlu0 %4555
      %v4558 = vadd.f32 %v4536, %v4556
      %v4559 = vrot.slane %v4513, 2
      %v4560 = vrot.slane %v4514, 2
      %v4561 = vsel %vm1343, %v4559, %v4560
      %4562 = vrot.lane.b32.xlu0 %v4561, 112
      %v4563 = vpop.permute.xlu0 %4562
      %v4565 = vadd.f32 %v4558, %v4563
      %v4566 = vld [vmem:[%s1] sm:$0xff]
      %v4567 = vmul.f32 %v4565, %v4566
      %4568 = vrot.lane.b32.xlu0 %v682, 72
      %v4569 = vpop.permute.xlu0 %4568
      %v4571 = vsel %vm1186, 0.0, %v4569
      %v4572 = vsel %vm1188, %v4571, 0.0
      %v4574 = vrot.slane %v4572, 7
      %v4576 = vsel %vm1193, 0.0, %v4574
      %v4577 = vsel %vm1193, %v4574, 0.0
      %4579 = vrot.lane.b32.xlu0 %v4576, 120
      %v4580 = vpop.permute.xlu0 %4579
      %v4582 = vadd.f32 %v4576, %v4580
      %v4584 = vrot.slane %v4576, 1
      %v4585 = vrot.slane %v4577, 1
      %v4586 = vsel %vm962, %v4584, %v4585
      %4587 = vrot.lane.b32.xlu0 %v4586, 16
      %v4588 = vpop.permute.xlu0 %4587
      %v4590 = vadd.f32 %v4576, %v4588
      %4591 = vrot.lane.b32.xlu0 %v4577, 120
      %v4592 = vpop.permute.xlu0 %4591
      %v4594 = vadd.f32 %v4577, %v4592
      %4596 = vrot.lane.b32.xlu0 %v4590, 112
      %v4597 = vpop.permute.xlu0 %4596
      %v4599 = vadd.f32 %v4582, %v4597
      %v4602 = vrot.slane %v4582, 1
      %v4603 = vrot.slane %v4594, 1
      %v4604 = vsel %vm962, %v4602, %v4603
      %4605 = vrot.lane.b32.xlu0 %v4604, 8
      %v4606 = vpop.permute.xlu0 %4605
      %4607 = vrot.lane.b32.xlu0 %v4603, 8
      %v4608 = vpop.permute.xlu0 %4607
      %v4611 = vadd.f32 %v4582, %v4606
      %v4612 = vadd.f32 %v4594, %v4608
      %v4615 = vrot.slane %v4611, 1
      %v4616 = vrot.slane %v4612, 1
      %v4617 = vsel %vm962, %v4615, %v4616
      %4618 = vrot.lane.b32.xlu0 %v4617, 120
      %v4619 = vpop.permute.xlu0 %4618
      %v4621 = vadd.f32 %v4599, %v4619
      %v4622 = vrot.slane %v4576, 2
      %v4623 = vrot.slane %v4577, 2
      %v4624 = vsel %vm1343, %v4622, %v4623
      %4625 = vrot.lane.b32.xlu0 %v4624, 112
      %v4626 = vpop.permute.xlu0 %4625
      %v4628 = vadd.f32 %v4621, %v4626
      %v4629 = vmul.f32 %v4628, %v4566
      %4631 = vrot.lane.b32.xlu0 %v4360, 64
      %v4632 = vpop.permute.xlu0 %4631
      %v4634 = vadd.f32 %v4360, %v4632
      %4636 = vrot.lane.b32.xlu0 %v4362, 64
      %v4637 = vpop.permute.xlu0 %4636
      %v4639 = vadd.f32 %v4362, %v4637
      %4640 = vrot.lane.b32.xlu0 %v682, 64
      %v4641 = vpop.permute.xlu0 %4640
      %v4643 = vadd.f32 %v4567, %v4641
      %v4644 = vmul.f32 %v4629, 2.0
      %v4645 = vadd.f32 %v4501, %v682
      %4647 = vrot.lane.b32.xlu0 %v4634, 64
      %v4648 = vpop.permute.xlu0 %4647
      %4651 = vrot.lane.b32.xlu0 %v4643, 64
      %v4652 = vpop.permute.xlu0 %4651
      %4655 = vrot.lane.b32.xlu0 %v4645, 64
      %v4656 = vpop.permute.xlu0 %4655
      %v4658 = vsel %vm611, %v4641, %v4648
      %v4659 = vsel %vm611, %v4639, %v4652
      %v4660 = vsel %vm611, %v4644, %v4656
      %4661 = vst [vmem:[%s575] sm:$0xff] %v4658
      %4662 = vst [vmem:[%s575 + $0x8] sm:$0xff] %v4659
      %4663 = vst [vmem:[%s575 + $0x10] sm:$0xff] %v4660
      %p4664 = scmp.lt.s32.totalorder %s29, 1
      %s4665 = scalar_select %p4664, %s29, 1
      %s4666 = smul.addr %s4665, 3
      %s4667 = smul.addr %s4666, 8
      %s4668 = scalar_lea.vmem %s18, %s4667
      // Predicated region
      $region93: #{first_cell_forward.1} parent=91 // pred_check
        %p4669 = pneg %p430
      $region94: #{first_cell_forward.1} parent=91 // pred_check_branch
        %4671 = sbr.rel (%p4669) target = $region96
      $region95: #{first_cell_forward.1} parent=91 // pred_region
        _
      $region96: #{first_cell_forward.1} parent=91 // pred_fallthru
        _
    $region92: #{first_cell_forward.1} parent=5 // pred_fallthru
      _
    %p4672 = scmp.le.s32.totalorder 2, %s24
    // Predicated region
    $region97: #{first_cell_forward.1} parent=5 // pred_check
      %p4673 = pneg %p4672
    $region98: #{first_cell_forward.1} parent=5 // pred_check_branch
      %4675 = sbr.rel (%p4673) target = $region100
    $region99: #{first_cell_forward.1} parent=5 // pred_region
      %s4676 = ssub.s32 %s24, 2
      // Predicated region
      $region101: #{first_cell_forward.1} parent=99 // pred_check
        %p4677 = pneg %p436
      $region102: #{first_cell_forward.1} parent=99 // pred_check_branch
        %4679 = sbr.rel (%p4677) target = $region104
      $region103: #{first_cell_forward.1} parent=99 // pred_region
        %p4680 = scmp.lt.s32.totalorder %s30, 1
        %s4681 = scalar_select %p4680, %s30, 1
        %s4682 = smul.addr %s4681, 3
        %s4683 = smul.addr %s4682, 8
        %s4684 = scalar_lea.vmem %s18, %s4683
      $region104: #{first_cell_forward.1} parent=99 // pred_fallthru
        _
    $region100: #{first_cell_forward.1} parent=5 // pred_fallthru
      _
  $region6: #{first_cell_forward.1} parent=0 // loop_footer
    %s28 = sadd.s32 1, %s24
  $region7: #{first_cell_forward.1} parent=0 // loop_footer_branch
    %23 = sbr.rel target = $region3
  $region8: #{first_cell_forward.1} parent=0 // loop_exit
    _

</llo_original>
